<compile_context>
chip_gen: v7x
topology: tpu7x:2x2x1
jax: 0.10.0
libtpu: 0.0.40
codegen_flags: <defaults>
</compile_context>

<pallas_src>
import functools

import jax
import jax.numpy as jnp
from jax import lax
from jax.experimental import pallas as pl
from jax.experimental.pallas import tpu as pltpu


# ----------------------------------------------------------------------------
# In-kernel helpers.
# ----------------------------------------------------------------------------
def _stage_padded_input(pad_ref, value, H, W, C):
    """Write `value` (H, W, C) f32 into pad_ref as a zero-padded (H+2, W+2) map.

    The whole region (including the channel tail [C:Cmax]) is zeroed first so
    the strided tap reads below can always use the full Cmax lane width.
    """
    cmax = pad_ref.shape[-1]
    pad_ref[0:H + 2, 0:W + 2, :] = jnp.zeros((H + 2, W + 2, cmax), jnp.float32)
    pad_ref[1:H + 1, 1:W + 1, 0:C] = value


def _conv3x3_s2_from_pad(pad_ref, H, W, w_ref, b_ref, compute_dtype):
    """3x3 / stride-2 / pad-1 conv whose zero-padded input is staged in pad_ref.

    pad_ref : f32 VMEM scratch (Hmax+2, Wmax+2, Cmax); region [0:H+2, 0:W+2, :]
              holds the padded level input (zeros in the unused channel tail).
    w_ref   : (3, 3*Cmax, Cout) weights, rows ordered (kw, ci), compute_dtype,
              zero rows for channels beyond the level's true input width.
    b_ref   : (1, Cout) f32 bias.
    Returns the pre-activation output as float32 of shape (Ho*Wo, Cout).
    """
    cmax = pad_ref.shape[-1]
    Ho, Wo = (H + 1) // 2, (W + 1) // 2
    M = Ho * Wo

    acc = None
    for kh in range(3):
        # The three taps of one kernel row: static stride-2 ref loads on both
        # spatial axes, lane-concatenated into one (M, 3*Cmax) chunk.
        taps = [
            pad_ref[pl.ds(kh, Ho, stride=2), pl.ds(kw, Wo, stride=2), :]
            .reshape(M, cmax)
            for kw in range(3)
        ]
        chunk = jnp.concatenate(taps, axis=-1).astype(compute_dtype)
        part = jnp.dot(chunk, w_ref[kh], preferred_element_type=jnp.float32)
        acc = part if acc is None else acc + part
    return acc + b_ref[...].astype(jnp.float32)      # bias-add stays in f32


# ----------------------------------------------------------------------------
# The fused kernel: P6 -> P7 -> P8 -> P9 for one batch element per grid step.
# ----------------------------------------------------------------------------
def _p6p7p8p9_kernel(x_ref,
                     w6_ref, b6_ref, w7_ref, b7_ref,
                     w8_ref, b8_ref, w9_ref, b9_ref,
                     o6_ref, o7_ref, o8_ref, o9_ref,
                     pad_ref, *, compute_dtype):
    w_refs = (w6_ref, w7_ref, w8_ref, w9_ref)
    b_refs = (b6_ref, b7_ref, b8_ref, b9_ref)
    o_refs = (o6_ref, o7_ref, o8_ref, o9_ref)

    # Stage the P6 input (no ReLU on it, matching the reference module).
    _, H, W, C0 = x_ref.shape
    _stage_padded_input(pad_ref,
                        x_ref[...].reshape(H, W, C0).astype(jnp.float32),
                        H, W, C0)

    for lvl in range(4):
        cout = w_refs[lvl].shape[-1]
        Ho, Wo = (H + 1) // 2, (W + 1) // 2

        acc = _conv3x3_s2_from_pad(pad_ref, H, W, w_refs[lvl], b_refs[lvl],
                                   compute_dtype)          # (Ho*Wo, Cout) f32

        # Raw (pre-ReLU) conv result, lane-dense (1, M, Cout) output block.
        o_refs[lvl][...] = acc.reshape(1, Ho * Wo, cout).astype(o_refs[lvl].dtype)

        if lvl + 1 < 4:
            # ReLU hoisted: applied once to the NEXT conv's input, routed
            # through the scratch ref (cuts live ranges across levels).
            _stage_padded_input(pad_ref,
                                jnp.maximum(acc, 0.0).reshape(Ho, Wo, cout),
                                Ho, Wo, cout)
        H, W = Ho, Wo


# ----------------------------------------------------------------------------
# Public wrapper (NCHW in / NCHW out, like the PyTorch module).
# ----------------------------------------------------------------------------
def _round_up(x, m):
    return -(-x // m) * m


def _padded_nbytes(shape, dtype):
    """Rough VMEM footprint of one buffer after (sublane, lane) tile padding."""
    itemsize = jnp.dtype(dtype).itemsize
    dims = list(shape)
    if dims:
        dims[-1] = _round_up(dims[-1], 128)
    if len(dims) >= 2:
        dims[-2] = _round_up(dims[-2], max(8, 32 // itemsize))
    n = 1
    for d in dims:
        n *= d
    return n * itemsize


def last_level_p6p7p8p9(c5, p5, params, use_P5, *, compute_dtype=jnp.bfloat16):
    """Forward of LastLevelP6P7P8P9. c5/p5: NCHW. Returns [p6, p7, p8, p9] NCHW."""
    x = p5 if use_P5 else c5
    N, Cin, H, W = x.shape
    out_dtype = x.dtype
    x_nhwc = jnp.transpose(x, (0, 2, 3, 1))          # layout glue only

    # Static per-level dims.
    dims = []
    h, w_, cin = H, W, Cin
    for (wgt, _) in params:                          # wgt: (3, 3, cin, cout)
        cout = wgt.shape[-1]
        ho, wo = (h + 1) // 2, (w_ + 1) // 2
        dims.append((h, w_, cin, ho, wo, cout))
        h, w_, cin = ho, wo, cout
    cmax = max(d[2] for d in dims)                   # widest conv-input channels

    # Flatten / zero-channel-pad weights to (3, 3*cmax, cout) (rows ordered
    # (kw, ci)) and PRE-CAST to compute_dtype in the wrapper (hoisted cast).
    flat_w, flat_b = [], []
    for (wgt, bias), (_, _, cin, _, _, cout) in zip(params, dims):
        wp = jnp.zeros((3, 3, cmax, cout), wgt.dtype).at[:, :, :cin, :].set(wgt)
        flat_w.append(wp.reshape(3, 3 * cmax, cout).astype(compute_dtype))
        flat_b.append(bias.reshape(1, cout).astype(jnp.float32))

    out_shapes = tuple(jax.ShapeDtypeStruct((N, ho * wo, cout), out_dtype)
                       for (_, _, _, ho, wo, cout) in dims)
    out_specs = tuple(pl.BlockSpec((1, ho * wo, cout), lambda n: (n, 0, 0))
                      for (_, _, _, ho, wo, cout) in dims)

    in_specs = [pl.BlockSpec((1, H, W, Cin), lambda n: (n, 0, 0, 0))]
    operands = [x_nhwc]
    for wf, bf in zip(flat_w, flat_b):
        # Constant across the batch grid: whole-array VMEM operands, so the
        # pipeline does not double-buffer / re-DMA them per grid step.
        in_specs.append(pl.BlockSpec(memory_space=pltpu.MemorySpace.VMEM))
        in_specs.append(pl.BlockSpec(memory_space=pltpu.MemorySpace.VMEM))
        operands.extend([wf, bf])

    scratch_shapes = [pltpu.VMEM((H + 2, W + 2, cmax), jnp.float32)]

    # VMEM budget derived from actual buffers (+ headroom for transients),
    # capped at 48 MiB so it also fits inside v7x's 64 MiB physical VMEM.
    m0 = dims[0][3] * dims[0][4]
    est = (2 * _padded_nbytes((1, H, W, Cin), x_nhwc.dtype)
           + _padded_nbytes((H + 2, W + 2, cmax), jnp.float32)
           + sum(_padded_nbytes(wf.shape, wf.dtype) for wf in flat_w)
           + sum(_padded_nbytes(bf.shape, bf.dtype) for bf in flat_b)
           + 2 * sum(_padded_nbytes((1, ho * wo, cout), out_dtype)
                     for (_, _, _, ho, wo, cout) in dims)
           + 8 * _padded_nbytes((m0, 3 * cmax), jnp.float32))
    vmem_limit = int(min(max(2 * est, 32 * 1024 * 1024), 48 * 1024 * 1024))

    itemsize = jnp.dtype(out_dtype).itemsize
    flops = sum(2 * N * ho * wo * (9 * cmax) * cout
                for (_, _, _, ho, wo, cout) in dims)
    bytes_accessed = int(x_nhwc.size) * jnp.dtype(x_nhwc.dtype).itemsize
    bytes_accessed += sum(int(wf.size) * wf.dtype.itemsize for wf in flat_w)
    bytes_accessed += sum(int(bf.size) * bf.dtype.itemsize for bf in flat_b)
    bytes_accessed += sum(N * ho * wo * cout * itemsize
                          for (_, _, _, ho, wo, cout) in dims)

    kernel = functools.partial(_p6p7p8p9_kernel, compute_dtype=compute_dtype)
    outs = pl.pallas_call(
        kernel,
        out_shape=out_shapes,
        grid=(N,),
        in_specs=in_specs,
        out_specs=out_specs,
        scratch_shapes=scratch_shapes,
        compiler_params=pltpu.CompilerParams(
            dimension_semantics=("parallel",),       # megacore over batch
            vmem_limit_bytes=vmem_limit),
        cost_estimate=pl.CostEstimate(flops=flops, transcendentals=0,
                                      bytes_accessed=int(bytes_accessed)),
    )(*operands)

    # Back to NCHW (layout glue).
    results = []
    for o, (_, _, _, ho, wo, cout) in zip(outs, dims):
        results.append(jnp.transpose(o.reshape(N, ho, wo, cout), (0, 3, 1, 2)))
    return results


# ----------------------------------------------------------------------------
# Parameter init matching the PyTorch __init__ (kaiming_uniform_(a=1), bias=0).
# ----------------------------------------------------------------------------
def init_last_level_params(key, in_channels, out_channels):
    def one(k, cin, cout):
        fan_in = cin * 3 * 3
        gain = (2.0 / (1.0 + 1.0 ** 2)) ** 0.5
        bound = gain * (3.0 / fan_in) ** 0.5
        w = jax.random.uniform(k, (3, 3, cin, cout), jnp.float32, -bound, bound)
        b = jnp.zeros((1, cout), jnp.float32)
        return w, b

    keys = jax.random.split(key, 4)
    params = [one(keys[0], in_channels, out_channels)]
    for i in range(1, 4):
        params.append(one(keys[i], out_channels, out_channels))
    return params


def _reference(c5, p5, params, use_P5):
    """Pure-JAX reference (lax conv) for correctness checking."""
    x = p5 if use_P5 else c5
    outs = []
    for idx, (w, b) in enumerate(params):
        if idx > 0:
            x = jnp.maximum(x, 0.0)
        w_oihw = jnp.transpose(w, (3, 2, 0, 1))
        x = lax.conv_general_dilated(x, w_oihw, window_strides=(2, 2),
                                     padding=((1, 1), (1, 1)))
        x = x + b.reshape(1, -1, 1, 1)
        outs.append(x)
    return outs


if __name__ == "__main__":
    key = jax.random.PRNGKey(0)
    in_channels = 8
    out_channels = 8           # in == out -> use_P5 = True (same as the module)
    N, H, W = 2, 16, 16

    k_c5, k_p5, k_params = jax.random.split(key, 3)
    c5 = jax.random.normal(k_c5, (N, in_channels, H, W), jnp.float32)
    p5 = jax.random.normal(k_p5, (N, out_channels, H, W), jnp.float32)

    params = init_last_level_params(k_params, in_channels, out_channels)
    use_P5 = in_channels == out_channels

    refs = _reference(c5, p5, params, use_P5)
    expected_shapes = [(N, out_channels, 8, 8), (N, out_channels, 4, 4),
                       (N, out_channels, 2, 2), (N, out_channels, 1, 1)]

    # Exact path (f32 MXU operands) -> tight tolerance against the reference.
    outs = last_level_p6p7p8p9(c5, p5, params, use_P5, compute_dtype=jnp.float32)
    outs = [jax.block_until_ready(o) for o in outs]
    for o, r, s in zip(outs, refs, expected_shapes):
        assert o.shape == s, (o.shape, s)
        assert float(jnp.max(jnp.abs(o - r))) < 1e-4

    # Default fast path (bf16 MXU operands, f32 accumulation) -> loose tolerance.
    outs_bf16 = last_level_p6p7p8p9(c5, p5, params, use_P5)
    outs_bf16 = [jax.block_until_ready(o) for o in outs_bf16]
    for o, r, s in zip(outs_bf16, refs, expected_shapes):
        assert o.shape == s, (o.shape, s)
        assert float(jnp.max(jnp.abs(o.astype(jnp.float32) - r))) < 1e-1

    print("KERNEL_OK")
</pallas_src>

<mosaic_0001>
module attributes {stable_mosaic.version = 11 : i64} {
  func.func @_p6p7p8p9_kernel(%arg0: i32, %arg1: memref<1x16x16x8xf32, #tpu.memory_space<vmem>>, %arg2: memref<3x24x8xf32, #tpu.memory_space<vmem>>, %arg3: memref<1x8xf32, #tpu.memory_space<vmem>>, %arg4: memref<3x24x8xf32, #tpu.memory_space<vmem>>, %arg5: memref<1x8xf32, #tpu.memory_space<vmem>>, %arg6: memref<3x24x8xf32, #tpu.memory_space<vmem>>, %arg7: memref<1x8xf32, #tpu.memory_space<vmem>>, %arg8: memref<3x24x8xf32, #tpu.memory_space<vmem>>, %arg9: memref<1x8xf32, #tpu.memory_space<vmem>>, %arg10: memref<1x64x8xf32, #tpu.memory_space<vmem>>, %arg11: memref<1x16x8xf32, #tpu.memory_space<vmem>>, %arg12: memref<1x4x8xf32, #tpu.memory_space<vmem>>, %arg13: memref<1x1x8xf32, #tpu.memory_space<vmem>>, %arg14: memref<18x18x8xf32, #tpu.memory_space<vmem>>) attributes {dimension_semantics = [#tpu.dimension_semantics<parallel>], iteration_bounds = array<i64: 2>, scalar_prefetch = 0 : i64, scratch_operands = 1 : i64, tpu.core_type = #tpu.core_type<tc>, window_params = [{transform_indices = @transform_0, window_bounds = array<i64: 1, 16, 16, 8>}, {pipeline_mode = #tpu.pipeline_mode<synchronous>, transform_indices = @transform_1, window_bounds = array<i64: 3, 24, 8>}, {pipeline_mode = #tpu.pipeline_mode<synchronous>, transform_indices = @transform_2, window_bounds = array<i64: 1, 8>}, {pipeline_mode = #tpu.pipeline_mode<synchronous>, transform_indices = @transform_3, window_bounds = array<i64: 3, 24, 8>}, {pipeline_mode = #tpu.pipeline_mode<synchronous>, transform_indices = @transform_4, window_bounds = array<i64: 1, 8>}, {pipeline_mode = #tpu.pipeline_mode<synchronous>, transform_indices = @transform_5, window_bounds = array<i64: 3, 24, 8>}, {pipeline_mode = #tpu.pipeline_mode<synchronous>, transform_indices = @transform_6, window_bounds = array<i64: 1, 8>}, {pipeline_mode = #tpu.pipeline_mode<synchronous>, transform_indices = @transform_7, window_bounds = array<i64: 3, 24, 8>}, {pipeline_mode = #tpu.pipeline_mode<synchronous>, transform_indices = @transform_8, window_bounds = array<i64: 1, 8>}, {transform_indices = @transform_9, window_bounds = array<i64: 1, 64, 8>}, {transform_indices = @transform_10, window_bounds = array<i64: 1, 16, 8>}, {transform_indices = @transform_11, window_bounds = array<i64: 1, 4, 8>}, {transform_indices = @transform_12, window_bounds = array<i64: 1, 1, 8>}]} {
    %c0 = arith.constant 0 : index
    %c0_0 = arith.constant 0 : index
    %c0_1 = arith.constant 0 : index
    %c0_2 = arith.constant 0 : index
    %0 = vector.load %arg1[%c0, %c0_0, %c0_1, %c0_2] : memref<1x16x16x8xf32, #tpu.memory_space<vmem>>, vector<1x16x16x8xf32>
    %1 = vector.shape_cast %0 : vector<1x16x16x8xf32> to vector<16x16x8xf32>
    %cst = arith.constant 0.000000e+00 : f32
    %2 = vector.broadcast %cst : f32 to vector<18x18x8xf32>
    %c0_3 = arith.constant 0 : index
    %c0_4 = arith.constant 0 : index
    %c0_5 = arith.constant 0 : index
    %3 = vector.load %arg14[%c0_3, %c0_4, %c0_5] : memref<18x18x8xf32, #tpu.memory_space<vmem>>, vector<18x18x8xf32>
    tpu.vector_store %arg14[%c0_3, %c0_4, %c0_5], %2 {strides = array<i32>} : memref<18x18x8xf32, #tpu.memory_space<vmem>>, vector<18x18x8xf32>,
    %c1 = arith.constant 1 : index
    %c1_6 = arith.constant 1 : index
    %c0_7 = arith.constant 0 : index
    %4 = vector.load %arg14[%c1, %c1_6, %c0_7] : memref<18x18x8xf32, #tpu.memory_space<vmem>>, vector<16x16x8xf32>
    tpu.vector_store %arg14[%c1, %c1_6, %c0_7], %1 {strides = array<i32>} : memref<18x18x8xf32, #tpu.memory_space<vmem>>, vector<16x16x8xf32>,
    %c0_8 = arith.constant 0 : index
    %c0_9 = arith.constant 0 : index
    %c0_10 = arith.constant 0 : index
    %5 = tpu.strided_load %arg14[%c0_8, %c0_9, %c0_10] {strides = array<i32: 2, 2, 1>} : memref<18x18x8xf32, #tpu.memory_space<vmem>>, vector<8x8x8xf32>
    %6 = vector.shape_cast %5 : vector<8x8x8xf32> to vector<64x8xf32>
    %c0_11 = arith.constant 0 : index
    %c1_12 = arith.constant 1 : index
    %c0_13 = arith.constant 0 : index
    %7 = tpu.strided_load %arg14[%c0_11, %c1_12, %c0_13] {strides = array<i32: 2, 2, 1>} : memref<18x18x8xf32, #tpu.memory_space<vmem>>, vector<8x8x8xf32>
    %8 = vector.shape_cast %7 : vector<8x8x8xf32> to vector<64x8xf32>
    %c0_14 = arith.constant 0 : index
    %c2 = arith.constant 2 : index
    %c0_15 = arith.constant 0 : index
    %9 = tpu.strided_load %arg14[%c0_14, %c2, %c0_15] {strides = array<i32: 2, 2, 1>} : memref<18x18x8xf32, #tpu.memory_space<vmem>>, vector<8x8x8xf32>
    %10 = vector.shape_cast %9 : vector<8x8x8xf32> to vector<64x8xf32>
    %11 = tpu.concatenate %6, %8, %10 in 1 : vector<64x8xf32>, vector<64x8xf32>, vector<64x8xf32> -> vector<64x24xf32>
    %c0_16 = arith.constant 0 : index
    %c0_17 = arith.constant 0 : index
    %c0_18 = arith.constant 0 : index
    %12 = vector.load %arg2[%c0_16, %c0_17, %c0_18] : memref<3x24x8xf32, #tpu.memory_space<vmem>>, vector<1x24x8xf32>
    %13 = vector.shape_cast %12 : vector<1x24x8xf32> to vector<24x8xf32>
    %cst_19 = arith.constant dense<0.000000e+00> : vector<64x8xf32>
    %14 = tpu.matmul %11, %13, %cst_19 {dimension_numbers = #tpu.dot_dimension_numbers<[1], [0], [0], [1], [0, 0, 1, 1], [], []>} : vector<64x24xf32>, vector<24x8xf32>, vector<64x8xf32> -> vector<64x8xf32>
    %c1_20 = arith.constant 1 : index
    %c0_21 = arith.constant 0 : index
    %c0_22 = arith.constant 0 : index
    %15 = tpu.strided_load %arg14[%c1_20, %c0_21, %c0_22] {strides = array<i32: 2, 2, 1>} : memref<18x18x8xf32, #tpu.memory_space<vmem>>, vector<8x8x8xf32>
    %16 = vector.shape_cast %15 : vector<8x8x8xf32> to vector<64x8xf32>
    %c1_23 = arith.constant 1 : index
    %c1_24 = arith.constant 1 : index
    %c0_25 = arith.constant 0 : index
    %17 = tpu.strided_load %arg14[%c1_23, %c1_24, %c0_25] {strides = array<i32: 2, 2, 1>} : memref<18x18x8xf32, #tpu.memory_space<vmem>>, vector<8x8x8xf32>
    %18 = vector.shape_cast %17 : vector<8x8x8xf32> to vector<64x8xf32>
    %c1_26 = arith.constant 1 : index
    %c2_27 = arith.constant 2 : index
    %c0_28 = arith.constant 0 : index
    %19 = tpu.strided_load %arg14[%c1_26, %c2_27, %c0_28] {strides = array<i32: 2, 2, 1>} : memref<18x18x8xf32, #tpu.memory_space<vmem>>, vector<8x8x8xf32>
    %20 = vector.shape_cast %19 : vector<8x8x8xf32> to vector<64x8xf32>
    %21 = tpu.concatenate %16, %18, %20 in 1 : vector<64x8xf32>, vector<64x8xf32>, vector<64x8xf32> -> vector<64x24xf32>
    %c1_29 = arith.constant 1 : index
    %c0_30 = arith.constant 0 : index
    %c0_31 = arith.constant 0 : index
    %22 = vector.load %arg2[%c1_29, %c0_30, %c0_31] : memref<3x24x8xf32, #tpu.memory_space<vmem>>, vector<1x24x8xf32>
    %23 = vector.shape_cast %22 : vector<1x24x8xf32> to vector<24x8xf32>
    %cst_32 = arith.constant dense<0.000000e+00> : vector<64x8xf32>
    %24 = tpu.matmul %21, %23, %cst_32 {dimension_numbers = #tpu.dot_dimension_numbers<[1], [0], [0], [1], [0, 0, 1, 1], [], []>} : vector<64x24xf32>, vector<24x8xf32>, vector<64x8xf32> -> vector<64x8xf32>
    %25 = arith.addf %14, %24 : vector<64x8xf32>
    %c2_33 = arith.constant 2 : index
    %c0_34 = arith.constant 0 : index
    %c0_35 = arith.constant 0 : index
    %26 = tpu.strided_load %arg14[%c2_33, %c0_34, %c0_35] {strides = array<i32: 2, 2, 1>} : memref<18x18x8xf32, #tpu.memory_space<vmem>>, vector<8x8x8xf32>
    %27 = vector.shape_cast %26 : vector<8x8x8xf32> to vector<64x8xf32>
    %c2_36 = arith.constant 2 : index
    %c1_37 = arith.constant 1 : index
    %c0_38 = arith.constant 0 : index
    %28 = tpu.strided_load %arg14[%c2_36, %c1_37, %c0_38] {strides = array<i32: 2, 2, 1>} : memref<18x18x8xf32, #tpu.memory_space<vmem>>, vector<8x8x8xf32>
    %29 = vector.shape_cast %28 : vector<8x8x8xf32> to vector<64x8xf32>
    %c2_39 = arith.constant 2 : index
    %c2_40 = arith.constant 2 : index
    %c0_41 = arith.constant 0 : index
    %30 = tpu.strided_load %arg14[%c2_39, %c2_40, %c0_41] {strides = array<i32: 2, 2, 1>} : memref<18x18x8xf32, #tpu.memory_space<vmem>>, vector<8x8x8xf32>
    %31 = vector.shape_cast %30 : vector<8x8x8xf32> to vector<64x8xf32>
    %32 = tpu.concatenate %27, %29, %31 in 1 : vector<64x8xf32>, vector<64x8xf32>, vector<64x8xf32> -> vector<64x24xf32>
    %c2_42 = arith.constant 2 : index
    %c0_43 = arith.constant 0 : index
    %c0_44 = arith.constant 0 : index
    %33 = vector.load %arg2[%c2_42, %c0_43, %c0_44] : memref<3x24x8xf32, #tpu.memory_space<vmem>>, vector<1x24x8xf32>
    %34 = vector.shape_cast %33 : vector<1x24x8xf32> to vector<24x8xf32>
    %cst_45 = arith.constant dense<0.000000e+00> : vector<64x8xf32>
    %35 = tpu.matmul %32, %34, %cst_45 {dimension_numbers = #tpu.dot_dimension_numbers<[1], [0], [0], [1], [0, 0, 1, 1], [], []>} : vector<64x24xf32>, vector<24x8xf32>, vector<64x8xf32> -> vector<64x8xf32>
    %36 = arith.addf %25, %35 : vector<64x8xf32>
    %c0_46 = arith.constant 0 : index
    %c0_47 = arith.constant 0 : index
    %37 = vector.load %arg3[%c0_46, %c0_47] : memref<1x8xf32, #tpu.memory_space<vmem>>, vector<1x8xf32>
    %38 = vector.broadcast %37 : vector<1x8xf32> to vector<64x8xf32>
    %39 = arith.addf %36, %38 : vector<64x8xf32>
    %40 = vector.shape_cast %39 : vector<64x8xf32> to vector<1x64x8xf32>
    %c0_48 = arith.constant 0 : index
    %c0_49 = arith.constant 0 : index
    %c0_50 = arith.constant 0 : index
    %41 = vector.load %arg10[%c0_48, %c0_49, %c0_50] : memref<1x64x8xf32, #tpu.memory_space<vmem>>, vector<1x64x8xf32>
    tpu.vector_store %arg10[%c0_48, %c0_49, %c0_50], %40 {strides = array<i32>} : memref<1x64x8xf32, #tpu.memory_space<vmem>>, vector<1x64x8xf32>,
    %cst_51 = arith.constant 0.000000e+00 : f32
    %42 = vector.broadcast %cst_51 : f32 to vector<64x8xf32>
    %43 = arith.maximumf %39, %42 : vector<64x8xf32>
    %44 = vector.shape_cast %43 : vector<64x8xf32> to vector<8x8x8xf32>
    %cst_52 = arith.constant 0.000000e+00 : f32
    %45 = vector.broadcast %cst_52 : f32 to vector<10x10x8xf32>
    %c0_53 = arith.constant 0 : index
    %c0_54 = arith.constant 0 : index
    %c0_55 = arith.constant 0 : index
    %46 = vector.load %arg14[%c0_53, %c0_54, %c0_55] : memref<18x18x8xf32, #tpu.memory_space<vmem>>, vector<10x10x8xf32>
    tpu.vector_store %arg14[%c0_53, %c0_54, %c0_55], %45 {strides = array<i32>} : memref<18x18x8xf32, #tpu.memory_space<vmem>>, vector<10x10x8xf32>,
    %c1_56 = arith.constant 1 : index
    %c1_57 = arith.constant 1 : index
    %c0_58 = arith.constant 0 : index
    %47 = vector.load %arg14[%c1_56, %c1_57, %c0_58] : memref<18x18x8xf32, #tpu.memory_space<vmem>>, vector<8x8x8xf32>
    tpu.vector_store %arg14[%c1_56, %c1_57, %c0_58], %44 {strides = array<i32>} : memref<18x18x8xf32, #tpu.memory_space<vmem>>, vector<8x8x8xf32>,
    %c0_59 = arith.constant 0 : index
    %c0_60 = arith.constant 0 : index
    %c0_61 = arith.constant 0 : index
    %48 = tpu.strided_load %arg14[%c0_59, %c0_60, %c0_61] {strides = array<i32: 2, 2, 1>} : memref<18x18x8xf32, #tpu.memory_space<vmem>>, vector<4x4x8xf32>
    %49 = vector.shape_cast %48 : vector<4x4x8xf32> to vector<16x8xf32>
    %c0_62 = arith.constant 0 : index
    %c1_63 = arith.constant 1 : index
    %c0_64 = arith.constant 0 : index
    %50 = tpu.strided_load %arg14[%c0_62, %c1_63, %c0_64] {strides = array<i32: 2, 2, 1>} : memref<18x18x8xf32, #tpu.memory_space<vmem>>, vector<4x4x8xf32>
    %51 = vector.shape_cast %50 : vector<4x4x8xf32> to vector<16x8xf32>
    %c0_65 = arith.constant 0 : index
    %c2_66 = arith.constant 2 : index
    %c0_67 = arith.constant 0 : index
    %52 = tpu.strided_load %arg14[%c0_65, %c2_66, %c0_67] {strides = array<i32: 2, 2, 1>} : memref<18x18x8xf32, #tpu.memory_space<vmem>>, vector<4x4x8xf32>
    %53 = vector.shape_cast %52 : vector<4x4x8xf32> to vector<16x8xf32>
    %54 = tpu.concatenate %49, %51, %53 in 1 : vector<16x8xf32>, vector<16x8xf32>, vector<16x8xf32> -> vector<16x24xf32>
    %c0_68 = arith.constant 0 : index
    %c0_69 = arith.constant 0 : index
    %c0_70 = arith.constant 0 : index
    %55 = vector.load %arg4[%c0_68, %c0_69, %c0_70] : memref<3x24x8xf32, #tpu.memory_space<vmem>>, vector<1x24x8xf32>
    %56 = vector.shape_cast %55 : vector<1x24x8xf32> to vector<24x8xf32>
    %cst_71 = arith.constant dense<0.000000e+00> : vector<16x8xf32>
    %57 = tpu.matmul %54, %56, %cst_71 {dimension_numbers = #tpu.dot_dimension_numbers<[1], [0], [0], [1], [0, 0, 1, 1], [], []>} : vector<16x24xf32>, vector<24x8xf32>, vector<16x8xf32> -> vector<16x8xf32>
    %c1_72 = arith.constant 1 : index
    %c0_73 = arith.constant 0 : index
    %c0_74 = arith.constant 0 : index
    %58 = tpu.strided_load %arg14[%c1_72, %c0_73, %c0_74] {strides = array<i32: 2, 2, 1>} : memref<18x18x8xf32, #tpu.memory_space<vmem>>, vector<4x4x8xf32>
    %59 = vector.shape_cast %58 : vector<4x4x8xf32> to vector<16x8xf32>
    %c1_75 = arith.constant 1 : index
    %c1_76 = arith.constant 1 : index
    %c0_77 = arith.constant 0 : index
    %60 = tpu.strided_load %arg14[%c1_75, %c1_76, %c0_77] {strides = array<i32: 2, 2, 1>} : memref<18x18x8xf32, #tpu.memory_space<vmem>>, vector<4x4x8xf32>
    %61 = vector.shape_cast %60 : vector<4x4x8xf32> to vector<16x8xf32>
    %c1_78 = arith.constant 1 : index
    %c2_79 = arith.constant 2 : index
    %c0_80 = arith.constant 0 : index
    %62 = tpu.strided_load %arg14[%c1_78, %c2_79, %c0_80] {strides = array<i32: 2, 2, 1>} : memref<18x18x8xf32, #tpu.memory_space<vmem>>, vector<4x4x8xf32>
    %63 = vector.shape_cast %62 : vector<4x4x8xf32> to vector<16x8xf32>
    %64 = tpu.concatenate %59, %61, %63 in 1 : vector<16x8xf32>, vector<16x8xf32>, vector<16x8xf32> -> vector<16x24xf32>
    %c1_81 = arith.constant 1 : index
    %c0_82 = arith.constant 0 : index
    %c0_83 = arith.constant 0 : index
    %65 = vector.load %arg4[%c1_81, %c0_82, %c0_83] : memref<3x24x8xf32, #tpu.memory_space<vmem>>, vector<1x24x8xf32>
    %66 = vector.shape_cast %65 : vector<1x24x8xf32> to vector<24x8xf32>
    %cst_84 = arith.constant dense<0.000000e+00> : vector<16x8xf32>
    %67 = tpu.matmul %64, %66, %cst_84 {dimension_numbers = #tpu.dot_dimension_numbers<[1], [0], [0], [1], [0, 0, 1, 1], [], []>} : vector<16x24xf32>, vector<24x8xf32>, vector<16x8xf32> -> vector<16x8xf32>
    %68 = arith.addf %57, %67 : vector<16x8xf32>
    %c2_85 = arith.constant 2 : index
    %c0_86 = arith.constant 0 : index
    %c0_87 = arith.constant 0 : index
    %69 = tpu.strided_load %arg14[%c2_85, %c0_86, %c0_87] {strides = array<i32: 2, 2, 1>} : memref<18x18x8xf32, #tpu.memory_space<vmem>>, vector<4x4x8xf32>
    %70 = vector.shape_cast %69 : vector<4x4x8xf32> to vector<16x8xf32>
    %c2_88 = arith.constant 2 : index
    %c1_89 = arith.constant 1 : index
    %c0_90 = arith.constant 0 : index
    %71 = tpu.strided_load %arg14[%c2_88, %c1_89, %c0_90] {strides = array<i32: 2, 2, 1>} : memref<18x18x8xf32, #tpu.memory_space<vmem>>, vector<4x4x8xf32>
    %72 = vector.shape_cast %71 : vector<4x4x8xf32> to vector<16x8xf32>
    %c2_91 = arith.constant 2 : index
    %c2_92 = arith.constant 2 : index
    %c0_93 = arith.constant 0 : index
    %73 = tpu.strided_load %arg14[%c2_91, %c2_92, %c0_93] {strides = array<i32: 2, 2, 1>} : memref<18x18x8xf32, #tpu.memory_space<vmem>>, vector<4x4x8xf32>
    %74 = vector.shape_cast %73 : vector<4x4x8xf32> to vector<16x8xf32>
    %75 = tpu.concatenate %70, %72, %74 in 1 : vector<16x8xf32>, vector<16x8xf32>, vector<16x8xf32> -> vector<16x24xf32>
    %c2_94 = arith.constant 2 : index
    %c0_95 = arith.constant 0 : index
    %c0_96 = arith.constant 0 : index
    %76 = vector.load %arg4[%c2_94, %c0_95, %c0_96] : memref<3x24x8xf32, #tpu.memory_space<vmem>>, vector<1x24x8xf32>
    %77 = vector.shape_cast %76 : vector<1x24x8xf32> to vector<24x8xf32>
    %cst_97 = arith.constant dense<0.000000e+00> : vector<16x8xf32>
    %78 = tpu.matmul %75, %77, %cst_97 {dimension_numbers = #tpu.dot_dimension_numbers<[1], [0], [0], [1], [0, 0, 1, 1], [], []>} : vector<16x24xf32>, vector<24x8xf32>, vector<16x8xf32> -> vector<16x8xf32>
    %79 = arith.addf %68, %78 : vector<16x8xf32>
    %c0_98 = arith.constant 0 : index
    %c0_99 = arith.constant 0 : index
    %80 = vector.load %arg5[%c0_98, %c0_99] : memref<1x8xf32, #tpu.memory_space<vmem>>, vector<1x8xf32>
    %81 = vector.broadcast %80 : vector<1x8xf32> to vector<16x8xf32>
    %82 = arith.addf %79, %81 : vector<16x8xf32>
    %83 = vector.shape_cast %82 : vector<16x8xf32> to vector<1x16x8xf32>
    %c0_100 = arith.constant 0 : index
    %c0_101 = arith.constant 0 : index
    %c0_102 = arith.constant 0 : index
    %84 = vector.load %arg11[%c0_100, %c0_101, %c0_102] : memref<1x16x8xf32, #tpu.memory_space<vmem>>, vector<1x16x8xf32>
    tpu.vector_store %arg11[%c0_100, %c0_101, %c0_102], %83 {strides = array<i32>} : memref<1x16x8xf32, #tpu.memory_space<vmem>>, vector<1x16x8xf32>,
    %cst_103 = arith.constant 0.000000e+00 : f32
    %85 = vector.broadcast %cst_103 : f32 to vector<16x8xf32>
    %86 = arith.maximumf %82, %85 : vector<16x8xf32>
    %87 = vector.shape_cast %86 : vector<16x8xf32> to vector<4x4x8xf32>
    %cst_104 = arith.constant 0.000000e+00 : f32
    %88 = vector.broadcast %cst_104 : f32 to vector<6x6x8xf32>
    %c0_105 = arith.constant 0 : index
    %c0_106 = arith.constant 0 : index
    %c0_107 = arith.constant 0 : index
    %89 = vector.load %arg14[%c0_105, %c0_106, %c0_107] : memref<18x18x8xf32, #tpu.memory_space<vmem>>, vector<6x6x8xf32>
    tpu.vector_store %arg14[%c0_105, %c0_106, %c0_107], %88 {strides = array<i32>} : memref<18x18x8xf32, #tpu.memory_space<vmem>>, vector<6x6x8xf32>,
    %c1_108 = arith.constant 1 : index
    %c1_109 = arith.constant 1 : index
    %c0_110 = arith.constant 0 : index
    %90 = vector.load %arg14[%c1_108, %c1_109, %c0_110] : memref<18x18x8xf32, #tpu.memory_space<vmem>>, vector<4x4x8xf32>
    tpu.vector_store %arg14[%c1_108, %c1_109, %c0_110], %87 {strides = array<i32>} : memref<18x18x8xf32, #tpu.memory_space<vmem>>, vector<4x4x8xf32>,
    %c0_111 = arith.constant 0 : index
    %c0_112 = arith.constant 0 : index
    %c0_113 = arith.constant 0 : index
    %91 = tpu.strided_load %arg14[%c0_111, %c0_112, %c0_113] {strides = array<i32: 2, 2, 1>} : memref<18x18x8xf32, #tpu.memory_space<vmem>>, vector<2x2x8xf32>
    %92 = vector.shape_cast %91 : vector<2x2x8xf32> to vector<4x8xf32>
    %c0_114 = arith.constant 0 : index
    %c1_115 = arith.constant 1 : index
    %c0_116 = arith.constant 0 : index
    %93 = tpu.strided_load %arg14[%c0_114, %c1_115, %c0_116] {strides = array<i32: 2, 2, 1>} : memref<18x18x8xf32, #tpu.memory_space<vmem>>, vector<2x2x8xf32>
    %94 = vector.shape_cast %93 : vector<2x2x8xf32> to vector<4x8xf32>
    %c0_117 = arith.constant 0 : index
    %c2_118 = arith.constant 2 : index
    %c0_119 = arith.constant 0 : index
    %95 = tpu.strided_load %arg14[%c0_117, %c2_118, %c0_119] {strides = array<i32: 2, 2, 1>} : memref<18x18x8xf32, #tpu.memory_space<vmem>>, vector<2x2x8xf32>
    %96 = vector.shape_cast %95 : vector<2x2x8xf32> to vector<4x8xf32>
    %97 = tpu.concatenate %92, %94, %96 in 1 : vector<4x8xf32>, vector<4x8xf32>, vector<4x8xf32> -> vector<4x24xf32>
    %c0_120 = arith.constant 0 : index
    %c0_121 = arith.constant 0 : index
    %c0_122 = arith.constant 0 : index
    %98 = vector.load %arg6[%c0_120, %c0_121, %c0_122] : memref<3x24x8xf32, #tpu.memory_space<vmem>>, vector<1x24x8xf32>
    %99 = vector.shape_cast %98 : vector<1x24x8xf32> to vector<24x8xf32>
    %cst_123 = arith.constant dense<0.000000e+00> : vector<4x8xf32>
    %100 = tpu.matmul %97, %99, %cst_123 {dimension_numbers = #tpu.dot_dimension_numbers<[1], [0], [0], [1], [0, 0, 1, 1], [], []>} : vector<4x24xf32>, vector<24x8xf32>, vector<4x8xf32> -> vector<4x8xf32>
    %c1_124 = arith.constant 1 : index
    %c0_125 = arith.constant 0 : index
    %c0_126 = arith.constant 0 : index
    %101 = tpu.strided_load %arg14[%c1_124, %c0_125, %c0_126] {strides = array<i32: 2, 2, 1>} : memref<18x18x8xf32, #tpu.memory_space<vmem>>, vector<2x2x8xf32>
    %102 = vector.shape_cast %101 : vector<2x2x8xf32> to vector<4x8xf32>
    %c1_127 = arith.constant 1 : index
    %c1_128 = arith.constant 1 : index
    %c0_129 = arith.constant 0 : index
    %103 = tpu.strided_load %arg14[%c1_127, %c1_128, %c0_129] {strides = array<i32: 2, 2, 1>} : memref<18x18x8xf32, #tpu.memory_space<vmem>>, vector<2x2x8xf32>
    %104 = vector.shape_cast %103 : vector<2x2x8xf32> to vector<4x8xf32>
    %c1_130 = arith.constant 1 : index
    %c2_131 = arith.constant 2 : index
    %c0_132 = arith.constant 0 : index
    %105 = tpu.strided_load %arg14[%c1_130, %c2_131, %c0_132] {strides = array<i32: 2, 2, 1>} : memref<18x18x8xf32, #tpu.memory_space<vmem>>, vector<2x2x8xf32>
    %106 = vector.shape_cast %105 : vector<2x2x8xf32> to vector<4x8xf32>
    %107 = tpu.concatenate %102, %104, %106 in 1 : vector<4x8xf32>, vector<4x8xf32>, vector<4x8xf32> -> vector<4x24xf32>
    %c1_133 = arith.constant 1 : index
    %c0_134 = arith.constant 0 : index
    %c0_135 = arith.constant 0 : index
    %108 = vector.load %arg6[%c1_133, %c0_134, %c0_135] : memref<3x24x8xf32, #tpu.memory_space<vmem>>, vector<1x24x8xf32>
    %109 = vector.shape_cast %108 : vector<1x24x8xf32> to vector<24x8xf32>
    %cst_136 = arith.constant dense<0.000000e+00> : vector<4x8xf32>
    %110 = tpu.matmul %107, %109, %cst_136 {dimension_numbers = #tpu.dot_dimension_numbers<[1], [0], [0], [1], [0, 0, 1, 1], [], []>} : vector<4x24xf32>, vector<24x8xf32>, vector<4x8xf32> -> vector<4x8xf32>
    %111 = arith.addf %100, %110 : vector<4x8xf32>
    %c2_137 = arith.constant 2 : index
    %c0_138 = arith.constant 0 : index
    %c0_139 = arith.constant 0 : index
    %112 = tpu.strided_load %arg14[%c2_137, %c0_138, %c0_139] {strides = array<i32: 2, 2, 1>} : memref<18x18x8xf32, #tpu.memory_space<vmem>>, vector<2x2x8xf32>
    %113 = vector.shape_cast %112 : vector<2x2x8xf32> to vector<4x8xf32>
    %c2_140 = arith.constant 2 : index
    %c1_141 = arith.constant 1 : index
    %c0_142 = arith.constant 0 : index
    %114 = tpu.strided_load %arg14[%c2_140, %c1_141, %c0_142] {strides = array<i32: 2, 2, 1>} : memref<18x18x8xf32, #tpu.memory_space<vmem>>, vector<2x2x8xf32>
    %115 = vector.shape_cast %114 : vector<2x2x8xf32> to vector<4x8xf32>
    %c2_143 = arith.constant 2 : index
    %c2_144 = arith.constant 2 : index
    %c0_145 = arith.constant 0 : index
    %116 = tpu.strided_load %arg14[%c2_143, %c2_144, %c0_145] {strides = array<i32: 2, 2, 1>} : memref<18x18x8xf32, #tpu.memory_space<vmem>>, vector<2x2x8xf32>
    %117 = vector.shape_cast %116 : vector<2x2x8xf32> to vector<4x8xf32>
    %118 = tpu.concatenate %113, %115, %117 in 1 : vector<4x8xf32>, vector<4x8xf32>, vector<4x8xf32> -> vector<4x24xf32>
    %c2_146 = arith.constant 2 : index
    %c0_147 = arith.constant 0 : index
    %c0_148 = arith.constant 0 : index
    %119 = vector.load %arg6[%c2_146, %c0_147, %c0_148] : memref<3x24x8xf32, #tpu.memory_space<vmem>>, vector<1x24x8xf32>
    %120 = vector.shape_cast %119 : vector<1x24x8xf32> to vector<24x8xf32>
    %cst_149 = arith.constant dense<0.000000e+00> : vector<4x8xf32>
    %121 = tpu.matmul %118, %120, %cst_149 {dimension_numbers = #tpu.dot_dimension_numbers<[1], [0], [0], [1], [0, 0, 1, 1], [], []>} : vector<4x24xf32>, vector<24x8xf32>, vector<4x8xf32> -> vector<4x8xf32>
    %122 = arith.addf %111, %121 : vector<4x8xf32>
    %c0_150 = arith.constant 0 : index
    %c0_151 = arith.constant 0 : index
    %123 = vector.load %arg7[%c0_150, %c0_151] : memref<1x8xf32, #tpu.memory_space<vmem>>, vector<1x8xf32>
    %124 = vector.broadcast %123 : vector<1x8xf32> to vector<4x8xf32>
    %125 = arith.addf %122, %124 : vector<4x8xf32>
    %126 = vector.shape_cast %125 : vector<4x8xf32> to vector<1x4x8xf32>
    %c0_152 = arith.constant 0 : index
    %c0_153 = arith.constant 0 : index
    %c0_154 = arith.constant 0 : index
    %127 = vector.load %arg12[%c0_152, %c0_153, %c0_154] : memref<1x4x8xf32, #tpu.memory_space<vmem>>, vector<1x4x8xf32>
    tpu.vector_store %arg12[%c0_152, %c0_153, %c0_154], %126 {strides = array<i32>} : memref<1x4x8xf32, #tpu.memory_space<vmem>>, vector<1x4x8xf32>,
    %cst_155 = arith.constant 0.000000e+00 : f32
    %128 = vector.broadcast %cst_155 : f32 to vector<4x8xf32>
    %129 = arith.maximumf %125, %128 : vector<4x8xf32>
    %130 = vector.shape_cast %129 : vector<4x8xf32> to vector<2x2x8xf32>
    %cst_156 = arith.constant 0.000000e+00 : f32
    %131 = vector.broadcast %cst_156 : f32 to vector<4x4x8xf32>
    %c0_157 = arith.constant 0 : index
    %c0_158 = arith.constant 0 : index
    %c0_159 = arith.constant 0 : index
    %132 = vector.load %arg14[%c0_157, %c0_158, %c0_159] : memref<18x18x8xf32, #tpu.memory_space<vmem>>, vector<4x4x8xf32>
    tpu.vector_store %arg14[%c0_157, %c0_158, %c0_159], %131 {strides = array<i32>} : memref<18x18x8xf32, #tpu.memory_space<vmem>>, vector<4x4x8xf32>,
    %c1_160 = arith.constant 1 : index
    %c1_161 = arith.constant 1 : index
    %c0_162 = arith.constant 0 : index
    %133 = vector.load %arg14[%c1_160, %c1_161, %c0_162] : memref<18x18x8xf32, #tpu.memory_space<vmem>>, vector<2x2x8xf32>
    tpu.vector_store %arg14[%c1_160, %c1_161, %c0_162], %130 {strides = array<i32>} : memref<18x18x8xf32, #tpu.memory_space<vmem>>, vector<2x2x8xf32>,
    %c0_163 = arith.constant 0 : index
    %c0_164 = arith.constant 0 : index
    %c0_165 = arith.constant 0 : index
    %134 = tpu.strided_load %arg14[%c0_163, %c0_164, %c0_165] {strides = array<i32: 2, 2, 1>} : memref<18x18x8xf32, #tpu.memory_space<vmem>>, vector<1x1x8xf32>
    %135 = vector.shape_cast %134 : vector<1x1x8xf32> to vector<1x8xf32>
    %c0_166 = arith.constant 0 : index
    %c1_167 = arith.constant 1 : index
    %c0_168 = arith.constant 0 : index
    %136 = tpu.strided_load %arg14[%c0_166, %c1_167, %c0_168] {strides = array<i32: 2, 2, 1>} : memref<18x18x8xf32, #tpu.memory_space<vmem>>, vector<1x1x8xf32>
    %137 = vector.shape_cast %136 : vector<1x1x8xf32> to vector<1x8xf32>
    %c0_169 = arith.constant 0 : index
    %c2_170 = arith.constant 2 : index
    %c0_171 = arith.constant 0 : index
    %138 = tpu.strided_load %arg14[%c0_169, %c2_170, %c0_171] {strides = array<i32: 2, 2, 1>} : memref<18x18x8xf32, #tpu.memory_space<vmem>>, vector<1x1x8xf32>
    %139 = vector.shape_cast %138 : vector<1x1x8xf32> to vector<1x8xf32>
    %140 = tpu.concatenate %135, %137, %139 in 1 : vector<1x8xf32>, vector<1x8xf32>, vector<1x8xf32> -> vector<1x24xf32>
    %c0_172 = arith.constant 0 : index
    %c0_173 = arith.constant 0 : index
    %c0_174 = arith.constant 0 : index
    %141 = vector.load %arg8[%c0_172, %c0_173, %c0_174] : memref<3x24x8xf32, #tpu.memory_space<vmem>>, vector<1x24x8xf32>
    %142 = vector.shape_cast %141 : vector<1x24x8xf32> to vector<24x8xf32>
    %cst_175 = arith.constant dense<0.000000e+00> : vector<1x8xf32>
    %143 = tpu.matmul %140, %142, %cst_175 {dimension_numbers = #tpu.dot_dimension_numbers<[1], [0], [0], [1], [0, 0, 1, 1], [], []>} : vector<1x24xf32>, vector<24x8xf32>, vector<1x8xf32> -> vector<1x8xf32>
    %c1_176 = arith.constant 1 : index
    %c0_177 = arith.constant 0 : index
    %c0_178 = arith.constant 0 : index
    %144 = tpu.strided_load %arg14[%c1_176, %c0_177, %c0_178] {strides = array<i32: 2, 2, 1>} : memref<18x18x8xf32, #tpu.memory_space<vmem>>, vector<1x1x8xf32>
    %145 = vector.shape_cast %144 : vector<1x1x8xf32> to vector<1x8xf32>
    %c1_179 = arith.constant 1 : index
    %c1_180 = arith.constant 1 : index
    %c0_181 = arith.constant 0 : index
    %146 = tpu.strided_load %arg14[%c1_179, %c1_180, %c0_181] {strides = array<i32: 2, 2, 1>} : memref<18x18x8xf32, #tpu.memory_space<vmem>>, vector<1x1x8xf32>
    %147 = vector.shape_cast %146 : vector<1x1x8xf32> to vector<1x8xf32>
    %c1_182 = arith.constant 1 : index
    %c2_183 = arith.constant 2 : index
    %c0_184 = arith.constant 0 : index
    %148 = tpu.strided_load %arg14[%c1_182, %c2_183, %c0_184] {strides = array<i32: 2, 2, 1>} : memref<18x18x8xf32, #tpu.memory_space<vmem>>, vector<1x1x8xf32>
    %149 = vector.shape_cast %148 : vector<1x1x8xf32> to vector<1x8xf32>
    %150 = tpu.concatenate %145, %147, %149 in 1 : vector<1x8xf32>, vector<1x8xf32>, vector<1x8xf32> -> vector<1x24xf32>
    %c1_185 = arith.constant 1 : index
    %c0_186 = arith.constant 0 : index
    %c0_187 = arith.constant 0 : index
    %151 = vector.load %arg8[%c1_185, %c0_186, %c0_187] : memref<3x24x8xf32, #tpu.memory_space<vmem>>, vector<1x24x8xf32>
    %152 = vector.shape_cast %151 : vector<1x24x8xf32> to vector<24x8xf32>
    %cst_188 = arith.constant dense<0.000000e+00> : vector<1x8xf32>
    %153 = tpu.matmul %150, %152, %cst_188 {dimension_numbers = #tpu.dot_dimension_numbers<[1], [0], [0], [1], [0, 0, 1, 1], [], []>} : vector<1x24xf32>, vector<24x8xf32>, vector<1x8xf32> -> vector<1x8xf32>
    %154 = arith.addf %143, %153 : vector<1x8xf32>
    %c2_189 = arith.constant 2 : index
    %c0_190 = arith.constant 0 : index
    %c0_191 = arith.constant 0 : index
    %155 = tpu.strided_load %arg14[%c2_189, %c0_190, %c0_191] {strides = array<i32: 2, 2, 1>} : memref<18x18x8xf32, #tpu.memory_space<vmem>>, vector<1x1x8xf32>
    %156 = vector.shape_cast %155 : vector<1x1x8xf32> to vector<1x8xf32>
    %c2_192 = arith.constant 2 : index
    %c1_193 = arith.constant 1 : index
    %c0_194 = arith.constant 0 : index
    %157 = tpu.strided_load %arg14[%c2_192, %c1_193, %c0_194] {strides = array<i32: 2, 2, 1>} : memref<18x18x8xf32, #tpu.memory_space<vmem>>, vector<1x1x8xf32>
    %158 = vector.shape_cast %157 : vector<1x1x8xf32> to vector<1x8xf32>
    %c2_195 = arith.constant 2 : index
    %c2_196 = arith.constant 2 : index
    %c0_197 = arith.constant 0 : index
    %159 = tpu.strided_load %arg14[%c2_195, %c2_196, %c0_197] {strides = array<i32: 2, 2, 1>} : memref<18x18x8xf32, #tpu.memory_space<vmem>>, vector<1x1x8xf32>
    %160 = vector.shape_cast %159 : vector<1x1x8xf32> to vector<1x8xf32>
    %161 = tpu.concatenate %156, %158, %160 in 1 : vector<1x8xf32>, vector<1x8xf32>, vector<1x8xf32> -> vector<1x24xf32>
    %c2_198 = arith.constant 2 : index
    %c0_199 = arith.constant 0 : index
    %c0_200 = arith.constant 0 : index
    %162 = vector.load %arg8[%c2_198, %c0_199, %c0_200] : memref<3x24x8xf32, #tpu.memory_space<vmem>>, vector<1x24x8xf32>
    %163 = vector.shape_cast %162 : vector<1x24x8xf32> to vector<24x8xf32>
    %cst_201 = arith.constant dense<0.000000e+00> : vector<1x8xf32>
    %164 = tpu.matmul %161, %163, %cst_201 {dimension_numbers = #tpu.dot_dimension_numbers<[1], [0], [0], [1], [0, 0, 1, 1], [], []>} : vector<1x24xf32>, vector<24x8xf32>, vector<1x8xf32> -> vector<1x8xf32>
    %165 = arith.addf %154, %164 : vector<1x8xf32>
    %c0_202 = arith.constant 0 : index
    %c0_203 = arith.constant 0 : index
    %166 = vector.load %arg9[%c0_202, %c0_203] : memref<1x8xf32, #tpu.memory_space<vmem>>, vector<1x8xf32>
    %167 = arith.addf %165, %166 : vector<1x8xf32>
    %168 = vector.shape_cast %167 : vector<1x8xf32> to vector<1x1x8xf32>
    %c0_204 = arith.constant 0 : index
    %c0_205 = arith.constant 0 : index
    %c0_206 = arith.constant 0 : index
    %169 = vector.load %arg13[%c0_204, %c0_205, %c0_206] : memref<1x1x8xf32, #tpu.memory_space<vmem>>, vector<1x1x8xf32>
    tpu.vector_store %arg13[%c0_204, %c0_205, %c0_206], %168 {strides = array<i32>} : memref<1x1x8xf32, #tpu.memory_space<vmem>>, vector<1x1x8xf32>,
    return
  }
  func.func @transform_0(%arg0: i32) -> (i32, i32, i32, i32) {
    %c0_i32 = arith.constant 0 : i32
    %c0_i32_0 = arith.constant 0 : i32
    %c0_i32_1 = arith.constant 0 : i32
    %c0_i32_2 = arith.constant 0 : i32
    return %arg0, %c0_i32, %c0_i32_0, %c0_i32_1 : i32, i32, i32, i32
  }
  func.func @transform_1(%arg0: i32) -> (i32, i32, i32) {
    %c0_i32 = arith.constant 0 : i32
    %c0_i32_0 = arith.constant 0 : i32
    %c0_i32_1 = arith.constant 0 : i32
    %c0_i32_2 = arith.constant 0 : i32
    return %c0_i32, %c0_i32_0, %c0_i32_1 : i32, i32, i32
  }
  func.func @transform_2(%arg0: i32) -> (i32, i32) {
    %c0_i32 = arith.constant 0 : i32
    %c0_i32_0 = arith.constant 0 : i32
    %c0_i32_1 = arith.constant 0 : i32
    return %c0_i32, %c0_i32_0 : i32, i32
  }
  func.func @transform_3(%arg0: i32) -> (i32, i32, i32) {
    %c0_i32 = arith.constant 0 : i32
    %c0_i32_0 = arith.constant 0 : i32
    %c0_i32_1 = arith.constant 0 : i32
    %c0_i32_2 = arith.constant 0 : i32
    return %c0_i32, %c0_i32_0, %c0_i32_1 : i32, i32, i32
  }
  func.func @transform_4(%arg0: i32) -> (i32, i32) {
    %c0_i32 = arith.constant 0 : i32
    %c0_i32_0 = arith.constant 0 : i32
    %c0_i32_1 = arith.constant 0 : i32
    return %c0_i32, %c0_i32_0 : i32, i32
  }
  func.func @transform_5(%arg0: i32) -> (i32, i32, i32) {
    %c0_i32 = arith.constant 0 : i32
    %c0_i32_0 = arith.constant 0 : i32
    %c0_i32_1 = arith.constant 0 : i32
    %c0_i32_2 = arith.constant 0 : i32
    return %c0_i32, %c0_i32_0, %c0_i32_1 : i32, i32, i32
  }
  func.func @transform_6(%arg0: i32) -> (i32, i32) {
    %c0_i32 = arith.constant 0 : i32
    %c0_i32_0 = arith.constant 0 : i32
    %c0_i32_1 = arith.constant 0 : i32
    return %c0_i32, %c0_i32_0 : i32, i32
  }
  func.func @transform_7(%arg0: i32) -> (i32, i32, i32) {
    %c0_i32 = arith.constant 0 : i32
    %c0_i32_0 = arith.constant 0 : i32
    %c0_i32_1 = arith.constant 0 : i32
    %c0_i32_2 = arith.constant 0 : i32
    return %c0_i32, %c0_i32_0, %c0_i32_1 : i32, i32, i32
  }
  func.func @transform_8(%arg0: i32) -> (i32, i32) {
    %c0_i32 = arith.constant 0 : i32
    %c0_i32_0 = arith.constant 0 : i32
    %c0_i32_1 = arith.constant 0 : i32
    return %c0_i32, %c0_i32_0 : i32, i32
  }
  func.func @transform_9(%arg0: i32) -> (i32, i32, i32) {
    %c0_i32 = arith.constant 0 : i32
    %c0_i32_0 = arith.constant 0 : i32
    %c0_i32_1 = arith.constant 0 : i32
    return %arg0, %c0_i32, %c0_i32_0 : i32, i32, i32
  }
  func.func @transform_10(%arg0: i32) -> (i32, i32, i32) {
    %c0_i32 = arith.constant 0 : i32
    %c0_i32_0 = arith.constant 0 : i32
    %c0_i32_1 = arith.constant 0 : i32
    return %arg0, %c0_i32, %c0_i32_0 : i32, i32, i32
  }
  func.func @transform_11(%arg0: i32) -> (i32, i32, i32) {
    %c0_i32 = arith.constant 0 : i32
    %c0_i32_0 = arith.constant 0 : i32
    %c0_i32_1 = arith.constant 0 : i32
    return %arg0, %c0_i32, %c0_i32_0 : i32, i32, i32
  }
  func.func @transform_12(%arg0: i32) -> (i32, i32, i32) {
    %c0_i32 = arith.constant 0 : i32
    %c0_i32_0 = arith.constant 0 : i32
    %c0_i32_1 = arith.constant 0 : i32
    return %arg0, %c0_i32, %c0_i32_0 : i32, i32, i32
  }
}

</mosaic_0001>

<llo_original>
// kernel: tpu_custom_call.1
$region0: #{tpu_custom_call.1}
  #allocation0 [shape = 'u32[]', space=smem, size = 0x4, offset = 0x4, fixed_abs, tag = 'smem constant byte address 0x4 - core index']
  #allocation1 [shape = 'u32[144,128]{1,0:T(1,128)}', space=vmem, size = 0x12000, scoped, tag = 'internal scratch']
  #allocation2 [shape = 'f32[18,18,8]{2,1,0:T(8,128)}', space=vmem, size = 0x36000, scoped, tag = 'scratch operand']
  %s0 = inlined_call_operand.vmem [shape: f32[2,16,16,8], index: 0, kind: input, shape index: {}]
  %s1 = inlined_call_operand.vmem [shape: f32[3,24,8], index: 1, kind: input, shape index: {}]
  %s2 = inlined_call_operand.vmem [shape: f32[1,8], index: 2, kind: input, shape index: {}]
  %s3 = inlined_call_operand.vmem [shape: f32[3,24,8], index: 3, kind: input, shape index: {}]
  %s4 = inlined_call_operand.vmem [shape: f32[1,8], index: 4, kind: input, shape index: {}]
  %s5 = inlined_call_operand.vmem [shape: f32[3,24,8], index: 5, kind: input, shape index: {}]
  %s6 = inlined_call_operand.vmem [shape: f32[1,8], index: 6, kind: input, shape index: {}]
  %s7 = inlined_call_operand.vmem [shape: f32[3,24,8], index: 7, kind: input, shape index: {}]
  %s8 = inlined_call_operand.vmem [shape: f32[1,8], index: 8, kind: input, shape index: {}]
  %s9 = inlined_call_operand.vmem [shape: f32[2,64,8], index: 9, kind: output, shape index: {0}]
  %s10 = inlined_call_operand.vmem [shape: f32[2,16,8], index: 10, kind: output, shape index: {1}]
  %s11 = inlined_call_operand.hbm [shape: f32[2,4,8], index: 11, kind: output, shape index: {2}]
  %s12 = inlined_call_operand.hbm [shape: f32[2,1,8], index: 12, kind: output, shape index: {3}]
  %13 = xla_tuple %s9, %s10, %s11, %s12
  %s14 = sld [smem:[#allocation0]]
  $region93: #{tpu_custom_call.1} parent=0
    _
  %s16 = ssub.s32 1, %s14
  %s17 = scalar_select 0, %s16, %s14
  $region1: #{tpu_custom_call.1} parent=0
    #allocation3 [shape = 'u8[4096]{0}', space=vmem, size = 0x1000, scoped, tag = 'output window, operand 2']
    #allocation4 [shape = 's32[2]{0}', space=sflag, size = 0x8, scoped, tag = 'scoped memory for tpu_custom_call.1']
    #allocation5 [shape = 'u8[1024]{0}', space=vmem, size = 0x400, scoped, tag = 'output window, operand 3']
    #allocation6 [shape = 's32[2]{0}', space=sflag, size = 0x8, scoped, tag = 'scoped memory for tpu_custom_call.1']
    %18 = vsyncpa [#allocation4], 0
    %s19 = scalar_lea.sflag [#allocation4], 1
    %20 = vsyncpa %s19, 0
    %21 = vsyncpa [#allocation6], 0
    %s22 = scalar_lea.sflag [#allocation6], 1
    %23 = vsyncpa %s22, 0
    loop: start=0, step=1, limit=4
    $region2: #{tpu_custom_call.1} parent=1 // loop_pre_header
      _
    $region3: #{tpu_custom_call.1} parent=1 // loop_header
      %s25 = sphi 0, %s29
      %p26 = scmp.ge.s32.totalorder %s25, 4
      %s35 = sphi 0, %s37
      %s38 = sphi 0, %s35
      %s39 = sphi 0, %s38
      %s55 = sphi 0, %s39
      %s59 = sphi 0, %s59
      %s61 = sphi 0, %s59
      %s62 = sphi 0, %s61
      %s76 = sphi 0, %s62
      %s80 = sphi 0, %s80
      %s82 = sphi 0, %s80
      %s83 = sphi 0, %s82
      %s97 = sphi 0, %s83
      %s101 = sphi 0, %s101
      %s103 = sphi 0, %s101
      %s104 = sphi 0, %s103
      %s118 = sphi 0, %s104
      %s122 = sphi 0, %s122
      %s124 = sphi 0, %s122
      %s125 = sphi 0, %s124
      %s139 = sphi 0, %s125
      %s143 = sphi 0, %s143
      %s145 = sphi 0, %s143
      %s146 = sphi 0, %s145
      %s160 = sphi 0, %s146
      %s164 = sphi 0, %s164
      %s166 = sphi 0, %s164
      %s167 = sphi 0, %s166
      %s181 = sphi 0, %s167
      %s185 = sphi 0, %s185
      %s187 = sphi 0, %s185
      %s188 = sphi 0, %s187
      %s202 = sphi 0, %s188
      %s206 = sphi 0, %s206
      %s208 = sphi 0, %s206
      %s209 = sphi 0, %s208
      %s223 = sphi 0, %s209
      %s229 = sphi 0, %s231
      %s232 = sphi 0, %s229
      %s233 = sphi 0, %s232
      %s249 = sphi 0, %s233
      %s255 = sphi 0, %s257
      %s258 = sphi 0, %s255
      %s259 = sphi 0, %s258
      %s275 = sphi 0, %s259
      %s281 = sphi 0, %s283
      %s284 = sphi 0, %s281
      %s285 = sphi 0, %s284
      %s301 = sphi 0, %s285
      %s307 = sphi 0, %s309
      %s310 = sphi 0, %s307
      %s311 = sphi 0, %s310
      %s327 = sphi 0, %s311
    $region4: #{tpu_custom_call.1} parent=1 // loop_header_branch
      %28 = sbr.rel (%p26) target = $region8
    $region5: #{tpu_custom_call.1} parent=1 // loop_body
      %s30 = ssub.s32 %s25, 1
      %s31 = ssub.s32 %s25, 2
      %s32 = sadd.s32 %s25, 1
      %s33 = ssub.s32 %s25, %s32
      %p34 = scmp.eq.s32.totalorder %s33, 0
      %s36 = sadd.s32 %s35, 1
      %s37 = scalar_select %p34, %s35, %s36
      %p40 = pneg %p34
      %p41 = scmp.eq.s32.totalorder %s25, 1
      %p42 = por %p40, %p41
      %p43 = scmp.ne.s32.totalorder %s35, %s38
      %p44 = scmp.eq.s32.totalorder %s25, 0
      %p45 = por %p43, %p44
      %p46 = scmp.ne.s32.totalorder %s35, %s38
      %p47 = scmp.eq.s32.totalorder %s30, 1
      %p48 = por %p46, %p47
      %p49 = scmp.ne.s32.totalorder %s38, %s39
      %p50 = scmp.eq.s32.totalorder %s30, 0
      %p51 = por %p49, %p50
      %p52 = scmp.ne.s32.totalorder %s38, %s39
      %p53 = scmp.eq.s32.totalorder %s31, 1
      %p54 = por %p52, %p53
      %p56 = scmp.ne.s32.totalorder %s39, %s55
      %p57 = scmp.eq.s32.totalorder %s31, 0
      %p58 = por %p56, %p57
      %s60 = sadd.s32 %s59, 1
      %p63 = scmp.eq.s32.totalorder %s25, 1
      %p64 = scmp.ne.s32.totalorder %s59, %s61
      %p65 = scmp.eq.s32.totalorder %s25, 0
      %p66 = por %p64, %p65
      %p67 = scmp.ne.s32.totalorder %s59, %s61
      %p68 = scmp.eq.s32.totalorder %s30, 1
      %p69 = por %p67, %p68
      %p70 = scmp.ne.s32.totalorder %s61, %s62
      %p71 = scmp.eq.s32.totalorder %s30, 0
      %p72 = por %p70, %p71
      %p73 = scmp.ne.s32.totalorder %s61, %s62
      %p74 = scmp.eq.s32.totalorder %s31, 1
      %p75 = por %p73, %p74
      %p77 = scmp.ne.s32.totalorder %s62, %s76
      %p78 = scmp.eq.s32.totalorder %s31, 0
      %p79 = por %p77, %p78
      %s81 = sadd.s32 %s80, 1
      %p84 = scmp.eq.s32.totalorder %s25, 1
      %p85 = scmp.ne.s32.totalorder %s80, %s82
      %p86 = scmp.eq.s32.totalorder %s25, 0
      %p87 = por %p85, %p86
      %p88 = scmp.ne.s32.totalorder %s80, %s82
      %p89 = scmp.eq.s32.totalorder %s30, 1
      %p90 = por %p88, %p89
      %p91 = scmp.ne.s32.totalorder %s82, %s83
      %p92 = scmp.eq.s32.totalorder %s30, 0
      %p93 = por %p91, %p92
      %p94 = scmp.ne.s32.totalorder %s82, %s83
      %p95 = scmp.eq.s32.totalorder %s31, 1
      %p96 = por %p94, %p95
      %p98 = scmp.ne.s32.totalorder %s83, %s97
      %p99 = scmp.eq.s32.totalorder %s31, 0
      %p100 = por %p98, %p99
      %s102 = sadd.s32 %s101, 1
      %p105 = scmp.eq.s32.totalorder %s25, 1
      %p106 = scmp.ne.s32.totalorder %s101, %s103
      %p107 = scmp.eq.s32.totalorder %s25, 0
      %p108 = por %p106, %p107
      %p109 = scmp.ne.s32.totalorder %s101, %s103
      %p110 = scmp.eq.s32.totalorder %s30, 1
      %p111 = por %p109, %p110
      %p112 = scmp.ne.s32.totalorder %s103, %s104
      %p113 = scmp.eq.s32.totalorder %s30, 0
      %p114 = por %p112, %p113
      %p115 = scmp.ne.s32.totalorder %s103, %s104
      %p116 = scmp.eq.s32.totalorder %s31, 1
      %p117 = por %p115, %p116
      %p119 = scmp.ne.s32.totalorder %s104, %s118
      %p120 = scmp.eq.s32.totalorder %s31, 0
      %p121 = por %p119, %p120
      %s123 = sadd.s32 %s122, 1
      %p126 = scmp.eq.s32.totalorder %s25, 1
      %p127 = scmp.ne.s32.totalorder %s122, %s124
      %p128 = scmp.eq.s32.totalorder %s25, 0
      %p129 = por %p127, %p128
      %p130 = scmp.ne.s32.totalorder %s122, %s124
      %p131 = scmp.eq.s32.totalorder %s30, 1
      %p132 = por %p130, %p131
      %p133 = scmp.ne.s32.totalorder %s124, %s125
      %p134 = scmp.eq.s32.totalorder %s30, 0
      %p135 = por %p133, %p134
      %p136 = scmp.ne.s32.totalorder %s124, %s125
      %p137 = scmp.eq.s32.totalorder %s31, 1
      %p138 = por %p136, %p137
      %p140 = scmp.ne.s32.totalorder %s125, %s139
      %p141 = scmp.eq.s32.totalorder %s31, 0
      %p142 = por %p140, %p141
      %s144 = sadd.s32 %s143, 1
      %p147 = scmp.eq.s32.totalorder %s25, 1
      %p148 = scmp.ne.s32.totalorder %s143, %s145
      %p149 = scmp.eq.s32.totalorder %s25, 0
      %p150 = por %p148, %p149
      %p151 = scmp.ne.s32.totalorder %s143, %s145
      %p152 = scmp.eq.s32.totalorder %s30, 1
      %p153 = por %p151, %p152
      %p154 = scmp.ne.s32.totalorder %s145, %s146
      %p155 = scmp.eq.s32.totalorder %s30, 0
      %p156 = por %p154, %p155
      %p157 = scmp.ne.s32.totalorder %s145, %s146
      %p158 = scmp.eq.s32.totalorder %s31, 1
      %p159 = por %p157, %p158
      %p161 = scmp.ne.s32.totalorder %s146, %s160
      %p162 = scmp.eq.s32.totalorder %s31, 0
      %p163 = por %p161, %p162
      %s165 = sadd.s32 %s164, 1
      %p168 = scmp.eq.s32.totalorder %s25, 1
      %p169 = scmp.ne.s32.totalorder %s164, %s166
      %p170 = scmp.eq.s32.totalorder %s25, 0
      %p171 = por %p169, %p170
      %p172 = scmp.ne.s32.totalorder %s164, %s166
      %p173 = scmp.eq.s32.totalorder %s30, 1
      %p174 = por %p172, %p173
      %p175 = scmp.ne.s32.totalorder %s166, %s167
      %p176 = scmp.eq.s32.totalorder %s30, 0
      %p177 = por %p175, %p176
      %p178 = scmp.ne.s32.totalorder %s166, %s167
      %p179 = scmp.eq.s32.totalorder %s31, 1
      %p180 = por %p178, %p179
      %p182 = scmp.ne.s32.totalorder %s167, %s181
      %p183 = scmp.eq.s32.totalorder %s31, 0
      %p184 = por %p182, %p183
      %s186 = sadd.s32 %s185, 1
      %p189 = scmp.eq.s32.totalorder %s25, 1
      %p190 = scmp.ne.s32.totalorder %s185, %s187
      %p191 = scmp.eq.s32.totalorder %s25, 0
      %p192 = por %p190, %p191
      %p193 = scmp.ne.s32.totalorder %s185, %s187
      %p194 = scmp.eq.s32.totalorder %s30, 1
      %p195 = por %p193, %p194
      %p196 = scmp.ne.s32.totalorder %s187, %s188
      %p197 = scmp.eq.s32.totalorder %s30, 0
      %p198 = por %p196, %p197
      %p199 = scmp.ne.s32.totalorder %s187, %s188
      %p200 = scmp.eq.s32.totalorder %s31, 1
      %p201 = por %p199, %p200
      %p203 = scmp.ne.s32.totalorder %s188, %s202
      %p204 = scmp.eq.s32.totalorder %s31, 0
      %p205 = por %p203, %p204
      %s207 = sadd.s32 %s206, 1
      %p210 = scmp.eq.s32.totalorder %s25, 1
      %p211 = scmp.ne.s32.totalorder %s206, %s208
      %p212 = scmp.eq.s32.totalorder %s25, 0
      %p213 = por %p211, %p212
      %p214 = scmp.ne.s32.totalorder %s206, %s208
      %p215 = scmp.eq.s32.totalorder %s30, 1
      %p216 = por %p214, %p215
      %p217 = scmp.ne.s32.totalorder %s208, %s209
      %p218 = scmp.eq.s32.totalorder %s30, 0
      %p219 = por %p217, %p218
      %p220 = scmp.ne.s32.totalorder %s208, %s209
      %p221 = scmp.eq.s32.totalorder %s31, 1
      %p222 = por %p220, %p221
      %p224 = scmp.ne.s32.totalorder %s209, %s223
      %p225 = scmp.eq.s32.totalorder %s31, 0
      %p226 = por %p224, %p225
      %s227 = ssub.s32 %s25, %s32
      %p228 = scmp.eq.s32.totalorder %s227, 0
      %s230 = sadd.s32 %s229, 1
      %s231 = scalar_select %p228, %s229, %s230
      %p234 = pneg %p228
      %p235 = scmp.eq.s32.totalorder %s25, 1
      %p236 = por %p234, %p235
      %p237 = scmp.ne.s32.totalorder %s229, %s232
      %p238 = scmp.eq.s32.totalorder %s25, 0
      %p239 = por %p237, %p238
      %p240 = scmp.ne.s32.totalorder %s229, %s232
      %p241 = scmp.eq.s32.totalorder %s30, 1
      %p242 = por %p240, %p241
      %p243 = scmp.ne.s32.totalorder %s232, %s233
      %p244 = scmp.eq.s32.totalorder %s30, 0
      %p245 = por %p243, %p244
      %p246 = scmp.ne.s32.totalorder %s232, %s233
      %p247 = scmp.eq.s32.totalorder %s31, 1
      %p248 = por %p246, %p247
      %p250 = scmp.ne.s32.totalorder %s233, %s249
      %p251 = scmp.eq.s32.totalorder %s31, 0
      %p252 = por %p250, %p251
      %s253 = ssub.s32 %s25, %s32
      %p254 = scmp.eq.s32.totalorder %s253, 0
      %s256 = sadd.s32 %s255, 1
      %s257 = scalar_select %p254, %s255, %s256
      %p260 = pneg %p254
      %p261 = scmp.eq.s32.totalorder %s25, 1
      %p262 = por %p260, %p261
      %p263 = scmp.ne.s32.totalorder %s255, %s258
      %p264 = scmp.eq.s32.totalorder %s25, 0
      %p265 = por %p263, %p264
      %p266 = scmp.ne.s32.totalorder %s255, %s258
      %p267 = scmp.eq.s32.totalorder %s30, 1
      %p268 = por %p266, %p267
      %p269 = scmp.ne.s32.totalorder %s258, %s259
      %p270 = scmp.eq.s32.totalorder %s30, 0
      %p271 = por %p269, %p270
      %p272 = scmp.ne.s32.totalorder %s258, %s259
      %p273 = scmp.eq.s32.totalorder %s31, 1
      %p274 = por %p272, %p273
      %p276 = scmp.ne.s32.totalorder %s259, %s275
      %p277 = scmp.eq.s32.totalorder %s31, 0
      %p278 = por %p276, %p277
      %s279 = ssub.s32 %s25, %s32
      %p280 = scmp.eq.s32.totalorder %s279, 0
      %s282 = sadd.s32 %s281, 1
      %s283 = scalar_select %p280, %s281, %s282
      %p286 = pneg %p280
      %p287 = scmp.eq.s32.totalorder %s25, 1
      %p288 = por %p286, %p287
      %p289 = scmp.ne.s32.totalorder %s281, %s284
      %p290 = scmp.eq.s32.totalorder %s25, 0
      %p291 = por %p289, %p290
      %p292 = scmp.ne.s32.totalorder %s281, %s284
      %p293 = scmp.eq.s32.totalorder %s30, 1
      %p294 = por %p292, %p293
      %p295 = scmp.ne.s32.totalorder %s284, %s285
      %p296 = scmp.eq.s32.totalorder %s30, 0
      %p297 = por %p295, %p296
      %p298 = scmp.ne.s32.totalorder %s284, %s285
      %p299 = scmp.eq.s32.totalorder %s31, 1
      %p300 = por %p298, %p299
      %p302 = scmp.ne.s32.totalorder %s285, %s301
      %p303 = scmp.eq.s32.totalorder %s31, 0
      %p304 = por %p302, %p303
      %s305 = ssub.s32 %s25, %s32
      %p306 = scmp.eq.s32.totalorder %s305, 0
      %s308 = sadd.s32 %s307, 1
      %s309 = scalar_select %p306, %s307, %s308
      %p312 = pneg %p306
      %p313 = scmp.eq.s32.totalorder %s25, 1
      %p314 = por %p312, %p313
      %p315 = scmp.ne.s32.totalorder %s307, %s310
      %p316 = scmp.eq.s32.totalorder %s25, 0
      %p317 = por %p315, %p316
      %p318 = scmp.ne.s32.totalorder %s307, %s310
      %p319 = scmp.eq.s32.totalorder %s30, 1
      %p320 = por %p318, %p319
      %p321 = scmp.ne.s32.totalorder %s310, %s311
      %p322 = scmp.eq.s32.totalorder %s30, 0
      %p323 = por %p321, %p322
      %p324 = scmp.ne.s32.totalorder %s310, %s311
      %p325 = scmp.eq.s32.totalorder %s31, 1
      %p326 = por %p324, %p325
      %p328 = scmp.ne.s32.totalorder %s311, %s327
      %p329 = scmp.eq.s32.totalorder %s31, 0
      %p330 = por %p328, %p329
      %p331 = scmp.le.s32.totalorder 1, %s25
      %p332 = scmp.lt.s32.totalorder %s25, 3
      %p333 = pnand %p331, %p332
      %p334 = pneg %p333
      // Predicated region
      $region9: #{tpu_custom_call.1} parent=5 // pred_check
        _
      $region10: #{tpu_custom_call.1} parent=5 // pred_check_branch
        %336 = sbr.rel (%p333) target = $region12
      $region11: #{tpu_custom_call.1} parent=5 // pred_region
        %s337 = ssub.s32 %s25, 1
        // Predicated region
        $region13: #{tpu_custom_call.1} parent=11 // pred_check
          %p338 = pneg %p72
        $region14: #{tpu_custom_call.1} parent=11 // pred_check_branch
          %340 = sbr.rel (%p338) target = $region16
        $region15: #{tpu_custom_call.1} parent=11 // pred_region
          _
        $region16: #{tpu_custom_call.1} parent=11 // pred_fallthru
          _
        // Predicated region
        $region17: #{tpu_custom_call.1} parent=11 // pred_check
          %p341 = pneg %p93
        $region18: #{tpu_custom_call.1} parent=11 // pred_check_branch
          %343 = sbr.rel (%p341) target = $region20
        $region19: #{tpu_custom_call.1} parent=11 // pred_region
          _
        $region20: #{tpu_custom_call.1} parent=11 // pred_fallthru
          _
        // Predicated region
        $region21: #{tpu_custom_call.1} parent=11 // pred_check
          %p344 = pneg %p114
        $region22: #{tpu_custom_call.1} parent=11 // pred_check_branch
          %346 = sbr.rel (%p344) target = $region24
        $region23: #{tpu_custom_call.1} parent=11 // pred_region
          _
        $region24: #{tpu_custom_call.1} parent=11 // pred_fallthru
          _
        // Predicated region
        $region25: #{tpu_custom_call.1} parent=11 // pred_check
          %p347 = pneg %p135
        $region26: #{tpu_custom_call.1} parent=11 // pred_check_branch
          %349 = sbr.rel (%p347) target = $region28
        $region27: #{tpu_custom_call.1} parent=11 // pred_region
          _
        $region28: #{tpu_custom_call.1} parent=11 // pred_fallthru
          _
        // Predicated region
        $region29: #{tpu_custom_call.1} parent=11 // pred_check
          %p350 = pneg %p156
        $region30: #{tpu_custom_call.1} parent=11 // pred_check_branch
          %352 = sbr.rel (%p350) target = $region32
        $region31: #{tpu_custom_call.1} parent=11 // pred_region
          _
        $region32: #{tpu_custom_call.1} parent=11 // pred_fallthru
          _
        // Predicated region
        $region33: #{tpu_custom_call.1} parent=11 // pred_check
          %p353 = pneg %p177
        $region34: #{tpu_custom_call.1} parent=11 // pred_check_branch
          %355 = sbr.rel (%p353) target = $region36
        $region35: #{tpu_custom_call.1} parent=11 // pred_region
          _
        $region36: #{tpu_custom_call.1} parent=11 // pred_fallthru
          _
        // Predicated region
        $region37: #{tpu_custom_call.1} parent=11 // pred_check
          %p356 = pneg %p198
        $region38: #{tpu_custom_call.1} parent=11 // pred_check_branch
          %358 = sbr.rel (%p356) target = $region40
        $region39: #{tpu_custom_call.1} parent=11 // pred_region
          _
        $region40: #{tpu_custom_call.1} parent=11 // pred_fallthru
          _
        // Predicated region
        $region41: #{tpu_custom_call.1} parent=11 // pred_check
          %p359 = pneg %p219
        $region42: #{tpu_custom_call.1} parent=11 // pred_check_branch
          %361 = sbr.rel (%p359) target = $region44
        $region43: #{tpu_custom_call.1} parent=11 // pred_region
          _
        $region44: #{tpu_custom_call.1} parent=11 // pred_fallthru
          _
      $region12: #{tpu_custom_call.1} parent=5 // pred_fallthru
        _
      %p362 = scmp.lt.s32.totalorder %s25, 2
      // Predicated region
      $region45: #{tpu_custom_call.1} parent=5 // pred_check
        %p363 = pneg %p362
      $region46: #{tpu_custom_call.1} parent=5 // pred_check_branch
        %365 = sbr.rel (%p363) target = $region48
      $region47: #{tpu_custom_call.1} parent=5 // pred_region
        // Predicated region
        $region49: #{tpu_custom_call.1} parent=47 // pred_check
          %p366 = pneg %p45
        $region50: #{tpu_custom_call.1} parent=47 // pred_check_branch
          %368 = sbr.rel (%p366) target = $region52
        $region51: #{tpu_custom_call.1} parent=47 // pred_region
          %p369 = scmp.lt.s32.totalorder %s25, 1
          %s370 = scalar_select %p369, %s25, 1
          %s371 = smul.addr %s370, 32
          %s372 = smul.addr %s371, 8
          %s373 = scalar_lea.vmem %s0, %s372
        $region52: #{tpu_custom_call.1} parent=47 // pred_fallthru
          _
      $region48: #{tpu_custom_call.1} parent=5 // pred_fallthru
        _
      %p374 = scmp.le.s32.totalorder 1, %s25
      %p375 = scmp.lt.s32.totalorder %s25, 3
      %p376 = pnand %p374, %p375
      %p377 = pneg %p376
      // Predicated region
      $region53: #{tpu_custom_call.1} parent=5 // pred_check
        _
      $region54: #{tpu_custom_call.1} parent=5 // pred_check_branch
        %379 = sbr.rel (%p376) target = $region56
      $region55: #{tpu_custom_call.1} parent=5 // pred_region
        %s380 = ssub.s32 %s25, 1
        %p381 = scmp.lt.s32.totalorder %s30, 1
        %s382 = scalar_select %p381, %s30, 1
        %s383 = smul.addr %s382, 32
        %s384 = smul.addr %s383, 8
        %s385 = scalar_lea.vmem %s0, %s384
        %p386 = pneg %p51
        %p387 = pneg %p48
        %p388 = pneg %p72
        %p389 = pneg %p69
        %p390 = pneg %p93
        %p391 = pneg %p90
        %p392 = pneg %p114
        %p393 = pneg %p111
        %p394 = pneg %p135
        %p395 = pneg %p132
        %p396 = pneg %p156
        %p397 = pneg %p153
        %p398 = pneg %p177
        %p399 = pneg %p174
        %p400 = pneg %p198
        %p401 = pneg %p195
        %p402 = pneg %p219
        %p403 = pneg %p216
        %p404 = pneg %p245
        %p405 = pneg %p242
        %p406 = scmp.lt.s32.totalorder %s30, 1
        %s407 = scalar_select %p406, %s30, 1
        %s408 = smul.addr %s407, 8
        %s409 = smul.addr %s408, 8
        %s410 = scalar_lea.vmem %s9, %s409
        %p411 = pneg %p271
        %p412 = pneg %p268
        %p413 = scmp.lt.s32.totalorder %s30, 1
        %s414 = scalar_select %p413, %s30, 1
        %s415 = smul.addr %s414, 2
        %s416 = smul.addr %s415, 8
        %s417 = scalar_lea.vmem %s10, %s416
        %p418 = pneg %p297
        %p419 = pneg %p294
        %s420 = sand.u32 %s284, 1
        %s421 = scalar_lea.sflag [#allocation4], %s420
        %s422 = sand.u32 %s284, 1
        %s423 = smul.addr %s422, 4
        %s424 = scalar_lea.vmem [#allocation3], %s423
        %p425 = pneg %p323
        %p426 = pneg %p320
        %s427 = sand.u32 %s310, 1
        %s428 = scalar_lea.sflag [#allocation6], %s427
        %s429 = sand.u32 %s310, 1
        %s430 = scalar_lea.vmem [#allocation5], %s429
        %p431 = scmp.lt.s32.totalorder %s30, 1
        %s432 = scalar_select %p431, %s30, 1
        %s433 = smul.addr %s432, 32
        %s434 = smul.addr %s433, 8
        %s435 = scalar_lea.vmem %s0, %s434
        %p436 = scmp.lt.s32.totalorder %s30, 1
        %s437 = scalar_select %p436, %s30, 1
        %s438 = smul.addr %s437, 8
        %s439 = smul.addr %s438, 8
        %s440 = scalar_lea.vmem %s9, %s439
        %p441 = scmp.lt.s32.totalorder %s30, 1
        %s442 = scalar_select %p441, %s30, 1
        %s443 = smul.addr %s442, 2
        %s444 = smul.addr %s443, 8
        %s445 = scalar_lea.vmem %s10, %s444
        %v446 = vld [vmem:[%s435] sm:$0xff]
        %v447 = vld [vmem:[%s435 + $0x8] sm:$0xff]
        %v448 = vld [vmem:[%s435 + $0x10] sm:$0xff]
        %v449 = vld [vmem:[%s435 + $0x18] sm:$0xff]
        %v450 = vld [vmem:[%s435 + $0x20] sm:$0xff]
        %v451 = vld [vmem:[%s435 + $0x28] sm:$0xff]
        %v452 = vld [vmem:[%s435 + $0x30] sm:$0xff]
        %v453 = vld [vmem:[%s435 + $0x38] sm:$0xff]
        %v454 = vld [vmem:[%s435 + $0x40] sm:$0xff]
        %v455 = vld [vmem:[%s435 + $0x48] sm:$0xff]
        %v456 = vld [vmem:[%s435 + $0x50] sm:$0xff]
        %v457 = vld [vmem:[%s435 + $0x58] sm:$0xff]
        %v458 = vld [vmem:[%s435 + $0x60] sm:$0xff]
        %v459 = vld [vmem:[%s435 + $0x68] sm:$0xff]
        %v460 = vld [vmem:[%s435 + $0x70] sm:$0xff]
        %v461 = vld [vmem:[%s435 + $0x78] sm:$0xff]
        %v462 = vld [vmem:[%s435 + $0x80] sm:$0xff]
        %v463 = vld [vmem:[%s435 + $0x88] sm:$0xff]
        %v464 = vld [vmem:[%s435 + $0x90] sm:$0xff]
        %v465 = vld [vmem:[%s435 + $0x98] sm:$0xff]
        %v466 = vld [vmem:[%s435 + $0xa0] sm:$0xff]
        %v467 = vld [vmem:[%s435 + $0xa8] sm:$0xff]
        %v468 = vld [vmem:[%s435 + $0xb0] sm:$0xff]
        %v469 = vld [vmem:[%s435 + $0xb8] sm:$0xff]
        %v470 = vld [vmem:[%s435 + $0xc0] sm:$0xff]
        %v471 = vld [vmem:[%s435 + $0xc8] sm:$0xff]
        %v472 = vld [vmem:[%s435 + $0xd0] sm:$0xff]
        %v473 = vld [vmem:[%s435 + $0xd8] sm:$0xff]
        %v474 = vld [vmem:[%s435 + $0xe0] sm:$0xff]
        %v475 = vld [vmem:[%s435 + $0xe8] sm:$0xff]
        %v476 = vld [vmem:[%s435 + $0xf0] sm:$0xff]
        %v477 = vld [vmem:[%s435 + $0xf8] sm:$0xff]
        %vm478 = vcmask 64512
        %479 = vst.msk [vmem:[#allocation2] sm:$0xff] %vm478, 0.0
        %480 = vst.msk [vmem:[#allocation2 + $0x8] sm:$0xff] %vm478, 0.0
        %vm481 = vcmask 58368
        %482 = vst.msk [vmem:[#allocation2 + $0x10] sm:$0x3] %vm481, 0.0
        %483 = vst.msk [vmem:[#allocation2 + $0x18] sm:$0xff] %vm478, 0.0
        %484 = vst.msk [vmem:[#allocation2 + $0x20] sm:$0xff] %vm478, 0.0
        %485 = vst.msk [vmem:[#allocation2 + $0x28] sm:$0x3] %vm481, 0.0
        %486 = vst.msk [vmem:[#allocation2 + $0x30] sm:$0xff] %vm478, 0.0
        %487 = vst.msk [vmem:[#allocation2 + $0x38] sm:$0xff] %vm478, 0.0
        %488 = vst.msk [vmem:[#allocation2 + $0x40] sm:$0x3] %vm481, 0.0
        %489 = vst.msk [vmem:[#allocation2 + $0x48] sm:$0xff] %vm478, 0.0
        %490 = vst.msk [vmem:[#allocation2 + $0x50] sm:$0xff] %vm478, 0.0
        %491 = vst.msk [vmem:[#allocation2 + $0x58] sm:$0x3] %vm481, 0.0
        %492 = vst.msk [vmem:[#allocation2 + $0x60] sm:$0xff] %vm478, 0.0
        %493 = vst.msk [vmem:[#allocation2 + $0x68] sm:$0xff] %vm478, 0.0
        %494 = vst.msk [vmem:[#allocation2 + $0x70] sm:$0x3] %vm481, 0.0
        %495 = vst.msk [vmem:[#allocation2 + $0x78] sm:$0xff] %vm478, 0.0
        %496 = vst.msk [vmem:[#allocation2 + $0x80] sm:$0xff] %vm478, 0.0
        %497 = vst.msk [vmem:[#allocation2 + $0x88] sm:$0x3] %vm481, 0.0
        %498 = vst.msk [vmem:[#allocation2 + $0x90] sm:$0xff] %vm478, 0.0
        %499 = vst.msk [vmem:[#allocation2 + $0x98] sm:$0xff] %vm478, 0.0
        %500 = vst.msk [vmem:[#allocation2 + $0xa0] sm:$0x3] %vm481, 0.0
        %501 = vst.msk [vmem:[#allocation2 + $0xa8] sm:$0xff] %vm478, 0.0
        %502 = vst.msk [vmem:[#allocation2 + $0xb0] sm:$0xff] %vm478, 0.0
        %503 = vst.msk [vmem:[#allocation2 + $0xb8] sm:$0x3] %vm481, 0.0
        %504 = vst.msk [vmem:[#allocation2 + $0xc0] sm:$0xff] %vm478, 0.0
        %505 = vst.msk [vmem:[#allocation2 + $0xc8] sm:$0xff] %vm478, 0.0
        %506 = vst.msk [vmem:[#allocation2 + $0xd0] sm:$0x3] %vm481, 0.0
        %507 = vst.msk [vmem:[#allocation2 + $0xd8] sm:$0xff] %vm478, 0.0
        %508 = vst.msk [vmem:[#allocation2 + $0xe0] sm:$0xff] %vm478, 0.0
        %509 = vst.msk [vmem:[#allocation2 + $0xe8] sm:$0x3] %vm481, 0.0
        %510 = vst.msk [vmem:[#allocation2 + $0xf0] sm:$0xff] %vm478, 0.0
        %511 = vst.msk [vmem:[#allocation2 + $0xf8] sm:$0xff] %vm478, 0.0
        %512 = vst.msk [vmem:[#allocation2 + $0x100] sm:$0x3] %vm481, 0.0
        %513 = vst.msk [vmem:[#allocation2 + $0x108] sm:$0xff] %vm478, 0.0
        %514 = vst.msk [vmem:[#allocation2 + $0x110] sm:$0xff] %vm478, 0.0
        %515 = vst.msk [vmem:[#allocation2 + $0x118] sm:$0x3] %vm481, 0.0
        %516 = vst.msk [vmem:[#allocation2 + $0x120] sm:$0xff] %vm478, 0.0
        %517 = vst.msk [vmem:[#allocation2 + $0x128] sm:$0xff] %vm478, 0.0
        %518 = vst.msk [vmem:[#allocation2 + $0x130] sm:$0x3] %vm481, 0.0
        %519 = vst.msk [vmem:[#allocation2 + $0x138] sm:$0xff] %vm478, 0.0
        %520 = vst.msk [vmem:[#allocation2 + $0x140] sm:$0xff] %vm478, 0.0
        %521 = vst.msk [vmem:[#allocation2 + $0x148] sm:$0x3] %vm481, 0.0
        %522 = vst.msk [vmem:[#allocation2 + $0x150] sm:$0xff] %vm478, 0.0
        %523 = vst.msk [vmem:[#allocation2 + $0x158] sm:$0xff] %vm478, 0.0
        %524 = vst.msk [vmem:[#allocation2 + $0x160] sm:$0x3] %vm481, 0.0
        %525 = vst.msk [vmem:[#allocation2 + $0x168] sm:$0xff] %vm478, 0.0
        %526 = vst.msk [vmem:[#allocation2 + $0x170] sm:$0xff] %vm478, 0.0
        %527 = vst.msk [vmem:[#allocation2 + $0x178] sm:$0x3] %vm481, 0.0
        %528 = vst.msk [vmem:[#allocation2 + $0x180] sm:$0xff] %vm478, 0.0
        %529 = vst.msk [vmem:[#allocation2 + $0x188] sm:$0xff] %vm478, 0.0
        %530 = vst.msk [vmem:[#allocation2 + $0x190] sm:$0x3] %vm481, 0.0
        %531 = vst.msk [vmem:[#allocation2 + $0x198] sm:$0xff] %vm478, 0.0
        %532 = vst.msk [vmem:[#allocation2 + $0x1a0] sm:$0xff] %vm478, 0.0
        %533 = vst.msk [vmem:[#allocation2 + $0x1a8] sm:$0x3] %vm481, 0.0
        %s534 = scalar_lea.vmem [#allocation2], 24
        %535 = vst.msk [vmem:[%s534 + $0x1] sm:$0xff] %vm478, %v446
        %536 = vst.msk [vmem:[%s534 + $0x9] sm:$0xff] %vm478, %v447
        %537 = vst.msk [vmem:[%s534 + $0x19] sm:$0xff] %vm478, %v448
        %538 = vst.msk [vmem:[%s534 + $0x21] sm:$0xff] %vm478, %v449
        %539 = vst.msk [vmem:[%s534 + $0x31] sm:$0xff] %vm478, %v450
        %540 = vst.msk [vmem:[%s534 + $0x39] sm:$0xff] %vm478, %v451
        %541 = vst.msk [vmem:[%s534 + $0x49] sm:$0xff] %vm478, %v452
        %542 = vst.msk [vmem:[%s534 + $0x51] sm:$0xff] %vm478, %v453
        %543 = vst.msk [vmem:[%s534 + $0x61] sm:$0xff] %vm478, %v454
        %544 = vst.msk [vmem:[%s534 + $0x69] sm:$0xff] %vm478, %v455
        %545 = vst.msk [vmem:[%s534 + $0x79] sm:$0xff] %vm478, %v456
        %546 = vst.msk [vmem:[%s534 + $0x81] sm:$0xff] %vm478, %v457
        %547 = vst.msk [vmem:[%s534 + $0x91] sm:$0xff] %vm478, %v458
        %548 = vst.msk [vmem:[%s534 + $0x99] sm:$0xff] %vm478, %v459
        %549 = vst.msk [vmem:[%s534 + $0xa9] sm:$0xff] %vm478, %v460
        %550 = vst.msk [vmem:[%s534 + $0xb1] sm:$0xff] %vm478, %v461
        %551 = vst.msk [vmem:[%s534 + $0xc1] sm:$0xff] %vm478, %v462
        %552 = vst.msk [vmem:[%s534 + $0xc9] sm:$0xff] %vm478, %v463
        %553 = vst.msk [vmem:[%s534 + $0xd9] sm:$0xff] %vm478, %v464
        %554 = vst.msk [vmem:[%s534 + $0xe1] sm:$0xff] %vm478, %v465
        %555 = vst.msk [vmem:[%s534 + $0xf1] sm:$0xff] %vm478, %v466
        %556 = vst.msk [vmem:[%s534 + $0xf9] sm:$0xff] %vm478, %v467
        %557 = vst.msk [vmem:[%s534 + $0x109] sm:$0xff] %vm478, %v468
        %558 = vst.msk [vmem:[%s534 + $0x111] sm:$0xff] %vm478, %v469
        %559 = vst.msk [vmem:[%s534 + $0x121] sm:$0xff] %vm478, %v470
        %560 = vst.msk [vmem:[%s534 + $0x129] sm:$0xff] %vm478, %v471
        %561 = vst.msk [vmem:[%s534 + $0x139] sm:$0xff] %vm478, %v472
        %562 = vst.msk [vmem:[%s534 + $0x141] sm:$0xff] %vm478, %v473
        %563 = vst.msk [vmem:[%s534 + $0x151] sm:$0xff] %vm478, %v474
        %564 = vst.msk [vmem:[%s534 + $0x159] sm:$0xff] %vm478, %v475
        %565 = vst.msk [vmem:[%s534 + $0x169] sm:$0xff] %vm478, %v476
        %566 = vst.msk [vmem:[%s534 + $0x171] sm:$0xff] %vm478, %v477
        %v567 = vld [vmem:[#allocation2] ss:$2 sm:$0xff]
        %s568 = scalar_lea.vmem [#allocation2], 48
        %v569 = vld [vmem:[%s568] ss:$2 sm:$0xff]
        %s570 = scalar_lea.vmem [#allocation2], 96
        %v571 = vld [vmem:[%s570] ss:$2 sm:$0xff]
        %s572 = scalar_lea.vmem [#allocation2], 144
        %v573 = vld [vmem:[%s572] ss:$2 sm:$0xff]
        %s574 = scalar_lea.vmem [#allocation2], 192
        %v575 = vld [vmem:[%s574] ss:$2 sm:$0xff]
        %s576 = scalar_lea.vmem [#allocation2], 240
        %v577 = vld [vmem:[%s576] ss:$2 sm:$0xff]
        %s578 = scalar_lea.vmem [#allocation2], 288
        %v579 = vld [vmem:[%s578] ss:$2 sm:$0xff]
        %s580 = scalar_lea.vmem [#allocation2], 336
        %v581 = vld [vmem:[%s580] ss:$2 sm:$0xff]
        %s582 = scalar_lea.vmem [#allocation2], 1
        %v583 = vld [vmem:[%s582] ss:$2 sm:$0xff]
        %s584 = scalar_lea.vmem [#allocation2], 49
        %v585 = vld [vmem:[%s584] ss:$2 sm:$0xff]
        %s586 = scalar_lea.vmem [#allocation2], 97
        %v587 = vld [vmem:[%s586] ss:$2 sm:$0xff]
        %s588 = scalar_lea.vmem [#allocation2], 145
        %v589 = vld [vmem:[%s588] ss:$2 sm:$0xff]
        %s590 = scalar_lea.vmem [#allocation2], 193
        %v591 = vld [vmem:[%s590] ss:$2 sm:$0xff]
        %s592 = scalar_lea.vmem [#allocation2], 241
        %v593 = vld [vmem:[%s592] ss:$2 sm:$0xff]
        %s594 = scalar_lea.vmem [#allocation2], 289
        %v595 = vld [vmem:[%s594] ss:$2 sm:$0xff]
        %s596 = scalar_lea.vmem [#allocation2], 337
        %v597 = vld [vmem:[%s596] ss:$2 sm:$0xff]
        %s598 = scalar_lea.vmem [#allocation2], 2
        %v599 = vld [vmem:[%s598] ss:$2 sm:$0xff]
        %s600 = scalar_lea.vmem [#allocation2], 50
        %v601 = vld [vmem:[%s600] ss:$2 sm:$0xff]
        %s602 = scalar_lea.vmem [#allocation2], 98
        %v603 = vld [vmem:[%s602] ss:$2 sm:$0xff]
        %s604 = scalar_lea.vmem [#allocation2], 146
        %v605 = vld [vmem:[%s604] ss:$2 sm:$0xff]
        %s606 = scalar_lea.vmem [#allocation2], 194
        %v607 = vld [vmem:[%s606] ss:$2 sm:$0xff]
        %s608 = scalar_lea.vmem [#allocation2], 242
        %v609 = vld [vmem:[%s608] ss:$2 sm:$0xff]
        %s610 = scalar_lea.vmem [#allocation2], 290
        %v611 = vld [vmem:[%s610] ss:$2 sm:$0xff]
        %s612 = scalar_lea.vmem [#allocation2], 338
        %v613 = vld [vmem:[%s612] ss:$2 sm:$0xff]
        %622 = vrot.lane.b32.xlu0 %v583, 8
        %v623 = vpop.permute.xlu0 %622
        %624 = vrot.lane.b32.xlu0 %v585, 8
        %v625 = vpop.permute.xlu0 %624
        %626 = vrot.lane.b32.xlu0 %v587, 8
        %v627 = vpop.permute.xlu0 %626
        %628 = vrot.lane.b32.xlu0 %v589, 8
        %v629 = vpop.permute.xlu0 %628
        %630 = vrot.lane.b32.xlu0 %v591, 8
        %v631 = vpop.permute.xlu0 %630
        %632 = vrot.lane.b32.xlu0 %v593, 8
        %v633 = vpop.permute.xlu0 %632
        %634 = vrot.lane.b32.xlu0 %v595, 8
        %v635 = vpop.permute.xlu0 %634
        %636 = vrot.lane.b32.xlu0 %v597, 8
        %v637 = vpop.permute.xlu0 %636
        %654 = vrot.lane.b32.xlu0 %v599, 16
        %v655 = vpop.permute.xlu0 %654
        %656 = vrot.lane.b32.xlu0 %v601, 16
        %v657 = vpop.permute.xlu0 %656
        %658 = vrot.lane.b32.xlu0 %v603, 16
        %v659 = vpop.permute.xlu0 %658
        %660 = vrot.lane.b32.xlu0 %v605, 16
        %v661 = vpop.permute.xlu0 %660
        %662 = vrot.lane.b32.xlu0 %v607, 16
        %v663 = vpop.permute.xlu0 %662
        %664 = vrot.lane.b32.xlu0 %v609, 16
        %v665 = vpop.permute.xlu0 %664
        %666 = vrot.lane.b32.xlu0 %v611, 16
        %v667 = vpop.permute.xlu0 %666
        %668 = vrot.lane.b32.xlu0 %v613, 16
        %v669 = vpop.permute.xlu0 %668
        %v678 = vsel %vm478, %v567, %v623
        %v679 = vsel %vm478, %v569, %v625
        %v680 = vsel %vm478, %v571, %v627
        %v681 = vsel %vm478, %v573, %v629
        %v682 = vsel %vm478, %v575, %v631
        %v683 = vsel %vm478, %v577, %v633
        %v684 = vsel %vm478, %v579, %v635
        %v685 = vsel %vm478, %v581, %v637
        %vm686 = vcmask 130048
        %v687 = vsel %vm686, %v678, %v655
        %v688 = vsel %vm686, %v679, %v657
        %v689 = vsel %vm686, %v680, %v659
        %v690 = vsel %vm686, %v681, %v661
        %v691 = vsel %vm686, %v682, %v663
        %v692 = vsel %vm686, %v683, %v665
        %v693 = vsel %vm686, %v684, %v667
        %v694 = vsel %vm686, %v685, %v669
        %v695 = vld [vmem:[%s1] sm:$0xff]
        %v696 = vld [vmem:[%s1 + $0x8] sm:$0xff]
        %v697 = vld [vmem:[%s1 + $0x10] sm:$0xff]
        %v698 = vld [vmem:[%s534] ss:$2 sm:$0xff]
        %s699 = scalar_lea.vmem %s534, 48 [#allocation2]
        %v700 = vld [vmem:[%s699] ss:$2 sm:$0xff]
        %s701 = scalar_lea.vmem %s534, 96 [#allocation2]
        %v702 = vld [vmem:[%s701] ss:$2 sm:$0xff]
        %s703 = scalar_lea.vmem %s534, 144 [#allocation2]
        %v704 = vld [vmem:[%s703] ss:$2 sm:$0xff]
        %s705 = scalar_lea.vmem %s534, 192 [#allocation2]
        %v706 = vld [vmem:[%s705] ss:$2 sm:$0xff]
        %s707 = scalar_lea.vmem %s534, 240 [#allocation2]
        %v708 = vld [vmem:[%s707] ss:$2 sm:$0xff]
        %s709 = scalar_lea.vmem %s534, 288 [#allocation2]
        %v710 = vld [vmem:[%s709] ss:$2 sm:$0xff]
        %s711 = scalar_lea.vmem %s534, 336 [#allocation2]
        %v712 = vld [vmem:[%s711] ss:$2 sm:$0xff]
        %s713 = scalar_lea.vmem %s534, 1 [#allocation2]
        %v714 = vld [vmem:[%s713] ss:$2 sm:$0xff]
        %s715 = scalar_lea.vmem %s534, 49 [#allocation2]
        %v716 = vld [vmem:[%s715] ss:$2 sm:$0xff]
        %s717 = scalar_lea.vmem %s534, 97 [#allocation2]
        %v718 = vld [vmem:[%s717] ss:$2 sm:$0xff]
        %s719 = scalar_lea.vmem %s534, 145 [#allocation2]
        %v720 = vld [vmem:[%s719] ss:$2 sm:$0xff]
        %s721 = scalar_lea.vmem %s534, 193 [#allocation2]
        %v722 = vld [vmem:[%s721] ss:$2 sm:$0xff]
        %s723 = scalar_lea.vmem %s534, 241 [#allocation2]
        %v724 = vld [vmem:[%s723] ss:$2 sm:$0xff]
        %s725 = scalar_lea.vmem %s534, 289 [#allocation2]
        %v726 = vld [vmem:[%s725] ss:$2 sm:$0xff]
        %s727 = scalar_lea.vmem %s534, 337 [#allocation2]
        %v728 = vld [vmem:[%s727] ss:$2 sm:$0xff]
        %s729 = scalar_lea.vmem %s534, 2 [#allocation2]
        %v730 = vld [vmem:[%s729] ss:$2 sm:$0xff]
        %s731 = scalar_lea.vmem %s534, 50 [#allocation2]
        %v732 = vld [vmem:[%s731] ss:$2 sm:$0xff]
        %s733 = scalar_lea.vmem %s534, 98 [#allocation2]
        %v734 = vld [vmem:[%s733] ss:$2 sm:$0xff]
        %s735 = scalar_lea.vmem %s534, 146 [#allocation2]
        %v736 = vld [vmem:[%s735] ss:$2 sm:$0xff]
        %s737 = scalar_lea.vmem %s534, 194 [#allocation2]
        %v738 = vld [vmem:[%s737] ss:$2 sm:$0xff]
        %s739 = scalar_lea.vmem %s534, 242 [#allocation2]
        %v740 = vld [vmem:[%s739] ss:$2 sm:$0xff]
        %s741 = scalar_lea.vmem %s534, 290 [#allocation2]
        %v742 = vld [vmem:[%s741] ss:$2 sm:$0xff]
        %s743 = scalar_lea.vmem %s534, 338 [#allocation2]
        %v744 = vld [vmem:[%s743] ss:$2 sm:$0xff]
        %753 = vrot.lane.b32.xlu0 %v714, 8
        %v754 = vpop.permute.xlu0 %753
        %755 = vrot.lane.b32.xlu0 %v716, 8
        %v756 = vpop.permute.xlu0 %755
        %757 = vrot.lane.b32.xlu0 %v718, 8
        %v758 = vpop.permute.xlu0 %757
        %759 = vrot.lane.b32.xlu0 %v720, 8
        %v760 = vpop.permute.xlu0 %759
        %761 = vrot.lane.b32.xlu0 %v722, 8
        %v762 = vpop.permute.xlu0 %761
        %763 = vrot.lane.b32.xlu0 %v724, 8
        %v764 = vpop.permute.xlu0 %763
        %765 = vrot.lane.b32.xlu0 %v726, 8
        %v766 = vpop.permute.xlu0 %765
        %767 = vrot.lane.b32.xlu0 %v728, 8
        %v768 = vpop.permute.xlu0 %767
        %785 = vrot.lane.b32.xlu0 %v730, 16
        %v786 = vpop.permute.xlu0 %785
        %787 = vrot.lane.b32.xlu0 %v732, 16
        %v788 = vpop.permute.xlu0 %787
        %789 = vrot.lane.b32.xlu0 %v734, 16
        %v790 = vpop.permute.xlu0 %789
        %791 = vrot.lane.b32.xlu0 %v736, 16
        %v792 = vpop.permute.xlu0 %791
        %793 = vrot.lane.b32.xlu0 %v738, 16
        %v794 = vpop.permute.xlu0 %793
        %795 = vrot.lane.b32.xlu0 %v740, 16
        %v796 = vpop.permute.xlu0 %795
        %797 = vrot.lane.b32.xlu0 %v742, 16
        %v798 = vpop.permute.xlu0 %797
        %799 = vrot.lane.b32.xlu0 %v744, 16
        %v800 = vpop.permute.xlu0 %799
        %v809 = vsel %vm478, %v698, %v754
        %v810 = vsel %vm478, %v700, %v756
        %v811 = vsel %vm478, %v702, %v758
        %v812 = vsel %vm478, %v704, %v760
        %v813 = vsel %vm478, %v706, %v762
        %v814 = vsel %vm478, %v708, %v764
        %v815 = vsel %vm478, %v710, %v766
        %v816 = vsel %vm478, %v712, %v768
        %v817 = vsel %vm686, %v809, %v786
        %v818 = vsel %vm686, %v810, %v788
        %v819 = vsel %vm686, %v811, %v790
        %v820 = vsel %vm686, %v812, %v792
        %v821 = vsel %vm686, %v813, %v794
        %v822 = vsel %vm686, %v814, %v796
        %v823 = vsel %vm686, %v815, %v798
        %v824 = vsel %vm686, %v816, %v800
        %s825 = scalar_lea.vmem %s1, 24
        %v826 = vld [vmem:[%s825] sm:$0xff]
        %v827 = vld [vmem:[%s825 + $0x8] sm:$0xff]
        %v828 = vld [vmem:[%s825 + $0x10] sm:$0xff]
        %vm829 = vcmask 195584
        %v831 = vsel %vm829, %v817, 0
        %v834 = vsel %vm829, %v818, 0
        %v837 = vsel %vm829, %v819, 0
        %v840 = vsel %vm829, %v820, 0
        %v843 = vsel %vm829, %v821, 0
        %v846 = vsel %vm829, %v822, 0
        %v849 = vsel %vm829, %v823, 0
        %v852 = vsel %vm829, %v824, 0
        %854 = vmatprep.subr.mxu0 0.0
        %855 = vmatpush1.msra.mxu0 %v826
        %856 = vmatprep.subr.mxu0 0.0
        %857 = vmatpush1.msra.mxu0 %v827
        %858 = vmatprep.subr.mxu0 0.0
        %859 = vmatpush1.msra.mxu0 %v828
        %860 = vmatprep.subr.mxu0 0.0
        %861 = vmatpush1.msra.mxu0 0.0
        %862 = vmatprep.subr.mxu0 0.0
        %863 = vmatpush1.msra.mxu0 0.0
        %864 = vmatprep.subr.mxu0 0.0
        %865 = vmatpush1.msra.mxu0 0.0
        %866 = vmatprep.subr.mxu0 0.0
        %867 = vmatpush1.msra.mxu0 0.0
        %868 = vmatprep.subr.mxu0 0.0
        %869 = vmatpush1.msra.mxu0 0.0
        %870 = vmatprep.subr.mxu0 0.0
        %871 = vmatpush1.msra.mxu0 0.0
        %872 = vmatprep.subr.mxu0 0.0
        %873 = vmatpush1.msra.mxu0 0.0
        %874 = vmatprep.subr.mxu0 0.0
        %875 = vmatpush1.msra.mxu0 0.0
        %876 = vmatprep.subr.mxu0 0.0
        %877 = vmatpush1.msra.mxu0 0.0
        %878 = vmatprep.subr.mxu0 0.0
        %879 = vmatpush1.msra.mxu0 0.0
        %880 = vmatprep.subr.mxu0 0.0
        %881 = vmatpush1.msra.mxu0 0.0
        %882 = vmatprep.subr.mxu0 0.0
        %883 = vmatpush1.msra.mxu0 0.0
        %884 = vmatprep.subr.mxu0 0.0
        %885 = vmatpush1.msra.mxu0 0.0
        %886 = vmatprep.subr.mxu0 0.0
        %887 = vmatpush1.msra.mxu0 0.0
        %888 = vmatprep.subr.mxu0 0.0
        %889 = vmatpush1.msra.mxu0 0.0
        %890 = vmatprep.subr.mxu0 0.0
        %891 = vmatpush1.msra.mxu0 0.0
        %892 = vmatprep.subr.mxu0 0.0
        %893 = vmatpush1.msra.mxu0 0.0
        %894 = vmatprep.subr.mxu0 0.0
        %895 = vmatpush1.msra.mxu0 0.0
        %896 = vmatprep.subr.mxu0 0.0
        %897 = vmatpush1.msra.mxu0 0.0
        %898 = vmatprep.subr.mxu0 0.0
        %899 = vmatpush1.msra.mxu0 0.0
        %900 = vmatprep.subr.mxu0 0.0
        %901 = vmatpush1.msra.mxu0 0.0
        %902 = vmatprep.subr.mxu0 0.0
        %903 = vmatpush1.msra.mxu0 0.0
        %904 = vmatprep.subr.mxu0 0.0
        %905 = vmatpush1.msra.mxu0 0.0
        %906 = vmatprep.subr.mxu0 0.0
        %907 = vmatpush1.msra.mxu0 0.0
        %908 = vmatprep.subr.mxu0 0.0
        %909 = vmatpush1.msra.mxu0 0.0
        %910 = vmatprep.subr.mxu0 0.0
        %911 = vmatpush1.msra.mxu0 0.0
        %912 = vmatprep.subr.mxu0 0.0
        %913 = vmatpush1.msra.mxu0 0.0
        %914 = vmatprep.subr.mxu0 0.0
        %915 = vmatpush1.msra.mxu0 0.0
        %916 = vmatprep.subr.mxu0 0.0
        %917 = vmatpush1.msra.mxu0 0.0
        %918 = vmatprep.mubr.f32.mxu0 0.0
        %919 = vmatmul.mubr.f32.gmra.mrb[0].mxu0 %v831
        %v920 = vpop.f32.mrb[0].mxu0
        %v921 = vadd.f32 0.0, %v920
        %v922 = vpop.f32.mrb[0].mxu0
        %923 = vmatprep.mubr.f32.mxu0 0.0
        %924 = vmatmul.mubr.f32.gmra.mrb[0].mxu0 %v834
        %v925 = vpop.f32.mrb[0].mxu0
        %v926 = vadd.f32 0.0, %v925
        %v927 = vpop.f32.mrb[0].mxu0
        %928 = vmatprep.mubr.f32.mxu0 0.0
        %929 = vmatmul.mubr.f32.gmra.mrb[0].mxu0 %v837
        %v930 = vpop.f32.mrb[0].mxu0
        %v931 = vadd.f32 0.0, %v930
        %v932 = vpop.f32.mrb[0].mxu0
        %933 = vmatprep.mubr.f32.mxu0 0.0
        %934 = vmatmul.mubr.f32.gmra.mrb[0].mxu0 %v840
        %v935 = vpop.f32.mrb[0].mxu0
        %v936 = vadd.f32 0.0, %v935
        %v937 = vpop.f32.mrb[0].mxu0
        %938 = vmatprep.mubr.f32.mxu0 0.0
        %939 = vmatmul.mubr.f32.gmra.mrb[0].mxu0 %v843
        %v940 = vpop.f32.mrb[0].mxu0
        %v941 = vadd.f32 0.0, %v940
        %v942 = vpop.f32.mrb[0].mxu0
        %943 = vmatprep.mubr.f32.mxu0 0.0
        %944 = vmatmul.mubr.f32.gmra.mrb[0].mxu0 %v846
        %v945 = vpop.f32.mrb[0].mxu0
        %v946 = vadd.f32 0.0, %v945
        %v947 = vpop.f32.mrb[0].mxu0
        %948 = vmatprep.mubr.f32.mxu0 0.0
        %949 = vmatmul.mubr.f32.gmra.mrb[0].mxu0 %v849
        %v950 = vpop.f32.mrb[0].mxu0
        %v951 = vadd.f32 0.0, %v950
        %v952 = vpop.f32.mrb[0].mxu0
        %953 = vmatprep.mubr.f32.mxu0 0.0
        %954 = vmatmul.mubr.f32.gmra.mrb[0].mxu0 %v852
        %v955 = vpop.f32.mrb[0].mxu0
        %v956 = vadd.f32 0.0, %v955
        %v957 = vpop.f32.mrb[0].mxu0
        %958 = vdwg.mxu0
        %v960 = vsel %vm829, %v687, 0
        %v963 = vsel %vm829, %v688, 0
        %v966 = vsel %vm829, %v689, 0
        %v969 = vsel %vm829, %v690, 0
        %v972 = vsel %vm829, %v691, 0
        %v975 = vsel %vm829, %v692, 0
        %v978 = vsel %vm829, %v693, 0
        %v981 = vsel %vm829, %v694, 0
        %983 = vmatprep.subr.mxu0 0.0
        %984 = vmatpush1.msra.mxu0 %v695
        %985 = vmatprep.subr.mxu0 0.0
        %986 = vmatpush1.msra.mxu0 %v696
        %987 = vmatprep.subr.mxu0 0.0
        %988 = vmatpush1.msra.mxu0 %v697
        %989 = vmatprep.subr.mxu0 0.0
        %990 = vmatpush1.msra.mxu0 0.0
        %991 = vmatprep.subr.mxu0 0.0
        %992 = vmatpush1.msra.mxu0 0.0
        %993 = vmatprep.subr.mxu0 0.0
        %994 = vmatpush1.msra.mxu0 0.0
        %995 = vmatprep.subr.mxu0 0.0
        %996 = vmatpush1.msra.mxu0 0.0
        %997 = vmatprep.subr.mxu0 0.0
        %998 = vmatpush1.msra.mxu0 0.0
        %999 = vmatprep.subr.mxu0 0.0
        %1000 = vmatpush1.msra.mxu0 0.0
        %1001 = vmatprep.subr.mxu0 0.0
        %1002 = vmatpush1.msra.mxu0 0.0
        %1003 = vmatprep.subr.mxu0 0.0
        %1004 = vmatpush1.msra.mxu0 0.0
        %1005 = vmatprep.subr.mxu0 0.0
        %1006 = vmatpush1.msra.mxu0 0.0
        %1007 = vmatprep.subr.mxu0 0.0
        %1008 = vmatpush1.msra.mxu0 0.0
        %1009 = vmatprep.subr.mxu0 0.0
        %1010 = vmatpush1.msra.mxu0 0.0
        %1011 = vmatprep.subr.mxu0 0.0
        %1012 = vmatpush1.msra.mxu0 0.0
        %1013 = vmatprep.subr.mxu0 0.0
        %1014 = vmatpush1.msra.mxu0 0.0
        %1015 = vmatprep.subr.mxu0 0.0
        %1016 = vmatpush1.msra.mxu0 0.0
        %1017 = vmatprep.subr.mxu0 0.0
        %1018 = vmatpush1.msra.mxu0 0.0
        %1019 = vmatprep.subr.mxu0 0.0
        %1020 = vmatpush1.msra.mxu0 0.0
        %1021 = vmatprep.subr.mxu0 0.0
        %1022 = vmatpush1.msra.mxu0 0.0
        %1023 = vmatprep.subr.mxu0 0.0
        %1024 = vmatpush1.msra.mxu0 0.0
        %1025 = vmatprep.subr.mxu0 0.0
        %1026 = vmatpush1.msra.mxu0 0.0
        %1027 = vmatprep.subr.mxu0 0.0
        %1028 = vmatpush1.msra.mxu0 0.0
        %1029 = vmatprep.subr.mxu0 0.0
        %1030 = vmatpush1.msra.mxu0 0.0
        %1031 = vmatprep.subr.mxu0 0.0
        %1032 = vmatpush1.msra.mxu0 0.0
        %1033 = vmatprep.subr.mxu0 0.0
        %1034 = vmatpush1.msra.mxu0 0.0
        %1035 = vmatprep.subr.mxu0 0.0
        %1036 = vmatpush1.msra.mxu0 0.0
        %1037 = vmatprep.subr.mxu0 0.0
        %1038 = vmatpush1.msra.mxu0 0.0
        %1039 = vmatprep.subr.mxu0 0.0
        %1040 = vmatpush1.msra.mxu0 0.0
        %1041 = vmatprep.subr.mxu0 0.0
        %1042 = vmatpush1.msra.mxu0 0.0
        %1043 = vmatprep.subr.mxu0 0.0
        %1044 = vmatpush1.msra.mxu0 0.0
        %1045 = vmatprep.subr.mxu0 0.0
        %1046 = vmatpush1.msra.mxu0 0.0
        %1047 = vmatprep.mubr.f32.mxu0 0.0
        %1048 = vmatmul.mubr.f32.gmra.mrb[0].mxu0 %v960
        %v1049 = vpop.f32.mrb[0].mxu0
        %v1050 = vadd.f32 %v921, %v1049
        %v1051 = vpop.f32.mrb[0].mxu0
        %1052 = vmatprep.mubr.f32.mxu0 0.0
        %1053 = vmatmul.mubr.f32.gmra.mrb[0].mxu0 %v963
        %v1054 = vpop.f32.mrb[0].mxu0
        %v1055 = vadd.f32 %v926, %v1054
        %v1056 = vpop.f32.mrb[0].mxu0
        %1057 = vmatprep.mubr.f32.mxu0 0.0
        %1058 = vmatmul.mubr.f32.gmra.mrb[0].mxu0 %v966
        %v1059 = vpop.f32.mrb[0].mxu0
        %v1060 = vadd.f32 %v931, %v1059
        %v1061 = vpop.f32.mrb[0].mxu0
        %1062 = vmatprep.mubr.f32.mxu0 0.0
        %1063 = vmatmul.mubr.f32.gmra.mrb[0].mxu0 %v969
        %v1064 = vpop.f32.mrb[0].mxu0
        %v1065 = vadd.f32 %v936, %v1064
        %v1066 = vpop.f32.mrb[0].mxu0
        %1067 = vmatprep.mubr.f32.mxu0 0.0
        %1068 = vmatmul.mubr.f32.gmra.mrb[0].mxu0 %v972
        %v1069 = vpop.f32.mrb[0].mxu0
        %v1070 = vadd.f32 %v941, %v1069
        %v1071 = vpop.f32.mrb[0].mxu0
        %1072 = vmatprep.mubr.f32.mxu0 0.0
        %1073 = vmatmul.mubr.f32.gmra.mrb[0].mxu0 %v975
        %v1074 = vpop.f32.mrb[0].mxu0
        %v1075 = vadd.f32 %v946, %v1074
        %v1076 = vpop.f32.mrb[0].mxu0
        %1077 = vmatprep.mubr.f32.mxu0 0.0
        %1078 = vmatmul.mubr.f32.gmra.mrb[0].mxu0 %v978
        %v1079 = vpop.f32.mrb[0].mxu0
        %v1080 = vadd.f32 %v951, %v1079
        %v1081 = vpop.f32.mrb[0].mxu0
        %1082 = vmatprep.mubr.f32.mxu0 0.0
        %1083 = vmatmul.mubr.f32.gmra.mrb[0].mxu0 %v981
        %v1084 = vpop.f32.mrb[0].mxu0
        %v1085 = vadd.f32 %v956, %v1084
        %v1086 = vpop.f32.mrb[0].mxu0
        %1087 = vdwg.mxu0
        %s1088 = scalar_lea.vmem [#allocation2], 48
        %v1089 = vld [vmem:[%s1088] ss:$2 sm:$0xff]
        %s1090 = scalar_lea.vmem %s1088, 48 [#allocation2]
        %v1091 = vld [vmem:[%s1090] ss:$2 sm:$0xff]
        %s1092 = scalar_lea.vmem %s1088, 96 [#allocation2]
        %v1093 = vld [vmem:[%s1092] ss:$2 sm:$0xff]
        %s1094 = scalar_lea.vmem %s1088, 144 [#allocation2]
        %v1095 = vld [vmem:[%s1094] ss:$2 sm:$0xff]
        %s1096 = scalar_lea.vmem %s1088, 192 [#allocation2]
        %v1097 = vld [vmem:[%s1096] ss:$2 sm:$0xff]
        %s1098 = scalar_lea.vmem %s1088, 240 [#allocation2]
        %v1099 = vld [vmem:[%s1098] ss:$2 sm:$0xff]
        %s1100 = scalar_lea.vmem %s1088, 288 [#allocation2]
        %v1101 = vld [vmem:[%s1100] ss:$2 sm:$0xff]
        %s1102 = scalar_lea.vmem %s1088, 336 [#allocation2]
        %v1103 = vld [vmem:[%s1102] ss:$2 sm:$0xff]
        %s1104 = scalar_lea.vmem %s1088, 1 [#allocation2]
        %v1105 = vld [vmem:[%s1104] ss:$2 sm:$0xff]
        %s1106 = scalar_lea.vmem %s1088, 49 [#allocation2]
        %v1107 = vld [vmem:[%s1106] ss:$2 sm:$0xff]
        %s1108 = scalar_lea.vmem %s1088, 97 [#allocation2]
        %v1109 = vld [vmem:[%s1108] ss:$2 sm:$0xff]
        %s1110 = scalar_lea.vmem %s1088, 145 [#allocation2]
        %v1111 = vld [vmem:[%s1110] ss:$2 sm:$0xff]
        %s1112 = scalar_lea.vmem %s1088, 193 [#allocation2]
        %v1113 = vld [vmem:[%s1112] ss:$2 sm:$0xff]
        %s1114 = scalar_lea.vmem %s1088, 241 [#allocation2]
        %v1115 = vld [vmem:[%s1114] ss:$2 sm:$0xff]
        %s1116 = scalar_lea.vmem %s1088, 289 [#allocation2]
        %v1117 = vld [vmem:[%s1116] ss:$2 sm:$0xff]
        %s1118 = scalar_lea.vmem %s1088, 337 [#allocation2]
        %v1119 = vld [vmem:[%s1118] ss:$2 sm:$0xff]
        %s1120 = scalar_lea.vmem %s1088, 2 [#allocation2]
        %v1121 = vld [vmem:[%s1120] ss:$2 sm:$0xff]
        %s1122 = scalar_lea.vmem %s1088, 50 [#allocation2]
        %v1123 = vld [vmem:[%s1122] ss:$2 sm:$0xff]
        %s1124 = scalar_lea.vmem %s1088, 98 [#allocation2]
        %v1125 = vld [vmem:[%s1124] ss:$2 sm:$0xff]
        %s1126 = scalar_lea.vmem %s1088, 146 [#allocation2]
        %v1127 = vld [vmem:[%s1126] ss:$2 sm:$0xff]
        %s1128 = scalar_lea.vmem %s1088, 194 [#allocation2]
        %v1129 = vld [vmem:[%s1128] ss:$2 sm:$0xff]
        %s1130 = scalar_lea.vmem %s1088, 242 [#allocation2]
        %v1131 = vld [vmem:[%s1130] ss:$2 sm:$0xff]
        %s1132 = scalar_lea.vmem %s1088, 290 [#allocation2]
        %v1133 = vld [vmem:[%s1132] ss:$2 sm:$0xff]
        %s1134 = scalar_lea.vmem %s1088, 338 [#allocation2]
        %v1135 = vld [vmem:[%s1134] ss:$2 sm:$0xff]
        %1144 = vrot.lane.b32.xlu0 %v1105, 8
        %v1145 = vpop.permute.xlu0 %1144
        %1146 = vrot.lane.b32.xlu0 %v1107, 8
        %v1147 = vpop.permute.xlu0 %1146
        %1148 = vrot.lane.b32.xlu0 %v1109, 8
        %v1149 = vpop.permute.xlu0 %1148
        %1150 = vrot.lane.b32.xlu0 %v1111, 8
        %v1151 = vpop.permute.xlu0 %1150
        %1152 = vrot.lane.b32.xlu0 %v1113, 8
        %v1153 = vpop.permute.xlu0 %1152
        %1154 = vrot.lane.b32.xlu0 %v1115, 8
        %v1155 = vpop.permute.xlu0 %1154
        %1156 = vrot.lane.b32.xlu0 %v1117, 8
        %v1157 = vpop.permute.xlu0 %1156
        %1158 = vrot.lane.b32.xlu0 %v1119, 8
        %v1159 = vpop.permute.xlu0 %1158
        %1176 = vrot.lane.b32.xlu0 %v1121, 16
        %v1177 = vpop.permute.xlu0 %1176
        %1178 = vrot.lane.b32.xlu0 %v1123, 16
        %v1179 = vpop.permute.xlu0 %1178
        %1180 = vrot.lane.b32.xlu0 %v1125, 16
        %v1181 = vpop.permute.xlu0 %1180
        %1182 = vrot.lane.b32.xlu0 %v1127, 16
        %v1183 = vpop.permute.xlu0 %1182
        %1184 = vrot.lane.b32.xlu0 %v1129, 16
        %v1185 = vpop.permute.xlu0 %1184
        %1186 = vrot.lane.b32.xlu0 %v1131, 16
        %v1187 = vpop.permute.xlu0 %1186
        %1188 = vrot.lane.b32.xlu0 %v1133, 16
        %v1189 = vpop.permute.xlu0 %1188
        %1190 = vrot.lane.b32.xlu0 %v1135, 16
        %v1191 = vpop.permute.xlu0 %1190
        %v1200 = vsel %vm478, %v1089, %v1145
        %v1201 = vsel %vm478, %v1091, %v1147
        %v1202 = vsel %vm478, %v1093, %v1149
        %v1203 = vsel %vm478, %v1095, %v1151
        %v1204 = vsel %vm478, %v1097, %v1153
        %v1205 = vsel %vm478, %v1099, %v1155
        %v1206 = vsel %vm478, %v1101, %v1157
        %v1207 = vsel %vm478, %v1103, %v1159
        %v1208 = vsel %vm686, %v1200, %v1177
        %v1209 = vsel %vm686, %v1201, %v1179
        %v1210 = vsel %vm686, %v1202, %v1181
        %v1211 = vsel %vm686, %v1203, %v1183
        %v1212 = vsel %vm686, %v1204, %v1185
        %v1213 = vsel %vm686, %v1205, %v1187
        %v1214 = vsel %vm686, %v1206, %v1189
        %v1215 = vsel %vm686, %v1207, %v1191
        %s1216 = scalar_lea.vmem %s1, 48
        %v1217 = vld [vmem:[%s1216] sm:$0xff]
        %v1218 = vld [vmem:[%s1216 + $0x8] sm:$0xff]
        %v1219 = vld [vmem:[%s1216 + $0x10] sm:$0xff]
        %v1221 = vsel %vm829, %v1208, 0
        %v1224 = vsel %vm829, %v1209, 0
        %v1227 = vsel %vm829, %v1210, 0
        %v1230 = vsel %vm829, %v1211, 0
        %v1233 = vsel %vm829, %v1212, 0
        %v1236 = vsel %vm829, %v1213, 0
        %v1239 = vsel %vm829, %v1214, 0
        %v1242 = vsel %vm829, %v1215, 0
        %1244 = vmatprep.subr.mxu0 0.0
        %1245 = vmatpush1.msra.mxu0 %v1217
        %1246 = vmatprep.subr.mxu0 0.0
        %1247 = vmatpush1.msra.mxu0 %v1218
        %1248 = vmatprep.subr.mxu0 0.0
        %1249 = vmatpush1.msra.mxu0 %v1219
        %1250 = vmatprep.subr.mxu0 0.0
        %1251 = vmatpush1.msra.mxu0 0.0
        %1252 = vmatprep.subr.mxu0 0.0
        %1253 = vmatpush1.msra.mxu0 0.0
        %1254 = vmatprep.subr.mxu0 0.0
        %1255 = vmatpush1.msra.mxu0 0.0
        %1256 = vmatprep.subr.mxu0 0.0
        %1257 = vmatpush1.msra.mxu0 0.0
        %1258 = vmatprep.subr.mxu0 0.0
        %1259 = vmatpush1.msra.mxu0 0.0
        %1260 = vmatprep.subr.mxu0 0.0
        %1261 = vmatpush1.msra.mxu0 0.0
        %1262 = vmatprep.subr.mxu0 0.0
        %1263 = vmatpush1.msra.mxu0 0.0
        %1264 = vmatprep.subr.mxu0 0.0
        %1265 = vmatpush1.msra.mxu0 0.0
        %1266 = vmatprep.subr.mxu0 0.0
        %1267 = vmatpush1.msra.mxu0 0.0
        %1268 = vmatprep.subr.mxu0 0.0
        %1269 = vmatpush1.msra.mxu0 0.0
        %1270 = vmatprep.subr.mxu0 0.0
        %1271 = vmatpush1.msra.mxu0 0.0
        %1272 = vmatprep.subr.mxu0 0.0
        %1273 = vmatpush1.msra.mxu0 0.0
        %1274 = vmatprep.subr.mxu0 0.0
        %1275 = vmatpush1.msra.mxu0 0.0
        %1276 = vmatprep.subr.mxu0 0.0
        %1277 = vmatpush1.msra.mxu0 0.0
        %1278 = vmatprep.subr.mxu0 0.0
        %1279 = vmatpush1.msra.mxu0 0.0
        %1280 = vmatprep.subr.mxu0 0.0
        %1281 = vmatpush1.msra.mxu0 0.0
        %1282 = vmatprep.subr.mxu0 0.0
        %1283 = vmatpush1.msra.mxu0 0.0
        %1284 = vmatprep.subr.mxu0 0.0
        %1285 = vmatpush1.msra.mxu0 0.0
        %1286 = vmatprep.subr.mxu0 0.0
        %1287 = vmatpush1.msra.mxu0 0.0
        %1288 = vmatprep.subr.mxu0 0.0
        %1289 = vmatpush1.msra.mxu0 0.0
        %1290 = vmatprep.subr.mxu0 0.0
        %1291 = vmatpush1.msra.mxu0 0.0
        %1292 = vmatprep.subr.mxu0 0.0
        %1293 = vmatpush1.msra.mxu0 0.0
        %1294 = vmatprep.subr.mxu0 0.0
        %1295 = vmatpush1.msra.mxu0 0.0
        %1296 = vmatprep.subr.mxu0 0.0
        %1297 = vmatpush1.msra.mxu0 0.0
        %1298 = vmatprep.subr.mxu0 0.0
        %1299 = vmatpush1.msra.mxu0 0.0
        %1300 = vmatprep.subr.mxu0 0.0
        %1301 = vmatpush1.msra.mxu0 0.0
        %1302 = vmatprep.subr.mxu0 0.0
        %1303 = vmatpush1.msra.mxu0 0.0
        %1304 = vmatprep.subr.mxu0 0.0
        %1305 = vmatpush1.msra.mxu0 0.0
        %1306 = vmatprep.subr.mxu0 0.0
        %1307 = vmatpush1.msra.mxu0 0.0
        %1308 = vmatprep.mubr.f32.mxu0 0.0
        %1309 = vmatmul.mubr.f32.gmra.mrb[0].mxu0 %v1221
        %v1310 = vpop.f32.mrb[0].mxu0
        %v1311 = vadd.f32 0.0, %v1310
        %v1312 = vpop.f32.mrb[0].mxu0
        %1313 = vmatprep.mubr.f32.mxu0 0.0
        %1314 = vmatmul.mubr.f32.gmra.mrb[0].mxu0 %v1224
        %v1315 = vpop.f32.mrb[0].mxu0
        %v1316 = vadd.f32 0.0, %v1315
        %v1317 = vpop.f32.mrb[0].mxu0
        %1318 = vmatprep.mubr.f32.mxu0 0.0
        %1319 = vmatmul.mubr.f32.gmra.mrb[0].mxu0 %v1227
        %v1320 = vpop.f32.mrb[0].mxu0
        %v1321 = vadd.f32 0.0, %v1320
        %v1322 = vpop.f32.mrb[0].mxu0
        %1323 = vmatprep.mubr.f32.mxu0 0.0
        %1324 = vmatmul.mubr.f32.gmra.mrb[0].mxu0 %v1230
        %v1325 = vpop.f32.mrb[0].mxu0
        %v1326 = vadd.f32 0.0, %v1325
        %v1327 = vpop.f32.mrb[0].mxu0
        %1328 = vmatprep.mubr.f32.mxu0 0.0
        %1329 = vmatmul.mubr.f32.gmra.mrb[0].mxu0 %v1233
        %v1330 = vpop.f32.mrb[0].mxu0
        %v1331 = vadd.f32 0.0, %v1330
        %v1332 = vpop.f32.mrb[0].mxu0
        %1333 = vmatprep.mubr.f32.mxu0 0.0
        %1334 = vmatmul.mubr.f32.gmra.mrb[0].mxu0 %v1236
        %v1335 = vpop.f32.mrb[0].mxu0
        %v1336 = vadd.f32 0.0, %v1335
        %v1337 = vpop.f32.mrb[0].mxu0
        %1338 = vmatprep.mubr.f32.mxu0 0.0
        %1339 = vmatmul.mubr.f32.gmra.mrb[0].mxu0 %v1239
        %v1340 = vpop.f32.mrb[0].mxu0
        %v1341 = vadd.f32 0.0, %v1340
        %v1342 = vpop.f32.mrb[0].mxu0
        %1343 = vmatprep.mubr.f32.mxu0 0.0
        %1344 = vmatmul.mubr.f32.gmra.mrb[0].mxu0 %v1242
        %v1345 = vpop.f32.mrb[0].mxu0
        %v1346 = vadd.f32 0.0, %v1345
        %v1347 = vpop.f32.mrb[0].mxu0
        %1348 = vdwg.mxu0
        %v1349 = vadd.f32 %v1050, %v1311
        %v1350 = vadd.f32 %v1055, %v1316
        %v1351 = vadd.f32 %v1060, %v1321
        %v1352 = vadd.f32 %v1065, %v1326
        %v1353 = vadd.f32 %v1070, %v1331
        %v1354 = vadd.f32 %v1075, %v1336
        %v1355 = vadd.f32 %v1080, %v1341
        %v1356 = vadd.f32 %v1085, %v1346
        %v1357 = vld [vmem:[%s2] sm:$0x1]
        %v1359 = vlaneseq
        %v1360 = vshrl.u32 %v1359, 7
        %v1361 = vsub.s32 0, %v1360
        %v1362 = vrot.slane %v1357, %v1361
        %v1364 = vadd.f32 %v1349, %v1362
        %v1365 = vadd.f32 %v1350, %v1362
        %v1366 = vadd.f32 %v1351, %v1362
        %v1367 = vadd.f32 %v1352, %v1362
        %v1368 = vadd.f32 %v1353, %v1362
        %v1369 = vadd.f32 %v1354, %v1362
        %v1370 = vadd.f32 %v1355, %v1362
        %v1371 = vadd.f32 %v1356, %v1362
        %1372 = vst.msk [vmem:[%s440] sm:$0xff] %vm478, %v1364
        %1373 = vst.msk [vmem:[%s440 + $0x8] sm:$0xff] %vm478, %v1365
        %1374 = vst.msk [vmem:[%s440 + $0x10] sm:$0xff] %vm478, %v1366
        %1375 = vst.msk [vmem:[%s440 + $0x18] sm:$0xff] %vm478, %v1367
        %1376 = vst.msk [vmem:[%s440 + $0x20] sm:$0xff] %vm478, %v1368
        %1377 = vst.msk [vmem:[%s440 + $0x28] sm:$0xff] %vm478, %v1369
        %1378 = vst.msk [vmem:[%s440 + $0x30] sm:$0xff] %vm478, %v1370
        %1379 = vst.msk [vmem:[%s440 + $0x38] sm:$0xff] %vm478, %v1371
        %v1380 = vmax.f32 %v1364, 0.0
        %v1381 = vmax.f32 %v1365, 0.0
        %v1382 = vmax.f32 %v1366, 0.0
        %v1383 = vmax.f32 %v1367, 0.0
        %v1384 = vmax.f32 %v1368, 0.0
        %v1385 = vmax.f32 %v1369, 0.0
        %v1386 = vmax.f32 %v1370, 0.0
        %v1387 = vmax.f32 %v1371, 0.0
        %1388 = vst.msk [vmem:[#allocation2] sm:$0xff] %vm478, 0.0
        %1389 = vst.msk [vmem:[#allocation2 + $0x8] sm:$0x3] %vm481, 0.0
        %1390 = vst.msk [vmem:[#allocation2 + $0x18] sm:$0xff] %vm478, 0.0
        %1391 = vst.msk [vmem:[#allocation2 + $0x20] sm:$0x3] %vm481, 0.0
        %1392 = vst.msk [vmem:[#allocation2 + $0x30] sm:$0xff] %vm478, 0.0
        %1393 = vst.msk [vmem:[#allocation2 + $0x38] sm:$0x3] %vm481, 0.0
        %1394 = vst.msk [vmem:[#allocation2 + $0x48] sm:$0xff] %vm478, 0.0
        %1395 = vst.msk [vmem:[#allocation2 + $0x50] sm:$0x3] %vm481, 0.0
        %1396 = vst.msk [vmem:[#allocation2 + $0x60] sm:$0xff] %vm478, 0.0
        %1397 = vst.msk [vmem:[#allocation2 + $0x68] sm:$0x3] %vm481, 0.0
        %1398 = vst.msk [vmem:[#allocation2 + $0x78] sm:$0xff] %vm478, 0.0
        %1399 = vst.msk [vmem:[#allocation2 + $0x80] sm:$0x3] %vm481, 0.0
        %1400 = vst.msk [vmem:[#allocation2 + $0x90] sm:$0xff] %vm478, 0.0
        %1401 = vst.msk [vmem:[#allocation2 + $0x98] sm:$0x3] %vm481, 0.0
        %1402 = vst.msk [vmem:[#allocation2 + $0xa8] sm:$0xff] %vm478, 0.0
        %1403 = vst.msk [vmem:[#allocation2 + $0xb0] sm:$0x3] %vm481, 0.0
        %1404 = vst.msk [vmem:[#allocation2 + $0xc0] sm:$0xff] %vm478, 0.0
        %1405 = vst.msk [vmem:[#allocation2 + $0xc8] sm:$0x3] %vm481, 0.0
        %1406 = vst.msk [vmem:[#allocation2 + $0xd8] sm:$0xff] %vm478, 0.0
        %1407 = vst.msk [vmem:[#allocation2 + $0xe0] sm:$0x3] %vm481, 0.0
        %1408 = vst.msk [vmem:[%s534 + $0x1] sm:$0xff] %vm478, %v1380
        %1409 = vst.msk [vmem:[%s534 + $0x19] sm:$0xff] %vm478, %v1381
        %1410 = vst.msk [vmem:[%s534 + $0x31] sm:$0xff] %vm478, %v1382
        %1411 = vst.msk [vmem:[%s534 + $0x49] sm:$0xff] %vm478, %v1383
        %1412 = vst.msk [vmem:[%s534 + $0x61] sm:$0xff] %vm478, %v1384
        %1413 = vst.msk [vmem:[%s534 + $0x79] sm:$0xff] %vm478, %v1385
        %1414 = vst.msk [vmem:[%s534 + $0x91] sm:$0xff] %vm478, %v1386
        %1415 = vst.msk [vmem:[%s534 + $0xa9] sm:$0xff] %vm478, %v1387
        %v1416 = vld [vmem:[#allocation2] ss:$2 sm:$0xf]
        %v1417 = vld [vmem:[%s568] ss:$2 sm:$0xf]
        %v1418 = vld [vmem:[%s570] ss:$2 sm:$0xf]
        %v1419 = vld [vmem:[%s572] ss:$2 sm:$0xf]
        %v1420 = vld [vmem:[%s582] ss:$2 sm:$0xf]
        %v1421 = vld [vmem:[%s584] ss:$2 sm:$0xf]
        %v1422 = vld [vmem:[%s586] ss:$2 sm:$0xf]
        %v1423 = vld [vmem:[%s588] ss:$2 sm:$0xf]
        %v1424 = vld [vmem:[%s598] ss:$2 sm:$0xf]
        %v1425 = vld [vmem:[%s600] ss:$2 sm:$0xf]
        %v1426 = vld [vmem:[%s602] ss:$2 sm:$0xf]
        %v1427 = vld [vmem:[%s604] ss:$2 sm:$0xf]
        %v1432 = vcombine.low %v1416, %v1417
        %v1433 = vcombine.low %v1418, %v1419
        %v1440 = vcombine.low %v1420, %v1421
        %v1441 = vcombine.low %v1422, %v1423
        %1442 = vrot.lane.b32.xlu0 %v1440, 8
        %v1443 = vpop.permute.xlu0 %1442
        %1444 = vrot.lane.b32.xlu0 %v1441, 8
        %v1445 = vpop.permute.xlu0 %1444
        %v1452 = vcombine.low %v1424, %v1425
        %v1453 = vcombine.low %v1426, %v1427
        %1454 = vrot.lane.b32.xlu0 %v1452, 16
        %v1455 = vpop.permute.xlu0 %1454
        %1456 = vrot.lane.b32.xlu0 %v1453, 16
        %v1457 = vpop.permute.xlu0 %1456
        %v1460 = vsel %vm478, %v1432, %v1443
        %v1461 = vsel %vm478, %v1433, %v1445
        %v1462 = vsel %vm686, %v1460, %v1455
        %v1463 = vsel %vm686, %v1461, %v1457
        %v1464 = vld [vmem:[%s3] sm:$0xff]
        %v1465 = vld [vmem:[%s3 + $0x8] sm:$0xff]
        %v1466 = vld [vmem:[%s3 + $0x10] sm:$0xff]
        %v1467 = vld [vmem:[%s534] ss:$2 sm:$0xf]
        %v1468 = vld [vmem:[%s699] ss:$2 sm:$0xf]
        %v1469 = vld [vmem:[%s701] ss:$2 sm:$0xf]
        %v1470 = vld [vmem:[%s703] ss:$2 sm:$0xf]
        %v1471 = vld [vmem:[%s713] ss:$2 sm:$0xf]
        %v1472 = vld [vmem:[%s715] ss:$2 sm:$0xf]
        %v1473 = vld [vmem:[%s717] ss:$2 sm:$0xf]
        %v1474 = vld [vmem:[%s719] ss:$2 sm:$0xf]
        %v1475 = vld [vmem:[%s729] ss:$2 sm:$0xf]
        %v1476 = vld [vmem:[%s731] ss:$2 sm:$0xf]
        %v1477 = vld [vmem:[%s733] ss:$2 sm:$0xf]
        %v1478 = vld [vmem:[%s735] ss:$2 sm:$0xf]
        %v1483 = vcombine.low %v1467, %v1468
        %v1484 = vcombine.low %v1469, %v1470
        %v1491 = vcombine.low %v1471, %v1472
        %v1492 = vcombine.low %v1473, %v1474
        %1493 = vrot.lane.b32.xlu0 %v1491, 8
        %v1494 = vpop.permute.xlu0 %1493
        %1495 = vrot.lane.b32.xlu0 %v1492, 8
        %v1496 = vpop.permute.xlu0 %1495
        %v1503 = vcombine.low %v1475, %v1476
        %v1504 = vcombine.low %v1477, %v1478
        %1505 = vrot.lane.b32.xlu0 %v1503, 16
        %v1506 = vpop.permute.xlu0 %1505
        %1507 = vrot.lane.b32.xlu0 %v1504, 16
        %v1508 = vpop.permute.xlu0 %1507
        %v1511 = vsel %vm478, %v1483, %v1494
        %v1512 = vsel %vm478, %v1484, %v1496
        %v1513 = vsel %vm686, %v1511, %v1506
        %v1514 = vsel %vm686, %v1512, %v1508
        %s1515 = scalar_lea.vmem %s3, 24
        %v1516 = vld [vmem:[%s1515] sm:$0xff]
        %v1517 = vld [vmem:[%s1515 + $0x8] sm:$0xff]
        %v1518 = vld [vmem:[%s1515 + $0x10] sm:$0xff]
        %v1520 = vsel %vm829, %v1513, 0
        %v1523 = vsel %vm829, %v1514, 0
        %1525 = vmatprep.subr.mxu0 0.0
        %1526 = vmatpush1.msra.mxu0 %v1516
        %1527 = vmatprep.subr.mxu0 0.0
        %1528 = vmatpush1.msra.mxu0 %v1517
        %1529 = vmatprep.subr.mxu0 0.0
        %1530 = vmatpush1.msra.mxu0 %v1518
        %1531 = vmatprep.subr.mxu0 0.0
        %1532 = vmatpush1.msra.mxu0 0.0
        %1533 = vmatprep.subr.mxu0 0.0
        %1534 = vmatpush1.msra.mxu0 0.0
        %1535 = vmatprep.subr.mxu0 0.0
        %1536 = vmatpush1.msra.mxu0 0.0
        %1537 = vmatprep.subr.mxu0 0.0
        %1538 = vmatpush1.msra.mxu0 0.0
        %1539 = vmatprep.subr.mxu0 0.0
        %1540 = vmatpush1.msra.mxu0 0.0
        %1541 = vmatprep.subr.mxu0 0.0
        %1542 = vmatpush1.msra.mxu0 0.0
        %1543 = vmatprep.subr.mxu0 0.0
        %1544 = vmatpush1.msra.mxu0 0.0
        %1545 = vmatprep.subr.mxu0 0.0
        %1546 = vmatpush1.msra.mxu0 0.0
        %1547 = vmatprep.subr.mxu0 0.0
        %1548 = vmatpush1.msra.mxu0 0.0
        %1549 = vmatprep.subr.mxu0 0.0
        %1550 = vmatpush1.msra.mxu0 0.0
        %1551 = vmatprep.subr.mxu0 0.0
        %1552 = vmatpush1.msra.mxu0 0.0
        %1553 = vmatprep.subr.mxu0 0.0
        %1554 = vmatpush1.msra.mxu0 0.0
        %1555 = vmatprep.subr.mxu0 0.0
        %1556 = vmatpush1.msra.mxu0 0.0
        %1557 = vmatprep.subr.mxu0 0.0
        %1558 = vmatpush1.msra.mxu0 0.0
        %1559 = vmatprep.subr.mxu0 0.0
        %1560 = vmatpush1.msra.mxu0 0.0
        %1561 = vmatprep.subr.mxu0 0.0
        %1562 = vmatpush1.msra.mxu0 0.0
        %1563 = vmatprep.subr.mxu0 0.0
        %1564 = vmatpush1.msra.mxu0 0.0
        %1565 = vmatprep.subr.mxu0 0.0
        %1566 = vmatpush1.msra.mxu0 0.0
        %1567 = vmatprep.subr.mxu0 0.0
        %1568 = vmatpush1.msra.mxu0 0.0
        %1569 = vmatprep.subr.mxu0 0.0
        %1570 = vmatpush1.msra.mxu0 0.0
        %1571 = vmatprep.subr.mxu0 0.0
        %1572 = vmatpush1.msra.mxu0 0.0
        %1573 = vmatprep.subr.mxu0 0.0
        %1574 = vmatpush1.msra.mxu0 0.0
        %1575 = vmatprep.subr.mxu0 0.0
        %1576 = vmatpush1.msra.mxu0 0.0
        %1577 = vmatprep.subr.mxu0 0.0
        %1578 = vmatpush1.msra.mxu0 0.0
        %1579 = vmatprep.subr.mxu0 0.0
        %1580 = vmatpush1.msra.mxu0 0.0
        %1581 = vmatprep.subr.mxu0 0.0
        %1582 = vmatpush1.msra.mxu0 0.0
        %1583 = vmatprep.subr.mxu0 0.0
        %1584 = vmatpush1.msra.mxu0 0.0
        %1585 = vmatprep.subr.mxu0 0.0
        %1586 = vmatpush1.msra.mxu0 0.0
        %1587 = vmatprep.subr.mxu0 0.0
        %1588 = vmatpush1.msra.mxu0 0.0
        %1589 = vmatprep.mubr.f32.mxu0 0.0
        %1590 = vmatmul.mubr.f32.gmra.mrb[0].mxu0 %v1520
        %v1591 = vpop.f32.mrb[0].mxu0
        %v1592 = vadd.f32 0.0, %v1591
        %v1593 = vpop.f32.mrb[0].mxu0
        %1594 = vmatprep.mubr.f32.mxu0 0.0
        %1595 = vmatmul.mubr.f32.gmra.mrb[0].mxu0 %v1523
        %v1596 = vpop.f32.mrb[0].mxu0
        %v1597 = vadd.f32 0.0, %v1596
        %v1598 = vpop.f32.mrb[0].mxu0
        %1599 = vdwg.mxu0
        %v1601 = vsel %vm829, %v1462, 0
        %v1604 = vsel %vm829, %v1463, 0
        %1606 = vmatprep.subr.mxu0 0.0
        %1607 = vmatpush1.msra.mxu0 %v1464
        %1608 = vmatprep.subr.mxu0 0.0
        %1609 = vmatpush1.msra.mxu0 %v1465
        %1610 = vmatprep.subr.mxu0 0.0
        %1611 = vmatpush1.msra.mxu0 %v1466
        %1612 = vmatprep.subr.mxu0 0.0
        %1613 = vmatpush1.msra.mxu0 0.0
        %1614 = vmatprep.subr.mxu0 0.0
        %1615 = vmatpush1.msra.mxu0 0.0
        %1616 = vmatprep.subr.mxu0 0.0
        %1617 = vmatpush1.msra.mxu0 0.0
        %1618 = vmatprep.subr.mxu0 0.0
        %1619 = vmatpush1.msra.mxu0 0.0
        %1620 = vmatprep.subr.mxu0 0.0
        %1621 = vmatpush1.msra.mxu0 0.0
        %1622 = vmatprep.subr.mxu0 0.0
        %1623 = vmatpush1.msra.mxu0 0.0
        %1624 = vmatprep.subr.mxu0 0.0
        %1625 = vmatpush1.msra.mxu0 0.0
        %1626 = vmatprep.subr.mxu0 0.0
        %1627 = vmatpush1.msra.mxu0 0.0
        %1628 = vmatprep.subr.mxu0 0.0
        %1629 = vmatpush1.msra.mxu0 0.0
        %1630 = vmatprep.subr.mxu0 0.0
        %1631 = vmatpush1.msra.mxu0 0.0
        %1632 = vmatprep.subr.mxu0 0.0
        %1633 = vmatpush1.msra.mxu0 0.0
        %1634 = vmatprep.subr.mxu0 0.0
        %1635 = vmatpush1.msra.mxu0 0.0
        %1636 = vmatprep.subr.mxu0 0.0
        %1637 = vmatpush1.msra.mxu0 0.0
        %1638 = vmatprep.subr.mxu0 0.0
        %1639 = vmatpush1.msra.mxu0 0.0
        %1640 = vmatprep.subr.mxu0 0.0
        %1641 = vmatpush1.msra.mxu0 0.0
        %1642 = vmatprep.subr.mxu0 0.0
        %1643 = vmatpush1.msra.mxu0 0.0
        %1644 = vmatprep.subr.mxu0 0.0
        %1645 = vmatpush1.msra.mxu0 0.0
        %1646 = vmatprep.subr.mxu0 0.0
        %1647 = vmatpush1.msra.mxu0 0.0
        %1648 = vmatprep.subr.mxu0 0.0
        %1649 = vmatpush1.msra.mxu0 0.0
        %1650 = vmatprep.subr.mxu0 0.0
        %1651 = vmatpush1.msra.mxu0 0.0
        %1652 = vmatprep.subr.mxu0 0.0
        %1653 = vmatpush1.msra.mxu0 0.0
        %1654 = vmatprep.subr.mxu0 0.0
        %1655 = vmatpush1.msra.mxu0 0.0
        %1656 = vmatprep.subr.mxu0 0.0
        %1657 = vmatpush1.msra.mxu0 0.0
        %1658 = vmatprep.subr.mxu0 0.0
        %1659 = vmatpush1.msra.mxu0 0.0
        %1660 = vmatprep.subr.mxu0 0.0
        %1661 = vmatpush1.msra.mxu0 0.0
        %1662 = vmatprep.subr.mxu0 0.0
        %1663 = vmatpush1.msra.mxu0 0.0
        %1664 = vmatprep.subr.mxu0 0.0
        %1665 = vmatpush1.msra.mxu0 0.0
        %1666 = vmatprep.subr.mxu0 0.0
        %1667 = vmatpush1.msra.mxu0 0.0
        %1668 = vmatprep.subr.mxu0 0.0
        %1669 = vmatpush1.msra.mxu0 0.0
        %1670 = vmatprep.mubr.f32.mxu0 0.0
        %1671 = vmatmul.mubr.f32.gmra.mrb[0].mxu0 %v1601
        %v1672 = vpop.f32.mrb[0].mxu0
        %v1673 = vadd.f32 %v1592, %v1672
        %v1674 = vpop.f32.mrb[0].mxu0
        %1675 = vmatprep.mubr.f32.mxu0 0.0
        %1676 = vmatmul.mubr.f32.gmra.mrb[0].mxu0 %v1604
        %v1677 = vpop.f32.mrb[0].mxu0
        %v1678 = vadd.f32 %v1597, %v1677
        %v1679 = vpop.f32.mrb[0].mxu0
        %1680 = vdwg.mxu0
        %v1681 = vld [vmem:[%s1088] ss:$2 sm:$0xf]
        %v1682 = vld [vmem:[%s1090] ss:$2 sm:$0xf]
        %v1683 = vld [vmem:[%s1092] ss:$2 sm:$0xf]
        %v1684 = vld [vmem:[%s1094] ss:$2 sm:$0xf]
        %v1685 = vld [vmem:[%s1104] ss:$2 sm:$0xf]
        %v1686 = vld [vmem:[%s1106] ss:$2 sm:$0xf]
        %v1687 = vld [vmem:[%s1108] ss:$2 sm:$0xf]
        %v1688 = vld [vmem:[%s1110] ss:$2 sm:$0xf]
        %v1689 = vld [vmem:[%s1120] ss:$2 sm:$0xf]
        %v1690 = vld [vmem:[%s1122] ss:$2 sm:$0xf]
        %v1691 = vld [vmem:[%s1124] ss:$2 sm:$0xf]
        %v1692 = vld [vmem:[%s1126] ss:$2 sm:$0xf]
        %v1697 = vcombine.low %v1681, %v1682
        %v1698 = vcombine.low %v1683, %v1684
        %v1705 = vcombine.low %v1685, %v1686
        %v1706 = vcombine.low %v1687, %v1688
        %1707 = vrot.lane.b32.xlu0 %v1705, 8
        %v1708 = vpop.permute.xlu0 %1707
        %1709 = vrot.lane.b32.xlu0 %v1706, 8
        %v1710 = vpop.permute.xlu0 %1709
        %v1717 = vcombine.low %v1689, %v1690
        %v1718 = vcombine.low %v1691, %v1692
        %1719 = vrot.lane.b32.xlu0 %v1717, 16
        %v1720 = vpop.permute.xlu0 %1719
        %1721 = vrot.lane.b32.xlu0 %v1718, 16
        %v1722 = vpop.permute.xlu0 %1721
        %v1725 = vsel %vm478, %v1697, %v1708
        %v1726 = vsel %vm478, %v1698, %v1710
        %v1727 = vsel %vm686, %v1725, %v1720
        %v1728 = vsel %vm686, %v1726, %v1722
        %s1729 = scalar_lea.vmem %s3, 48
        %v1730 = vld [vmem:[%s1729] sm:$0xff]
        %v1731 = vld [vmem:[%s1729 + $0x8] sm:$0xff]
        %v1732 = vld [vmem:[%s1729 + $0x10] sm:$0xff]
        %v1734 = vsel %vm829, %v1727, 0
        %v1737 = vsel %vm829, %v1728, 0
        %1739 = vmatprep.subr.mxu0 0.0
        %1740 = vmatpush1.msra.mxu0 %v1730
        %1741 = vmatprep.subr.mxu0 0.0
        %1742 = vmatpush1.msra.mxu0 %v1731
        %1743 = vmatprep.subr.mxu0 0.0
        %1744 = vmatpush1.msra.mxu0 %v1732
        %1745 = vmatprep.subr.mxu0 0.0
        %1746 = vmatpush1.msra.mxu0 0.0
        %1747 = vmatprep.subr.mxu0 0.0
        %1748 = vmatpush1.msra.mxu0 0.0
        %1749 = vmatprep.subr.mxu0 0.0
        %1750 = vmatpush1.msra.mxu0 0.0
        %1751 = vmatprep.subr.mxu0 0.0
        %1752 = vmatpush1.msra.mxu0 0.0
        %1753 = vmatprep.subr.mxu0 0.0
        %1754 = vmatpush1.msra.mxu0 0.0
        %1755 = vmatprep.subr.mxu0 0.0
        %1756 = vmatpush1.msra.mxu0 0.0
        %1757 = vmatprep.subr.mxu0 0.0
        %1758 = vmatpush1.msra.mxu0 0.0
        %1759 = vmatprep.subr.mxu0 0.0
        %1760 = vmatpush1.msra.mxu0 0.0
        %1761 = vmatprep.subr.mxu0 0.0
        %1762 = vmatpush1.msra.mxu0 0.0
        %1763 = vmatprep.subr.mxu0 0.0
        %1764 = vmatpush1.msra.mxu0 0.0
        %1765 = vmatprep.subr.mxu0 0.0
        %1766 = vmatpush1.msra.mxu0 0.0
        %1767 = vmatprep.subr.mxu0 0.0
        %1768 = vmatpush1.msra.mxu0 0.0
        %1769 = vmatprep.subr.mxu0 0.0
        %1770 = vmatpush1.msra.mxu0 0.0
        %1771 = vmatprep.subr.mxu0 0.0
        %1772 = vmatpush1.msra.mxu0 0.0
        %1773 = vmatprep.subr.mxu0 0.0
        %1774 = vmatpush1.msra.mxu0 0.0
        %1775 = vmatprep.subr.mxu0 0.0
        %1776 = vmatpush1.msra.mxu0 0.0
        %1777 = vmatprep.subr.mxu0 0.0
        %1778 = vmatpush1.msra.mxu0 0.0
        %1779 = vmatprep.subr.mxu0 0.0
        %1780 = vmatpush1.msra.mxu0 0.0
        %1781 = vmatprep.subr.mxu0 0.0
        %1782 = vmatpush1.msra.mxu0 0.0
        %1783 = vmatprep.subr.mxu0 0.0
        %1784 = vmatpush1.msra.mxu0 0.0
        %1785 = vmatprep.subr.mxu0 0.0
        %1786 = vmatpush1.msra.mxu0 0.0
        %1787 = vmatprep.subr.mxu0 0.0
        %1788 = vmatpush1.msra.mxu0 0.0
        %1789 = vmatprep.subr.mxu0 0.0
        %1790 = vmatpush1.msra.mxu0 0.0
        %1791 = vmatprep.subr.mxu0 0.0
        %1792 = vmatpush1.msra.mxu0 0.0
        %1793 = vmatprep.subr.mxu0 0.0
        %1794 = vmatpush1.msra.mxu0 0.0
        %1795 = vmatprep.subr.mxu0 0.0
        %1796 = vmatpush1.msra.mxu0 0.0
        %1797 = vmatprep.subr.mxu0 0.0
        %1798 = vmatpush1.msra.mxu0 0.0
        %1799 = vmatprep.subr.mxu0 0.0
        %1800 = vmatpush1.msra.mxu0 0.0
        %1801 = vmatprep.subr.mxu0 0.0
        %1802 = vmatpush1.msra.mxu0 0.0
        %1803 = vmatprep.mubr.f32.mxu0 0.0
        %1804 = vmatmul.mubr.f32.gmra.mrb[0].mxu0 %v1734
        %v1805 = vpop.f32.mrb[0].mxu0
        %v1806 = vadd.f32 0.0, %v1805
        %v1807 = vpop.f32.mrb[0].mxu0
        %1808 = vmatprep.mubr.f32.mxu0 0.0
        %1809 = vmatmul.mubr.f32.gmra.mrb[0].mxu0 %v1737
        %v1810 = vpop.f32.mrb[0].mxu0
        %v1811 = vadd.f32 0.0, %v1810
        %v1812 = vpop.f32.mrb[0].mxu0
        %1813 = vdwg.mxu0
        %v1814 = vadd.f32 %v1673, %v1806
        %v1815 = vadd.f32 %v1678, %v1811
        %v1816 = vld [vmem:[%s4] sm:$0x1]
        %v1818 = vlaneseq
        %v1819 = vshrl.u32 %v1818, 7
        %v1820 = vsub.s32 0, %v1819
        %v1821 = vrot.slane %v1816, %v1820
        %v1823 = vadd.f32 %v1814, %v1821
        %v1824 = vadd.f32 %v1815, %v1821
        %1825 = vst.msk [vmem:[%s445] sm:$0xff] %vm478, %v1823
        %1826 = vst.msk [vmem:[%s445 + $0x8] sm:$0xff] %vm478, %v1824
        %v1827 = vmax.f32 %v1823, 0.0
        %v1828 = vmax.f32 %v1824, 0.0
        %v1831 = vcombine.high %v1827, %v1827
        %v1832 = vcombine.high %v1828, %v1828
        %vm1835 = vcmask 62464
        %1836 = vst.msk [vmem:[#allocation2] sm:$0x3f] %vm1835, 0.0
        %1837 = vst.msk [vmem:[#allocation2 + $0x18] sm:$0x3f] %vm1835, 0.0
        %1838 = vst.msk [vmem:[#allocation2 + $0x30] sm:$0x3f] %vm1835, 0.0
        %1839 = vst.msk [vmem:[#allocation2 + $0x48] sm:$0x3f] %vm1835, 0.0
        %1840 = vst.msk [vmem:[#allocation2 + $0x60] sm:$0x3f] %vm1835, 0.0
        %1841 = vst.msk [vmem:[#allocation2 + $0x78] sm:$0x3f] %vm1835, 0.0
        %vm1842 = vcmask 60416
        %1843 = vst.msk [vmem:[%s534 + $0x1] sm:$0xf] %vm1842, %v1827
        %1844 = vst.msk [vmem:[%s534 + $0x19] sm:$0xf] %vm1842, %v1831
        %1845 = vst.msk [vmem:[%s534 + $0x31] sm:$0xf] %vm1842, %v1828
        %1846 = vst.msk [vmem:[%s534 + $0x49] sm:$0xf] %vm1842, %v1832
        %v1847 = vld [vmem:[#allocation2] ss:$2 sm:$0x3]
        %v1848 = vld [vmem:[%s568] ss:$2 sm:$0x3]
        %v1849 = vld [vmem:[%s582] ss:$2 sm:$0x3]
        %v1850 = vld [vmem:[%s584] ss:$2 sm:$0x3]
        %v1851 = vld [vmem:[%s598] ss:$2 sm:$0x3]
        %v1852 = vld [vmem:[%s600] ss:$2 sm:$0x3]
        %v1855 = vcombine.low %v1847, %v1848
        %v1857 = vunpack.c.l.s4 1983009808
        %v1858 = vunpack.c.0.s8 %v1857
        %v1859 = vlaneseq
        %v1860 = vshrl.u32 %v1859, 7
        %v1861 = vsub.s32 %v1858, %v1860
        %v1862 = vrot.slane %v1855, %v1861
        %v1866 = vcombine.low %v1849, %v1850
        %v1868 = vunpack.c.l.s4 1983009808
        %v1869 = vunpack.c.0.s8 %v1868
        %v1870 = vlaneseq
        %v1871 = vshrl.u32 %v1870, 7
        %v1872 = vsub.s32 %v1869, %v1871
        %v1873 = vrot.slane %v1866, %v1872
        %1874 = vrot.lane.b32.xlu0 %v1873, 8
        %v1875 = vpop.permute.xlu0 %1874
        %v1879 = vcombine.low %v1851, %v1852
        %v1881 = vunpack.c.l.s4 1983009808
        %v1882 = vunpack.c.0.s8 %v1881
        %v1883 = vlaneseq
        %v1884 = vshrl.u32 %v1883, 7
        %v1885 = vsub.s32 %v1882, %v1884
        %v1886 = vrot.slane %v1879, %v1885
        %1887 = vrot.lane.b32.xlu0 %v1886, 16
        %v1888 = vpop.permute.xlu0 %1887
        %v1890 = vsel %vm478, %v1862, %v1875
        %v1891 = vsel %vm686, %v1890, %v1888
        %v1892 = vld [vmem:[%s5] sm:$0xff]
        %v1893 = vld [vmem:[%s5 + $0x8] sm:$0xff]
        %v1894 = vld [vmem:[%s5 + $0x10] sm:$0xff]
        %v1895 = vld [vmem:[%s534] ss:$2 sm:$0x3]
        %v1896 = vld [vmem:[%s699] ss:$2 sm:$0x3]
        %v1897 = vld [vmem:[%s713] ss:$2 sm:$0x3]
        %v1898 = vld [vmem:[%s715] ss:$2 sm:$0x3]
        %v1899 = vld [vmem:[%s729] ss:$2 sm:$0x3]
        %v1900 = vld [vmem:[%s731] ss:$2 sm:$0x3]
        %v1903 = vcombine.low %v1895, %v1896
        %v1905 = vunpack.c.l.s4 1983009808
        %v1906 = vunpack.c.0.s8 %v1905
        %v1907 = vlaneseq
        %v1908 = vshrl.u32 %v1907, 7
        %v1909 = vsub.s32 %v1906, %v1908
        %v1910 = vrot.slane %v1903, %v1909
        %v1914 = vcombine.low %v1897, %v1898
        %v1916 = vunpack.c.l.s4 1983009808
        %v1917 = vunpack.c.0.s8 %v1916
        %v1918 = vlaneseq
        %v1919 = vshrl.u32 %v1918, 7
        %v1920 = vsub.s32 %v1917, %v1919
        %v1921 = vrot.slane %v1914, %v1920
        %1922 = vrot.lane.b32.xlu0 %v1921, 8
        %v1923 = vpop.permute.xlu0 %1922
        %v1927 = vcombine.low %v1899, %v1900
        %v1929 = vunpack.c.l.s4 1983009808
        %v1930 = vunpack.c.0.s8 %v1929
        %v1931 = vlaneseq
        %v1932 = vshrl.u32 %v1931, 7
        %v1933 = vsub.s32 %v1930, %v1932
        %v1934 = vrot.slane %v1927, %v1933
        %1935 = vrot.lane.b32.xlu0 %v1934, 16
        %v1936 = vpop.permute.xlu0 %1935
        %v1938 = vsel %vm478, %v1910, %v1923
        %v1939 = vsel %vm686, %v1938, %v1936
        %s1940 = scalar_lea.vmem %s5, 24
        %v1941 = vld [vmem:[%s1940] sm:$0xff]
        %v1942 = vld [vmem:[%s1940 + $0x8] sm:$0xff]
        %v1943 = vld [vmem:[%s1940 + $0x10] sm:$0xff]
        %v1945 = vsel %vm829, %v1939, 0
        %1947 = vmatprep.subr.mxu0 0.0
        %1948 = vmatpush1.msra.mxu0 %v1941
        %1949 = vmatprep.subr.mxu0 0.0
        %1950 = vmatpush1.msra.mxu0 %v1942
        %1951 = vmatprep.subr.mxu0 0.0
        %1952 = vmatpush1.msra.mxu0 %v1943
        %1953 = vmatprep.subr.mxu0 0.0
        %1954 = vmatpush1.msra.mxu0 0.0
        %1955 = vmatprep.subr.mxu0 0.0
        %1956 = vmatpush1.msra.mxu0 0.0
        %1957 = vmatprep.subr.mxu0 0.0
        %1958 = vmatpush1.msra.mxu0 0.0
        %1959 = vmatprep.subr.mxu0 0.0
        %1960 = vmatpush1.msra.mxu0 0.0
        %1961 = vmatprep.subr.mxu0 0.0
        %1962 = vmatpush1.msra.mxu0 0.0
        %1963 = vmatprep.subr.mxu0 0.0
        %1964 = vmatpush1.msra.mxu0 0.0
        %1965 = vmatprep.subr.mxu0 0.0
        %1966 = vmatpush1.msra.mxu0 0.0
        %1967 = vmatprep.subr.mxu0 0.0
        %1968 = vmatpush1.msra.mxu0 0.0
        %1969 = vmatprep.subr.mxu0 0.0
        %1970 = vmatpush1.msra.mxu0 0.0
        %1971 = vmatprep.subr.mxu0 0.0
        %1972 = vmatpush1.msra.mxu0 0.0
        %1973 = vmatprep.subr.mxu0 0.0
        %1974 = vmatpush1.msra.mxu0 0.0
        %1975 = vmatprep.subr.mxu0 0.0
        %1976 = vmatpush1.msra.mxu0 0.0
        %1977 = vmatprep.subr.mxu0 0.0
        %1978 = vmatpush1.msra.mxu0 0.0
        %1979 = vmatprep.subr.mxu0 0.0
        %1980 = vmatpush1.msra.mxu0 0.0
        %1981 = vmatprep.subr.mxu0 0.0
        %1982 = vmatpush1.msra.mxu0 0.0
        %1983 = vmatprep.subr.mxu0 0.0
        %1984 = vmatpush1.msra.mxu0 0.0
        %1985 = vmatprep.subr.mxu0 0.0
        %1986 = vmatpush1.msra.mxu0 0.0
        %1987 = vmatprep.subr.mxu0 0.0
        %1988 = vmatpush1.msra.mxu0 0.0
        %1989 = vmatprep.subr.mxu0 0.0
        %1990 = vmatpush1.msra.mxu0 0.0
        %1991 = vmatprep.subr.mxu0 0.0
        %1992 = vmatpush1.msra.mxu0 0.0
        %1993 = vmatprep.subr.mxu0 0.0
        %1994 = vmatpush1.msra.mxu0 0.0
        %1995 = vmatprep.subr.mxu0 0.0
        %1996 = vmatpush1.msra.mxu0 0.0
        %1997 = vmatprep.subr.mxu0 0.0
        %1998 = vmatpush1.msra.mxu0 0.0
        %1999 = vmatprep.subr.mxu0 0.0
        %2000 = vmatpush1.msra.mxu0 0.0
        %2001 = vmatprep.subr.mxu0 0.0
        %2002 = vmatpush1.msra.mxu0 0.0
        %2003 = vmatprep.subr.mxu0 0.0
        %2004 = vmatpush1.msra.mxu0 0.0
        %2005 = vmatprep.subr.mxu0 0.0
        %2006 = vmatpush1.msra.mxu0 0.0
        %2007 = vmatprep.subr.mxu0 0.0
        %2008 = vmatpush1.msra.mxu0 0.0
        %2009 = vmatprep.subr.mxu0 0.0
        %2010 = vmatpush1.msra.mxu0 0.0
        %2011 = vmatprep.mubr.f32.mxu0 0.0
        %2012 = vmatmul.mubr.f32.gmra.mrb[0].mxu0 %v1945
        %v2013 = vpop.f32.mrb[0].mxu0
        %v2014 = vadd.f32 0.0, %v2013
        %v2015 = vpop.f32.mrb[0].mxu0
        %2016 = vdwg.mxu0
        %v2018 = vsel %vm829, %v1891, 0
        %2020 = vmatprep.subr.mxu0 0.0
        %2021 = vmatpush1.msra.mxu0 %v1892
        %2022 = vmatprep.subr.mxu0 0.0
        %2023 = vmatpush1.msra.mxu0 %v1893
        %2024 = vmatprep.subr.mxu0 0.0
        %2025 = vmatpush1.msra.mxu0 %v1894
        %2026 = vmatprep.subr.mxu0 0.0
        %2027 = vmatpush1.msra.mxu0 0.0
        %2028 = vmatprep.subr.mxu0 0.0
        %2029 = vmatpush1.msra.mxu0 0.0
        %2030 = vmatprep.subr.mxu0 0.0
        %2031 = vmatpush1.msra.mxu0 0.0
        %2032 = vmatprep.subr.mxu0 0.0
        %2033 = vmatpush1.msra.mxu0 0.0
        %2034 = vmatprep.subr.mxu0 0.0
        %2035 = vmatpush1.msra.mxu0 0.0
        %2036 = vmatprep.subr.mxu0 0.0
        %2037 = vmatpush1.msra.mxu0 0.0
        %2038 = vmatprep.subr.mxu0 0.0
        %2039 = vmatpush1.msra.mxu0 0.0
        %2040 = vmatprep.subr.mxu0 0.0
        %2041 = vmatpush1.msra.mxu0 0.0
        %2042 = vmatprep.subr.mxu0 0.0
        %2043 = vmatpush1.msra.mxu0 0.0
        %2044 = vmatprep.subr.mxu0 0.0
        %2045 = vmatpush1.msra.mxu0 0.0
        %2046 = vmatprep.subr.mxu0 0.0
        %2047 = vmatpush1.msra.mxu0 0.0
        %2048 = vmatprep.subr.mxu0 0.0
        %2049 = vmatpush1.msra.mxu0 0.0
        %2050 = vmatprep.subr.mxu0 0.0
        %2051 = vmatpush1.msra.mxu0 0.0
        %2052 = vmatprep.subr.mxu0 0.0
        %2053 = vmatpush1.msra.mxu0 0.0
        %2054 = vmatprep.subr.mxu0 0.0
        %2055 = vmatpush1.msra.mxu0 0.0
        %2056 = vmatprep.subr.mxu0 0.0
        %2057 = vmatpush1.msra.mxu0 0.0
        %2058 = vmatprep.subr.mxu0 0.0
        %2059 = vmatpush1.msra.mxu0 0.0
        %2060 = vmatprep.subr.mxu0 0.0
        %2061 = vmatpush1.msra.mxu0 0.0
        %2062 = vmatprep.subr.mxu0 0.0
        %2063 = vmatpush1.msra.mxu0 0.0
        %2064 = vmatprep.subr.mxu0 0.0
        %2065 = vmatpush1.msra.mxu0 0.0
        %2066 = vmatprep.subr.mxu0 0.0
        %2067 = vmatpush1.msra.mxu0 0.0
        %2068 = vmatprep.subr.mxu0 0.0
        %2069 = vmatpush1.msra.mxu0 0.0
        %2070 = vmatprep.subr.mxu0 0.0
        %2071 = vmatpush1.msra.mxu0 0.0
        %2072 = vmatprep.subr.mxu0 0.0
        %2073 = vmatpush1.msra.mxu0 0.0
        %2074 = vmatprep.subr.mxu0 0.0
        %2075 = vmatpush1.msra.mxu0 0.0
        %2076 = vmatprep.subr.mxu0 0.0
        %2077 = vmatpush1.msra.mxu0 0.0
        %2078 = vmatprep.subr.mxu0 0.0
        %2079 = vmatpush1.msra.mxu0 0.0
        %2080 = vmatprep.subr.mxu0 0.0
        %2081 = vmatpush1.msra.mxu0 0.0
        %2082 = vmatprep.subr.mxu0 0.0
        %2083 = vmatpush1.msra.mxu0 0.0
        %2084 = vmatprep.mubr.f32.mxu0 0.0
        %2085 = vmatmul.mubr.f32.gmra.mrb[0].mxu0 %v2018
        %v2086 = vpop.f32.mrb[0].mxu0
        %v2087 = vadd.f32 %v2014, %v2086
        %v2088 = vpop.f32.mrb[0].mxu0
        %2089 = vdwg.mxu0
        %v2090 = vld [vmem:[%s1088] ss:$2 sm:$0x3]
        %v2091 = vld [vmem:[%s1090] ss:$2 sm:$0x3]
        %v2092 = vld [vmem:[%s1104] ss:$2 sm:$0x3]
        %v2093 = vld [vmem:[%s1106] ss:$2 sm:$0x3]
        %v2094 = vld [vmem:[%s1120] ss:$2 sm:$0x3]
        %v2095 = vld [vmem:[%s1122] ss:$2 sm:$0x3]
        %v2098 = vcombine.low %v2090, %v2091
        %v2100 = vunpack.c.l.s4 1983009808
        %v2101 = vunpack.c.0.s8 %v2100
        %v2102 = vlaneseq
        %v2103 = vshrl.u32 %v2102, 7
        %v2104 = vsub.s32 %v2101, %v2103
        %v2105 = vrot.slane %v2098, %v2104
        %v2109 = vcombine.low %v2092, %v2093
        %v2111 = vunpack.c.l.s4 1983009808
        %v2112 = vunpack.c.0.s8 %v2111
        %v2113 = vlaneseq
        %v2114 = vshrl.u32 %v2113, 7
        %v2115 = vsub.s32 %v2112, %v2114
        %v2116 = vrot.slane %v2109, %v2115
        %2117 = vrot.lane.b32.xlu0 %v2116, 8
        %v2118 = vpop.permute.xlu0 %2117
        %v2122 = vcombine.low %v2094, %v2095
        %v2124 = vunpack.c.l.s4 1983009808
        %v2125 = vunpack.c.0.s8 %v2124
        %v2126 = vlaneseq
        %v2127 = vshrl.u32 %v2126, 7
        %v2128 = vsub.s32 %v2125, %v2127
        %v2129 = vrot.slane %v2122, %v2128
        %2130 = vrot.lane.b32.xlu0 %v2129, 16
        %v2131 = vpop.permute.xlu0 %2130
        %v2133 = vsel %vm478, %v2105, %v2118
        %v2134 = vsel %vm686, %v2133, %v2131
        %s2135 = scalar_lea.vmem %s5, 48
        %v2136 = vld [vmem:[%s2135] sm:$0xff]
        %v2137 = vld [vmem:[%s2135 + $0x8] sm:$0xff]
        %v2138 = vld [vmem:[%s2135 + $0x10] sm:$0xff]
        %v2140 = vsel %vm829, %v2134, 0
        %2142 = vmatprep.subr.mxu0 0.0
        %2143 = vmatpush1.msra.mxu0 %v2136
        %2144 = vmatprep.subr.mxu0 0.0
        %2145 = vmatpush1.msra.mxu0 %v2137
        %2146 = vmatprep.subr.mxu0 0.0
        %2147 = vmatpush1.msra.mxu0 %v2138
        %2148 = vmatprep.subr.mxu0 0.0
        %2149 = vmatpush1.msra.mxu0 0.0
        %2150 = vmatprep.subr.mxu0 0.0
        %2151 = vmatpush1.msra.mxu0 0.0
        %2152 = vmatprep.subr.mxu0 0.0
        %2153 = vmatpush1.msra.mxu0 0.0
        %2154 = vmatprep.subr.mxu0 0.0
        %2155 = vmatpush1.msra.mxu0 0.0
        %2156 = vmatprep.subr.mxu0 0.0
        %2157 = vmatpush1.msra.mxu0 0.0
        %2158 = vmatprep.subr.mxu0 0.0
        %2159 = vmatpush1.msra.mxu0 0.0
        %2160 = vmatprep.subr.mxu0 0.0
        %2161 = vmatpush1.msra.mxu0 0.0
        %2162 = vmatprep.subr.mxu0 0.0
        %2163 = vmatpush1.msra.mxu0 0.0
        %2164 = vmatprep.subr.mxu0 0.0
        %2165 = vmatpush1.msra.mxu0 0.0
        %2166 = vmatprep.subr.mxu0 0.0
        %2167 = vmatpush1.msra.mxu0 0.0
        %2168 = vmatprep.subr.mxu0 0.0
        %2169 = vmatpush1.msra.mxu0 0.0
        %2170 = vmatprep.subr.mxu0 0.0
        %2171 = vmatpush1.msra.mxu0 0.0
        %2172 = vmatprep.subr.mxu0 0.0
        %2173 = vmatpush1.msra.mxu0 0.0
        %2174 = vmatprep.subr.mxu0 0.0
        %2175 = vmatpush1.msra.mxu0 0.0
        %2176 = vmatprep.subr.mxu0 0.0
        %2177 = vmatpush1.msra.mxu0 0.0
        %2178 = vmatprep.subr.mxu0 0.0
        %2179 = vmatpush1.msra.mxu0 0.0
        %2180 = vmatprep.subr.mxu0 0.0
        %2181 = vmatpush1.msra.mxu0 0.0
        %2182 = vmatprep.subr.mxu0 0.0
        %2183 = vmatpush1.msra.mxu0 0.0
        %2184 = vmatprep.subr.mxu0 0.0
        %2185 = vmatpush1.msra.mxu0 0.0
        %2186 = vmatprep.subr.mxu0 0.0
        %2187 = vmatpush1.msra.mxu0 0.0
        %2188 = vmatprep.subr.mxu0 0.0
        %2189 = vmatpush1.msra.mxu0 0.0
        %2190 = vmatprep.subr.mxu0 0.0
        %2191 = vmatpush1.msra.mxu0 0.0
        %2192 = vmatprep.subr.mxu0 0.0
        %2193 = vmatpush1.msra.mxu0 0.0
        %2194 = vmatprep.subr.mxu0 0.0
        %2195 = vmatpush1.msra.mxu0 0.0
        %2196 = vmatprep.subr.mxu0 0.0
        %2197 = vmatpush1.msra.mxu0 0.0
        %2198 = vmatprep.subr.mxu0 0.0
        %2199 = vmatpush1.msra.mxu0 0.0
        %2200 = vmatprep.subr.mxu0 0.0
        %2201 = vmatpush1.msra.mxu0 0.0
        %2202 = vmatprep.subr.mxu0 0.0
        %2203 = vmatpush1.msra.mxu0 0.0
        %2204 = vmatprep.subr.mxu0 0.0
        %2205 = vmatpush1.msra.mxu0 0.0
        %2206 = vmatprep.mubr.f32.mxu0 0.0
        %2207 = vmatmul.mubr.f32.gmra.mrb[0].mxu0 %v2140
        %v2208 = vpop.f32.mrb[0].mxu0
        %v2209 = vadd.f32 0.0, %v2208
        %v2210 = vpop.f32.mrb[0].mxu0
        %2211 = vdwg.mxu0
        %v2212 = vadd.f32 %v2087, %v2209
        %v2213 = vld [vmem:[%s6] sm:$0x1]
        %v2215 = vlaneseq
        %v2216 = vshrl.u32 %v2215, 7
        %v2217 = vsub.s32 0, %v2216
        %v2218 = vrot.slane %v2213, %v2217
        %v2220 = vadd.f32 %v2212, %v2218
        %2221 = vst.msk [vmem:[%s424] sm:$0xf] %vm1842, %v2220
        %v2222 = vmax.f32 %v2220, 0.0
        %v2225 = vunpack.c.l.s4 1983009808
        %v2226 = vunpack.c.0.s8 %v2225
        %v2227 = vlaneseq
        %v2228 = vshrl.u32 %v2227, 7
        %v2229 = vsub.s32 %v2226, %v2228
        %v2230 = vrot.slane %v2222, %v2229
        %v2231 = vcombine.high %v2230, %v2230
        %2234 = vst.msk [vmem:[#allocation2] sm:$0xf] %vm1842, 0.0
        %2235 = vst.msk [vmem:[#allocation2 + $0x18] sm:$0xf] %vm1842, 0.0
        %2236 = vst.msk [vmem:[#allocation2 + $0x30] sm:$0xf] %vm1842, 0.0
        %2237 = vst.msk [vmem:[#allocation2 + $0x48] sm:$0xf] %vm1842, 0.0
        %2238 = vst.msk [vmem:[%s534 + $0x1] sm:$0x3] %vm481, %v2230
        %2239 = vst.msk [vmem:[%s534 + $0x19] sm:$0x3] %vm481, %v2231
        %v2240 = vld [vmem:[#allocation2] ss:$2 sm:$0x1]
        %v2241 = vld [vmem:[%s582] ss:$2 sm:$0x1]
        %v2242 = vld [vmem:[%s598] ss:$2 sm:$0x1]
        %2244 = vrot.lane.b32.xlu0 %v2241, 8
        %v2245 = vpop.permute.xlu0 %2244
        %2248 = vrot.lane.b32.xlu0 %v2242, 16
        %v2249 = vpop.permute.xlu0 %2248
        %v2251 = vsel %vm478, %v2240, %v2245
        %v2252 = vsel %vm686, %v2251, %v2249
        %v2253 = vld [vmem:[%s7] sm:$0xff]
        %v2254 = vld [vmem:[%s7 + $0x8] sm:$0xff]
        %v2255 = vld [vmem:[%s7 + $0x10] sm:$0xff]
        %v2256 = vld [vmem:[%s534] ss:$2 sm:$0x1]
        %v2257 = vld [vmem:[%s713] ss:$2 sm:$0x1]
        %v2258 = vld [vmem:[%s729] ss:$2 sm:$0x1]
        %2260 = vrot.lane.b32.xlu0 %v2257, 8
        %v2261 = vpop.permute.xlu0 %2260
        %2264 = vrot.lane.b32.xlu0 %v2258, 16
        %v2265 = vpop.permute.xlu0 %2264
        %v2267 = vsel %vm478, %v2256, %v2261
        %v2268 = vsel %vm686, %v2267, %v2265
        %s2269 = scalar_lea.vmem %s7, 24
        %v2270 = vld [vmem:[%s2269] sm:$0xff]
        %v2271 = vld [vmem:[%s2269 + $0x8] sm:$0xff]
        %v2272 = vld [vmem:[%s2269 + $0x10] sm:$0xff]
        %v2274 = vsel %vm829, %v2268, 0
        %2276 = vmatprep.subr.mxu0 0.0
        %2277 = vmatpush1.msra.mxu0 %v2270
        %2278 = vmatprep.subr.mxu0 0.0
        %2279 = vmatpush1.msra.mxu0 %v2271
        %2280 = vmatprep.subr.mxu0 0.0
        %2281 = vmatpush1.msra.mxu0 %v2272
        %2282 = vmatprep.subr.mxu0 0.0
        %2283 = vmatpush1.msra.mxu0 0.0
        %2284 = vmatprep.subr.mxu0 0.0
        %2285 = vmatpush1.msra.mxu0 0.0
        %2286 = vmatprep.subr.mxu0 0.0
        %2287 = vmatpush1.msra.mxu0 0.0
        %2288 = vmatprep.subr.mxu0 0.0
        %2289 = vmatpush1.msra.mxu0 0.0
        %2290 = vmatprep.subr.mxu0 0.0
        %2291 = vmatpush1.msra.mxu0 0.0
        %2292 = vmatprep.subr.mxu0 0.0
        %2293 = vmatpush1.msra.mxu0 0.0
        %2294 = vmatprep.subr.mxu0 0.0
        %2295 = vmatpush1.msra.mxu0 0.0
        %2296 = vmatprep.subr.mxu0 0.0
        %2297 = vmatpush1.msra.mxu0 0.0
        %2298 = vmatprep.subr.mxu0 0.0
        %2299 = vmatpush1.msra.mxu0 0.0
        %2300 = vmatprep.subr.mxu0 0.0
        %2301 = vmatpush1.msra.mxu0 0.0
        %2302 = vmatprep.subr.mxu0 0.0
        %2303 = vmatpush1.msra.mxu0 0.0
        %2304 = vmatprep.subr.mxu0 0.0
        %2305 = vmatpush1.msra.mxu0 0.0
        %2306 = vmatprep.subr.mxu0 0.0
        %2307 = vmatpush1.msra.mxu0 0.0
        %2308 = vmatprep.subr.mxu0 0.0
        %2309 = vmatpush1.msra.mxu0 0.0
        %2310 = vmatprep.subr.mxu0 0.0
        %2311 = vmatpush1.msra.mxu0 0.0
        %2312 = vmatprep.subr.mxu0 0.0
        %2313 = vmatpush1.msra.mxu0 0.0
        %2314 = vmatprep.subr.mxu0 0.0
        %2315 = vmatpush1.msra.mxu0 0.0
        %2316 = vmatprep.subr.mxu0 0.0
        %2317 = vmatpush1.msra.mxu0 0.0
        %2318 = vmatprep.subr.mxu0 0.0
        %2319 = vmatpush1.msra.mxu0 0.0
        %2320 = vmatprep.subr.mxu0 0.0
        %2321 = vmatpush1.msra.mxu0 0.0
        %2322 = vmatprep.subr.mxu0 0.0
        %2323 = vmatpush1.msra.mxu0 0.0
        %2324 = vmatprep.subr.mxu0 0.0
        %2325 = vmatpush1.msra.mxu0 0.0
        %2326 = vmatprep.subr.mxu0 0.0
        %2327 = vmatpush1.msra.mxu0 0.0
        %2328 = vmatprep.subr.mxu0 0.0
        %2329 = vmatpush1.msra.mxu0 0.0
        %2330 = vmatprep.subr.mxu0 0.0
        %2331 = vmatpush1.msra.mxu0 0.0
        %2332 = vmatprep.subr.mxu0 0.0
        %2333 = vmatpush1.msra.mxu0 0.0
        %2334 = vmatprep.subr.mxu0 0.0
        %2335 = vmatpush1.msra.mxu0 0.0
        %2336 = vmatprep.subr.mxu0 0.0
        %2337 = vmatpush1.msra.mxu0 0.0
        %2338 = vmatprep.subr.mxu0 0.0
        %2339 = vmatpush1.msra.mxu0 0.0
        %2340 = vmatprep.mubr.f32.mxu0 0.0
        %2341 = vmatmul.mubr.f32.gmra.mrb[0].mxu0 %v2274
        %v2342 = vpop.f32.mrb[0].mxu0
        %v2343 = vadd.f32 0.0, %v2342
        %v2344 = vpop.f32.mrb[0].mxu0
        %2345 = vdwg.mxu0
        %v2347 = vsel %vm829, %v2252, 0
        %2349 = vmatprep.subr.mxu0 0.0
        %2350 = vmatpush1.msra.mxu0 %v2253
        %2351 = vmatprep.subr.mxu0 0.0
        %2352 = vmatpush1.msra.mxu0 %v2254
        %2353 = vmatprep.subr.mxu0 0.0
        %2354 = vmatpush1.msra.mxu0 %v2255
        %2355 = vmatprep.subr.mxu0 0.0
        %2356 = vmatpush1.msra.mxu0 0.0
        %2357 = vmatprep.subr.mxu0 0.0
        %2358 = vmatpush1.msra.mxu0 0.0
        %2359 = vmatprep.subr.mxu0 0.0
        %2360 = vmatpush1.msra.mxu0 0.0
        %2361 = vmatprep.subr.mxu0 0.0
        %2362 = vmatpush1.msra.mxu0 0.0
        %2363 = vmatprep.subr.mxu0 0.0
        %2364 = vmatpush1.msra.mxu0 0.0
        %2365 = vmatprep.subr.mxu0 0.0
        %2366 = vmatpush1.msra.mxu0 0.0
        %2367 = vmatprep.subr.mxu0 0.0
        %2368 = vmatpush1.msra.mxu0 0.0
        %2369 = vmatprep.subr.mxu0 0.0
        %2370 = vmatpush1.msra.mxu0 0.0
        %2371 = vmatprep.subr.mxu0 0.0
        %2372 = vmatpush1.msra.mxu0 0.0
        %2373 = vmatprep.subr.mxu0 0.0
        %2374 = vmatpush1.msra.mxu0 0.0
        %2375 = vmatprep.subr.mxu0 0.0
        %2376 = vmatpush1.msra.mxu0 0.0
        %2377 = vmatprep.subr.mxu0 0.0
        %2378 = vmatpush1.msra.mxu0 0.0
        %2379 = vmatprep.subr.mxu0 0.0
        %2380 = vmatpush1.msra.mxu0 0.0
        %2381 = vmatprep.subr.mxu0 0.0
        %2382 = vmatpush1.msra.mxu0 0.0
        %2383 = vmatprep.subr.mxu0 0.0
        %2384 = vmatpush1.msra.mxu0 0.0
        %2385 = vmatprep.subr.mxu0 0.0
        %2386 = vmatpush1.msra.mxu0 0.0
        %2387 = vmatprep.subr.mxu0 0.0
        %2388 = vmatpush1.msra.mxu0 0.0
        %2389 = vmatprep.subr.mxu0 0.0
        %2390 = vmatpush1.msra.mxu0 0.0
        %2391 = vmatprep.subr.mxu0 0.0
        %2392 = vmatpush1.msra.mxu0 0.0
        %2393 = vmatprep.subr.mxu0 0.0
        %2394 = vmatpush1.msra.mxu0 0.0
        %2395 = vmatprep.subr.mxu0 0.0
        %2396 = vmatpush1.msra.mxu0 0.0
        %2397 = vmatprep.subr.mxu0 0.0
        %2398 = vmatpush1.msra.mxu0 0.0
        %2399 = vmatprep.subr.mxu0 0.0
        %2400 = vmatpush1.msra.mxu0 0.0
        %2401 = vmatprep.subr.mxu0 0.0
        %2402 = vmatpush1.msra.mxu0 0.0
        %2403 = vmatprep.subr.mxu0 0.0
        %2404 = vmatpush1.msra.mxu0 0.0
        %2405 = vmatprep.subr.mxu0 0.0
        %2406 = vmatpush1.msra.mxu0 0.0
        %2407 = vmatprep.subr.mxu0 0.0
        %2408 = vmatpush1.msra.mxu0 0.0
        %2409 = vmatprep.subr.mxu0 0.0
        %2410 = vmatpush1.msra.mxu0 0.0
        %2411 = vmatprep.subr.mxu0 0.0
        %2412 = vmatpush1.msra.mxu0 0.0
        %2413 = vmatprep.mubr.f32.mxu0 0.0
        %2414 = vmatmul.mubr.f32.gmra.mrb[0].mxu0 %v2347
        %v2415 = vpop.f32.mrb[0].mxu0
        %v2416 = vadd.f32 %v2343, %v2415
        %v2417 = vpop.f32.mrb[0].mxu0
        %2418 = vdwg.mxu0
        %v2419 = vld [vmem:[%s1088] ss:$2 sm:$0x1]
        %v2420 = vld [vmem:[%s1104] ss:$2 sm:$0x1]
        %v2421 = vld [vmem:[%s1120] ss:$2 sm:$0x1]
        %2423 = vrot.lane.b32.xlu0 %v2420, 8
        %v2424 = vpop.permute.xlu0 %2423
        %2427 = vrot.lane.b32.xlu0 %v2421, 16
        %v2428 = vpop.permute.xlu0 %2427
        %v2430 = vsel %vm478, %v2419, %v2424
        %v2431 = vsel %vm686, %v2430, %v2428
        %s2432 = scalar_lea.vmem %s7, 48
        %v2433 = vld [vmem:[%s2432] sm:$0xff]
        %v2434 = vld [vmem:[%s2432 + $0x8] sm:$0xff]
        %v2435 = vld [vmem:[%s2432 + $0x10] sm:$0xff]
        %v2437 = vsel %vm829, %v2431, 0
        %2439 = vmatprep.subr.mxu0 0.0
        %2440 = vmatpush1.msra.mxu0 %v2433
        %2441 = vmatprep.subr.mxu0 0.0
        %2442 = vmatpush1.msra.mxu0 %v2434
        %2443 = vmatprep.subr.mxu0 0.0
        %2444 = vmatpush1.msra.mxu0 %v2435
        %2445 = vmatprep.subr.mxu0 0.0
        %2446 = vmatpush1.msra.mxu0 0.0
        %2447 = vmatprep.subr.mxu0 0.0
        %2448 = vmatpush1.msra.mxu0 0.0
        %2449 = vmatprep.subr.mxu0 0.0
        %2450 = vmatpush1.msra.mxu0 0.0
        %2451 = vmatprep.subr.mxu0 0.0
        %2452 = vmatpush1.msra.mxu0 0.0
        %2453 = vmatprep.subr.mxu0 0.0
        %2454 = vmatpush1.msra.mxu0 0.0
        %2455 = vmatprep.subr.mxu0 0.0
        %2456 = vmatpush1.msra.mxu0 0.0
        %2457 = vmatprep.subr.mxu0 0.0
        %2458 = vmatpush1.msra.mxu0 0.0
        %2459 = vmatprep.subr.mxu0 0.0
        %2460 = vmatpush1.msra.mxu0 0.0
        %2461 = vmatprep.subr.mxu0 0.0
        %2462 = vmatpush1.msra.mxu0 0.0
        %2463 = vmatprep.subr.mxu0 0.0
        %2464 = vmatpush1.msra.mxu0 0.0
        %2465 = vmatprep.subr.mxu0 0.0
        %2466 = vmatpush1.msra.mxu0 0.0
        %2467 = vmatprep.subr.mxu0 0.0
        %2468 = vmatpush1.msra.mxu0 0.0
        %2469 = vmatprep.subr.mxu0 0.0
        %2470 = vmatpush1.msra.mxu0 0.0
        %2471 = vmatprep.subr.mxu0 0.0
        %2472 = vmatpush1.msra.mxu0 0.0
        %2473 = vmatprep.subr.mxu0 0.0
        %2474 = vmatpush1.msra.mxu0 0.0
        %2475 = vmatprep.subr.mxu0 0.0
        %2476 = vmatpush1.msra.mxu0 0.0
        %2477 = vmatprep.subr.mxu0 0.0
        %2478 = vmatpush1.msra.mxu0 0.0
        %2479 = vmatprep.subr.mxu0 0.0
        %2480 = vmatpush1.msra.mxu0 0.0
        %2481 = vmatprep.subr.mxu0 0.0
        %2482 = vmatpush1.msra.mxu0 0.0
        %2483 = vmatprep.subr.mxu0 0.0
        %2484 = vmatpush1.msra.mxu0 0.0
        %2485 = vmatprep.subr.mxu0 0.0
        %2486 = vmatpush1.msra.mxu0 0.0
        %2487 = vmatprep.subr.mxu0 0.0
        %2488 = vmatpush1.msra.mxu0 0.0
        %2489 = vmatprep.subr.mxu0 0.0
        %2490 = vmatpush1.msra.mxu0 0.0
        %2491 = vmatprep.subr.mxu0 0.0
        %2492 = vmatpush1.msra.mxu0 0.0
        %2493 = vmatprep.subr.mxu0 0.0
        %2494 = vmatpush1.msra.mxu0 0.0
        %2495 = vmatprep.subr.mxu0 0.0
        %2496 = vmatpush1.msra.mxu0 0.0
        %2497 = vmatprep.subr.mxu0 0.0
        %2498 = vmatpush1.msra.mxu0 0.0
        %2499 = vmatprep.subr.mxu0 0.0
        %2500 = vmatpush1.msra.mxu0 0.0
        %2501 = vmatprep.subr.mxu0 0.0
        %2502 = vmatpush1.msra.mxu0 0.0
        %2503 = vmatprep.mubr.f32.mxu0 0.0
        %2504 = vmatmul.mubr.f32.gmra.mrb[0].mxu0 %v2437
        %v2505 = vpop.f32.mrb[0].mxu0
        %v2506 = vadd.f32 0.0, %v2505
        %v2507 = vpop.f32.mrb[0].mxu0
        %2508 = vdwg.mxu0
        %v2509 = vadd.f32 %v2416, %v2506
        %v2510 = vld [vmem:[%s8] sm:$0x1]
        %v2511 = vadd.f32 %v2509, %v2510
        %vm2512 = vcmask 57344
        %2513 = vst.msk [vmem:[%s430] sm:$0x1] %vm2512, %v2511
        %p2514 = scmp.lt.s32.totalorder %s30, 1
        %s2515 = scalar_select %p2514, %s30, 1
        %s2516 = smul.addr %s2515, 8
        %s2517 = smul.addr %s2516, 8
        %s2518 = scalar_lea.vmem %s9, %s2517
        %p2519 = scmp.lt.s32.totalorder %s30, 1
        %s2520 = scalar_select %p2519, %s30, 1
        %s2521 = smul.addr %s2520, 2
        %s2522 = smul.addr %s2521, 8
        %s2523 = scalar_lea.vmem %s10, %s2522
        %s2524 = sand.u32 %s284, 1
        %s2525 = scalar_lea.sflag [#allocation4], %s2524
        %s2526 = sand.u32 %s284, 1
        %s2527 = smul.addr %s2526, 4
        %s2528 = scalar_lea.vmem [#allocation3], %s2527
        %s2529 = sand.u32 %s310, 1
        %s2530 = scalar_lea.sflag [#allocation6], %s2529
        %s2531 = sand.u32 %s310, 1
        %s2532 = scalar_lea.vmem [#allocation5], %s2531
        // Predicated region
        $region57: #{tpu_custom_call.1} parent=55 // pred_check
          %p2533 = pneg %p242
        $region58: #{tpu_custom_call.1} parent=55 // pred_check_branch
          %2535 = sbr.rel (%p2533) target = $region60
        $region59: #{tpu_custom_call.1} parent=55 // pred_region
          _
        $region60: #{tpu_custom_call.1} parent=55 // pred_fallthru
          _
        // Predicated region
        $region61: #{tpu_custom_call.1} parent=55 // pred_check
          %p2536 = pneg %p268
        $region62: #{tpu_custom_call.1} parent=55 // pred_check_branch
          %2538 = sbr.rel (%p2536) target = $region64
        $region63: #{tpu_custom_call.1} parent=55 // pred_region
          _
        $region64: #{tpu_custom_call.1} parent=55 // pred_fallthru
          _
        // Predicated region
        $region65: #{tpu_custom_call.1} parent=55 // pred_check
          %p2539 = pneg %p294
        $region66: #{tpu_custom_call.1} parent=55 // pred_check_branch
          %2541 = sbr.rel (%p2539) target = $region68
        $region67: #{tpu_custom_call.1} parent=55 // pred_region
          %s2543 = ssub.s32 64, 64
          %2544 = vsyncadd %s2525, %s2543
          %s2545 = smul.addr %s30, 64
          %s2546 = scalar_lea.hbm %s11, %s2545
          %s2548 = sshll.u32 %s2528, 4
          %s2549 = int_to_ptr.vmem [resolvable:$true] %s2548
          %2551 = dma.vmem_to_hbm [thread:$0]  %s2549, 64, %s2546, %s2525
        $region68: #{tpu_custom_call.1} parent=55 // pred_fallthru
          _
        // Predicated region
        $region69: #{tpu_custom_call.1} parent=55 // pred_check
          %p2552 = pneg %p320
        $region70: #{tpu_custom_call.1} parent=55 // pred_check_branch
          %2554 = sbr.rel (%p2552) target = $region72
        $region71: #{tpu_custom_call.1} parent=55 // pred_region
          %s2556 = ssub.s32 16, 16
          %2557 = vsyncadd %s2530, %s2556
          %s2558 = smul.addr %s30, 16
          %s2559 = scalar_lea.hbm %s12, %s2558
          %s2561 = sshll.u32 %s2532, 4
          %s2562 = int_to_ptr.vmem [resolvable:$true] %s2561
          %2564 = dma.vmem_to_hbm [thread:$0]  %s2562, 16, %s2559, %s2530
        $region72: #{tpu_custom_call.1} parent=55 // pred_fallthru
          _
      $region56: #{tpu_custom_call.1} parent=5 // pred_fallthru
        _
      %p2565 = scmp.le.s32.totalorder 2, %s25
      // Predicated region
      $region73: #{tpu_custom_call.1} parent=5 // pred_check
        %p2566 = pneg %p2565
      $region74: #{tpu_custom_call.1} parent=5 // pred_check_branch
        %2568 = sbr.rel (%p2566) target = $region76
      $region75: #{tpu_custom_call.1} parent=5 // pred_region
        %s2569 = ssub.s32 %s25, 2
        // Predicated region
        $region77: #{tpu_custom_call.1} parent=75 // pred_check
          %p2570 = pneg %p248
        $region78: #{tpu_custom_call.1} parent=75 // pred_check_branch
          %2572 = sbr.rel (%p2570) target = $region80
        $region79: #{tpu_custom_call.1} parent=75 // pred_region
          %p2573 = scmp.lt.s32.totalorder %s31, 1
          %s2574 = scalar_select %p2573, %s31, 1
          %s2575 = smul.addr %s2574, 8
          %s2576 = smul.addr %s2575, 8
          %s2577 = scalar_lea.vmem %s9, %s2576
        $region80: #{tpu_custom_call.1} parent=75 // pred_fallthru
          _
        // Predicated region
        $region81: #{tpu_custom_call.1} parent=75 // pred_check
          %p2578 = pneg %p274
        $region82: #{tpu_custom_call.1} parent=75 // pred_check_branch
          %2580 = sbr.rel (%p2578) target = $region84
        $region83: #{tpu_custom_call.1} parent=75 // pred_region
          %p2581 = scmp.lt.s32.totalorder %s31, 1
          %s2582 = scalar_select %p2581, %s31, 1
          %s2583 = smul.addr %s2582, 2
          %s2584 = smul.addr %s2583, 8
          %s2585 = scalar_lea.vmem %s10, %s2584
        $region84: #{tpu_custom_call.1} parent=75 // pred_fallthru
          _
        // Predicated region
        $region85: #{tpu_custom_call.1} parent=75 // pred_check
          %p2586 = pneg %p300
        $region86: #{tpu_custom_call.1} parent=75 // pred_check_branch
          %2588 = sbr.rel (%p2586) target = $region88
        $region87: #{tpu_custom_call.1} parent=75 // pred_region
          %s2589 = sand.u32 %s285, 1
          %s2590 = scalar_lea.sflag [#allocation4], %s2589
          %s2591 = sand.u32 %s285, 1
          %s2592 = smul.addr %s2591, 4
          %s2593 = scalar_lea.vmem [#allocation3], %s2592
          %2594 = dma.done %s2590, 64
        $region88: #{tpu_custom_call.1} parent=75 // pred_fallthru
          _
        // Predicated region
        $region89: #{tpu_custom_call.1} parent=75 // pred_check
          %p2595 = pneg %p326
        $region90: #{tpu_custom_call.1} parent=75 // pred_check_branch
          %2597 = sbr.rel (%p2595) target = $region92
        $region91: #{tpu_custom_call.1} parent=75 // pred_region
          %s2598 = sand.u32 %s311, 1
          %s2599 = scalar_lea.sflag [#allocation6], %s2598
          %s2600 = sand.u32 %s311, 1
          %s2601 = scalar_lea.vmem [#allocation5], %s2600
          %2602 = dma.done %s2599, 16
        $region92: #{tpu_custom_call.1} parent=75 // pred_fallthru
          _
      $region76: #{tpu_custom_call.1} parent=5 // pred_fallthru
        _
    $region6: #{tpu_custom_call.1} parent=1 // loop_footer
      %s29 = sadd.s32 1, %s25
    $region7: #{tpu_custom_call.1} parent=1 // loop_footer_branch
      %24 = sbr.rel target = $region3
    $region8: #{tpu_custom_call.1} parent=1 // loop_exit
      _
    %2603 = vsyncpa [#allocation4], 1
    %s2604 = scalar_lea.sflag [#allocation4], 1
    %2605 = vsyncpa %s2604, 1
    %2606 = vsyncpa [#allocation6], 1
    %s2607 = scalar_lea.sflag [#allocation6], 1
    %2608 = vsyncpa %s2607, 1

</llo_original>
